<compile_context>
chip_gen: v7x
topology: tpu7x:2x2x1
jax: 0.10.0
libtpu: 0.0.40
codegen_flags: <defaults>
</compile_context>

<pallas_src>
import functools
import math

import jax
import jax.numpy as jnp
import numpy as np
from jax.experimental import pallas as pl
from jax.experimental.pallas import tpu as pltpu


# ----------------------------------------------------------------------------
# Pallas kernel: one grid step == B_TILE batch elements, everything fused.
# ----------------------------------------------------------------------------
def _muse_attention_kernel(
    q_ref, k_ref, v_ref,
    wq_ref, wk_ref, wv_ref,
    bq_ref, bk_ref, bv_ref,
    w_big_ref, b_big_ref, wd_ref,
    out_ref,
    *, h, d_k, d_v, nq):
  M = q_ref.shape[0]          # B_TILE * nq rows
  B = M // nq
  C = h * d_v

  q_flat = q_ref[...]         # (M, d_q)
  k_flat = k_ref[...]         # (M, d_kv)
  v_flat = v_ref[...]         # (M, d_kv)

  # --- per-head projections via leading-dim weight slabs (no lane slicing) ---
  q_heads, k_heads, v_heads = [], [], []
  for hd in range(h):
    q_heads.append(jnp.dot(q_flat, wq_ref[hd],
                           preferred_element_type=jnp.float32) + bq_ref[hd])
    k_heads.append(jnp.dot(k_flat, wk_ref[hd],
                           preferred_element_type=jnp.float32) + bk_ref[hd])
    v_heads.append(jnp.dot(v_flat, wv_ref[hd],
                           preferred_element_type=jnp.float32) + bv_ref[hd])

  # Stack heads on a leading axis and fold (head, batch) into one batch dim.
  # (h, B*nq, d) -> (h*B, nq, d): leading/sublane-tile reshapes only.
  qs = jnp.stack(q_heads, axis=0).reshape(h * B, nq, d_k)
  ks = jnp.stack(k_heads, axis=0).reshape(h * B, nq, d_k)
  vs = jnp.stack(v_heads, axis=0).reshape(h * B, nq, d_v)

  # --- batched scaled-dot-product attention (scale already folded into wq) ---
  s = jnp.einsum("nqd,nkd->nqk", qs, ks, preferred_element_type=jnp.float32)
  s = s - jnp.max(s, axis=-1, keepdims=True)
  p = jnp.exp(s)
  p = p * pl.reciprocal(jnp.sum(p, axis=-1, keepdims=True), approx=True)
  o = jnp.einsum("nqk,nkd->nqd", p, vs, preferred_element_type=jnp.float32)

  o = o.reshape(h, M, d_v)
  attn_cat = jnp.concatenate([o[hd] for hd in range(h)], axis=-1)      # (M, C)
  v_full = jnp.concatenate(v_heads, axis=-1)                           # (M, C)

  # --- depthwise convs as per-batch time shifts (channels-last) ---
  v3 = v_full.reshape(B, nq, C)

  def shifted(sh):
    # row t of result = v3[:, t + sh, :], zero-padded out of range (static sh).
    if sh == 0:
      return v3
    if abs(sh) >= nq:
      return jnp.zeros_like(v3)
    pad = jnp.zeros((B, abs(sh), C), dtype=v3.dtype)
    if sh > 0:
      return jnp.concatenate([v3[:, sh:, :], pad], axis=1)
    return jnp.concatenate([pad, v3[:, :sh, :]], axis=1)

  vm2, vm1, vp1, vp2 = shifted(-2), shifted(-1), shifted(1), shifted(2)
  wd = wd_ref[...]            # (8, C): rows 0..2 = k3 taps, rows 3..7 = k5 taps
  d3 = vm1 * wd[0] + v3 * wd[1] + vp1 * wd[2]
  d5 = vm2 * wd[3] + vm1 * wd[4] + v3 * wd[5] + vp1 * wd[6] + vp2 * wd[7]

  # --- single fused output matmul: fc_o + dy-weighted pointwise convs ---
  x_cat = jnp.concatenate(
      [attn_cat, v_full, d3.reshape(M, C), d5.reshape(M, C)], axis=-1)  # (M, 4C)
  y = jnp.dot(x_cat, w_big_ref[...],
              preferred_element_type=jnp.float32) + b_big_ref[...]
  out_ref[...] = y.astype(out_ref.dtype)


# ----------------------------------------------------------------------------
# Wrapper-side weight folding
# ----------------------------------------------------------------------------
def _prepare_weights(params, *, h, d_k, d_v):
  """Fold 1/sqrt(d_k), dy softmax and all biases into compact weight slabs."""
  dm = params["wo"].shape[0]            # output feature dim (= ctor d_model)
  scale = 1.0 / math.sqrt(d_k)

  def per_head(w_t, n, dh):             # (d_in, n*dh) -> (n, d_in, dh)
    d_in = w_t.shape[0]
    return w_t.reshape(d_in, n, dh).transpose(1, 0, 2)

  wq_h = per_head(params["wq"].T * scale, h, d_k)       # scale folded into Q
  wk_h = per_head(params["wk"].T, h, d_k)
  wv_h = per_head(params["wv"].T, h, d_v)
  bq_h = (params["bq"] * scale).reshape(h, 1, d_k)
  bk_h = params["bk"].reshape(h, 1, d_k)
  bv_h = params["bv"].reshape(h, 1, d_v)

  dy = jax.nn.softmax(params["dy_paras"])
  wo_t = params["wo"].T                                 # (C, dm)
  wp1_t = params["wp1"][:, :, 0].T                      # (C, dm)
  wp3_t = params["wp3"][:, :, 0].T
  wp5_t = params["wp5"][:, :, 0].T
  # [attn | V | d3 | d5] @ w_big + b_big  ==  fc_o(attn) + dy.(conv1,3,5)(V)
  w_big = jnp.concatenate(
      [wo_t, dy[0] * wp1_t, dy[1] * wp3_t, dy[2] * wp5_t], axis=0)     # (4C, dm)
  b_big = (params["bo"]
           + dy[0] * params["bp1"]
           + dy[1] * (params["bp3"] + params["bd3"] @ wp3_t)
           + dy[2] * (params["bp5"] + params["bd5"] @ wp5_t)).reshape(1, dm)

  wd = jnp.concatenate(
      [params["wd3"][:, 0, :].T, params["wd5"][:, 0, :].T], axis=0)    # (8, C)
  return wq_h, wk_h, wv_h, bq_h, bk_h, bv_h, w_big, b_big, wd


def _pick_b_tile(b_s, nq, max_rows=4096):
  """Largest batch tile keeping legal row blocks and >=2 grid steps (v7x)."""
  candidates = [t for t in range(1, b_s + 1)
                if b_s % t == 0 and (t * nq) % 8 == 0 and t * nq <= max_rows]
  two_step = [t for t in candidates if b_s // t >= 2]
  if two_step:
    return max(two_step)
  if candidates:
    return max(candidates)
  return b_s       # single full-size block (full-array block is always legal)


# ----------------------------------------------------------------------------
# Wrapper
# ----------------------------------------------------------------------------
def muse_attention(queries, keys, values, params, *, h, d_k, d_v, b_tile=None):
  b_s, nq = queries.shape[:2]
  q3 = queries.reshape(b_s, nq, -1)            # mirrors .view(b_s, nq, -1)
  k3 = keys.reshape(b_s, nq, -1)
  v3 = values.reshape(b_s, nq, -1)
  d_q = q3.shape[-1]
  d_kv = k3.shape[-1]
  dm = params["wo"].shape[0]
  # out = fc_o(attn) + conv_branch(V) is an elementwise add -> needs nq == nk,
  # which the PyTorch .view(b_s, nq, -1) on keys enforces as well.

  weights = _prepare_weights(params, h=h, d_k=d_k, d_v=d_v)

  if b_tile is None:
    b_tile = _pick_b_tile(b_s, nq)
  assert b_s % b_tile == 0
  n_blocks = b_s // b_tile
  rows = b_tile * nq

  # Present activations flattened to (rows, feat) so projections / the fused
  # output matmul run with M = b_tile*nq rows.
  q_flat = q3.reshape(b_s * nq, d_q)
  k_flat = k3.reshape(b_s * nq, d_kv)
  v_flat = v3.reshape(b_s * nq, d_kv)

  def act_spec(feat):
    return pl.BlockSpec((rows, feat), lambda i: (i, 0))

  def full_spec(arr):
    nd = arr.ndim
    return pl.BlockSpec(arr.shape, lambda i, nd=nd: (0,) * nd)

  kernel = functools.partial(_muse_attention_kernel,
                             h=h, d_k=d_k, d_v=d_v, nq=nq)

  out = pl.pallas_call(
      kernel,
      out_shape=jax.ShapeDtypeStruct((b_s * nq, dm), jnp.float32),
      grid=(n_blocks,),
      in_specs=[act_spec(d_q), act_spec(d_kv), act_spec(d_kv)]
               + [full_spec(w) for w in weights],
      out_specs=pl.BlockSpec((rows, dm), lambda i: (i, 0)),
      compiler_params=pltpu.CompilerParams(
          dimension_semantics=("parallel",)),
  )(q_flat, k_flat, v_flat, *weights)

  # torch.unsqueeze(out, 2)
  return out.reshape(b_s, nq, 1, dm)


# ----------------------------------------------------------------------------
# Pure-JAX reference (mirrors the PyTorch forward op-for-op)
# ----------------------------------------------------------------------------
def reference_forward(queries, keys, values, params, *, h, d_k, d_v):
  b_s, nq = queries.shape[:2]
  queries = queries.reshape(b_s, nq, -1)
  keys = keys.reshape(b_s, nq, -1)
  values = values.reshape(b_s, nq, -1)
  nk = keys.shape[1]

  def linear(x, w, b):                      # torch nn.Linear: x @ W.T + b
    return x @ w.T + b

  q = linear(queries, params["wq"], params["bq"]).reshape(
      b_s, nq, h, d_k).transpose(0, 2, 1, 3)
  k = linear(keys, params["wk"], params["bk"]).reshape(
      b_s, nk, h, d_k).transpose(0, 2, 3, 1)
  v = linear(values, params["wv"], params["bv"]).reshape(
      b_s, nk, h, d_v).transpose(0, 2, 1, 3)

  att = jnp.matmul(q, k) / math.sqrt(d_k)
  att = jax.nn.softmax(att, axis=-1)
  out = jnp.matmul(att, v).transpose(0, 2, 1, 3).reshape(b_s, nq, h * d_v)
  out = linear(out, params["wo"], params["bo"])

  v2 = v.transpose(0, 1, 3, 2).reshape(b_s, h * d_v, nk)

  def dpconv(x, wd, bd, wp, bp, ksize):
    y = x
    if ksize > 1:
      y = jax.lax.conv_general_dilated(
          y, wd, window_strides=(1,), padding=[(ksize // 2, ksize // 2)],
          dimension_numbers=("NCH", "OIH", "NCH"),
          feature_group_count=x.shape[1]) + bd[None, :, None]
    y = jax.lax.conv_general_dilated(
        y, wp, window_strides=(1,), padding=[(0, 0)],
        dimension_numbers=("NCH", "OIH", "NCH")) + bp[None, :, None]
    return y

  dy = jax.nn.softmax(params["dy_paras"])
  out2 = (dy[0] * dpconv(v2, None, None, params["wp1"], params["bp1"], 1)
          + dy[1] * dpconv(v2, params["wd3"], params["bd3"],
                           params["wp3"], params["bp3"], 3)
          + dy[2] * dpconv(v2, params["wd5"], params["bd5"],
                           params["wp5"], params["bp5"], 5))
  out2 = out2.transpose(0, 2, 1)
  out = out + out2
  return out[:, :, None, :]


# ----------------------------------------------------------------------------
# Deterministic parameter construction (synthetic; shapes from __init__)
# ----------------------------------------------------------------------------
def make_params(key, d_model, d_k, d_v, h):
  # MUSEAttention2: fc_q takes d_model features, fc_k/fc_v take 3*d_model,
  # fc_o and the convs output d_model.
  C = h * d_v
  d_kv = 3 * d_model
  ks = jax.random.split(key, 12)
  f32 = jnp.float32
  params = {
      # nn.Linear: weight (out, in) with normal(std=0.001), bias 0
      "wq": 0.001 * jax.random.normal(ks[0], (h * d_k, d_model), f32),
      "bq": jnp.zeros((h * d_k,), f32),
      "wk": 0.001 * jax.random.normal(ks[1], (h * d_k, d_kv), f32),
      "bk": jnp.zeros((h * d_k,), f32),
      "wv": 0.001 * jax.random.normal(ks[2], (h * d_v, d_kv), f32),
      "bv": jnp.zeros((h * d_v,), f32),
      "wo": 0.001 * jax.random.normal(ks[3], (d_model, h * d_v), f32),
      "bo": jnp.zeros((d_model,), f32),
      # Depth_Pointwise_Conv1d(k=1): pointwise only, weight (d_model, C, 1)
      "wp1": 0.1 * jax.random.normal(ks[4], (d_model, C, 1), f32),
      "bp1": 0.1 * jax.random.normal(ks[5], (d_model,), f32),
      # k=3: depthwise (C,1,3) + pointwise (d_model,C,1)
      "wd3": 0.1 * jax.random.normal(ks[6], (C, 1, 3), f32),
      "bd3": 0.1 * jax.random.normal(ks[7], (C,), f32),
      "wp3": 0.1 * jax.random.normal(ks[8], (d_model, C, 1), f32),
      "bp3": jnp.zeros((d_model,), f32),
      # k=5: depthwise (C,1,5) + pointwise (d_model,C,1)
      "wd5": 0.1 * jax.random.normal(ks[9], (C, 1, 5), f32),
      "bd5": 0.1 * jax.random.normal(ks[10], (C,), f32),
      "wp5": 0.1 * jax.random.normal(ks[11], (d_model, C, 1), f32),
      "bp5": jnp.zeros((d_model,), f32),
      # dy_paras = ones(3) (forward applies softmax)
      "dy_paras": jnp.ones((3,), f32),
  }
  return params


if __name__ == "__main__":
  b_s, nq = 4, 8
  d_model, d_k, d_v, h = 32, 8, 8, 4     # queries: d_model, keys/values: 3*d_model

  key = jax.random.PRNGKey(0)
  kq, kk, kv, kp = jax.random.split(key, 4)
  queries = jax.random.normal(kq, (b_s, nq, d_model), jnp.float32)
  keys = jax.random.normal(kk, (b_s, nq, 3 * d_model), jnp.float32)
  values = jax.random.normal(kv, (b_s, nq, 3 * d_model), jnp.float32)

  params = make_params(kp, d_model, d_k, d_v, h)

  out = muse_attention(queries, keys, values, params, h=h, d_k=d_k, d_v=d_v)
  out = jax.block_until_ready(out)

  ref = reference_forward(queries, keys, values, params, h=h, d_k=d_k, d_v=d_v)
  ref = jax.block_until_ready(ref)

  assert out.shape == (b_s, nq, 1, d_model), out.shape
  np.testing.assert_allclose(np.asarray(out), np.asarray(ref),
                             rtol=1e-4, atol=1e-4)
  print("KERNEL_OK")
</pallas_src>

<mosaic_0001>
module attributes {stable_mosaic.version = 11 : i64} {
  func.func @_muse_attention_kernel(%arg0: i32, %arg1: memref<16x32xf32, #tpu.memory_space<vmem>>, %arg2: memref<16x96xf32, #tpu.memory_space<vmem>>, %arg3: memref<16x96xf32, #tpu.memory_space<vmem>>, %arg4: memref<4x32x8xf32, #tpu.memory_space<vmem>>, %arg5: memref<4x96x8xf32, #tpu.memory_space<vmem>>, %arg6: memref<4x96x8xf32, #tpu.memory_space<vmem>>, %arg7: memref<4x1x8xf32, #tpu.memory_space<vmem>>, %arg8: memref<4x1x8xf32, #tpu.memory_space<vmem>>, %arg9: memref<4x1x8xf32, #tpu.memory_space<vmem>>, %arg10: memref<128x32xf32, #tpu.memory_space<vmem>>, %arg11: memref<1x32xf32, #tpu.memory_space<vmem>>, %arg12: memref<8x32xf32, #tpu.memory_space<vmem>>, %arg13: memref<16x32xf32, #tpu.memory_space<vmem>>) attributes {dimension_semantics = [#tpu.dimension_semantics<parallel>], iteration_bounds = array<i64: 2>, scalar_prefetch = 0 : i64, scratch_operands = 0 : i64, tpu.core_type = #tpu.core_type<tc>, window_params = [{transform_indices = @transform_0, window_bounds = array<i64: 16, 32>}, {transform_indices = @transform_1, window_bounds = array<i64: 16, 96>}, {transform_indices = @transform_2, window_bounds = array<i64: 16, 96>}, {pipeline_mode = #tpu.pipeline_mode<synchronous>, transform_indices = @transform_3, window_bounds = array<i64: 4, 32, 8>}, {pipeline_mode = #tpu.pipeline_mode<synchronous>, transform_indices = @transform_4, window_bounds = array<i64: 4, 96, 8>}, {pipeline_mode = #tpu.pipeline_mode<synchronous>, transform_indices = @transform_5, window_bounds = array<i64: 4, 96, 8>}, {pipeline_mode = #tpu.pipeline_mode<synchronous>, transform_indices = @transform_6, window_bounds = array<i64: 4, 1, 8>}, {pipeline_mode = #tpu.pipeline_mode<synchronous>, transform_indices = @transform_7, window_bounds = array<i64: 4, 1, 8>}, {pipeline_mode = #tpu.pipeline_mode<synchronous>, transform_indices = @transform_8, window_bounds = array<i64: 4, 1, 8>}, {pipeline_mode = #tpu.pipeline_mode<synchronous>, transform_indices = @transform_9, window_bounds = array<i64: 128, 32>}, {pipeline_mode = #tpu.pipeline_mode<synchronous>, transform_indices = @transform_10, window_bounds = array<i64: 1, 32>}, {pipeline_mode = #tpu.pipeline_mode<synchronous>, transform_indices = @transform_11, window_bounds = array<i64: 8, 32>}, {transform_indices = @transform_12, window_bounds = array<i64: 16, 32>}]} {
    %c0 = arith.constant 0 : index
    %c0_0 = arith.constant 0 : index
    %0 = vector.load %arg1[%c0, %c0_0] : memref<16x32xf32, #tpu.memory_space<vmem>>, vector<16x32xf32>
    %c0_1 = arith.constant 0 : index
    %c0_2 = arith.constant 0 : index
    %1 = vector.load %arg2[%c0_1, %c0_2] : memref<16x96xf32, #tpu.memory_space<vmem>>, vector<16x96xf32>
    %c0_3 = arith.constant 0 : index
    %c0_4 = arith.constant 0 : index
    %2 = vector.load %arg3[%c0_3, %c0_4] : memref<16x96xf32, #tpu.memory_space<vmem>>, vector<16x96xf32>
    %c0_5 = arith.constant 0 : index
    %c0_6 = arith.constant 0 : index
    %c0_7 = arith.constant 0 : index
    %3 = vector.load %arg4[%c0_5, %c0_6, %c0_7] : memref<4x32x8xf32, #tpu.memory_space<vmem>>, vector<1x32x8xf32>
    %4 = vector.shape_cast %3 : vector<1x32x8xf32> to vector<32x8xf32>
    %cst = arith.constant dense<0.000000e+00> : vector<16x8xf32>
    %5 = tpu.matmul %0, %4, %cst {dimension_numbers = #tpu.dot_dimension_numbers<[1], [0], [0], [1], [0, 0, 1, 1], [], []>} : vector<16x32xf32>, vector<32x8xf32>, vector<16x8xf32> -> vector<16x8xf32>
    %c0_8 = arith.constant 0 : index
    %c0_9 = arith.constant 0 : index
    %c0_10 = arith.constant 0 : index
    %6 = vector.load %arg7[%c0_8, %c0_9, %c0_10] : memref<4x1x8xf32, #tpu.memory_space<vmem>>, vector<1x1x8xf32>
    %7 = vector.shape_cast %6 : vector<1x1x8xf32> to vector<1x8xf32>
    %8 = vector.broadcast %7 : vector<1x8xf32> to vector<16x8xf32>
    %9 = arith.addf %5, %8 : vector<16x8xf32>
    %c0_11 = arith.constant 0 : index
    %c0_12 = arith.constant 0 : index
    %c0_13 = arith.constant 0 : index
    %10 = vector.load %arg5[%c0_11, %c0_12, %c0_13] : memref<4x96x8xf32, #tpu.memory_space<vmem>>, vector<1x96x8xf32>
    %11 = vector.shape_cast %10 : vector<1x96x8xf32> to vector<96x8xf32>
    %cst_14 = arith.constant dense<0.000000e+00> : vector<16x8xf32>
    %12 = tpu.matmul %1, %11, %cst_14 {dimension_numbers = #tpu.dot_dimension_numbers<[1], [0], [0], [1], [0, 0, 1, 1], [], []>} : vector<16x96xf32>, vector<96x8xf32>, vector<16x8xf32> -> vector<16x8xf32>
    %c0_15 = arith.constant 0 : index
    %c0_16 = arith.constant 0 : index
    %c0_17 = arith.constant 0 : index
    %13 = vector.load %arg8[%c0_15, %c0_16, %c0_17] : memref<4x1x8xf32, #tpu.memory_space<vmem>>, vector<1x1x8xf32>
    %14 = vector.shape_cast %13 : vector<1x1x8xf32> to vector<1x8xf32>
    %15 = vector.broadcast %14 : vector<1x8xf32> to vector<16x8xf32>
    %16 = arith.addf %12, %15 : vector<16x8xf32>
    %c0_18 = arith.constant 0 : index
    %c0_19 = arith.constant 0 : index
    %c0_20 = arith.constant 0 : index
    %17 = vector.load %arg6[%c0_18, %c0_19, %c0_20] : memref<4x96x8xf32, #tpu.memory_space<vmem>>, vector<1x96x8xf32>
    %18 = vector.shape_cast %17 : vector<1x96x8xf32> to vector<96x8xf32>
    %cst_21 = arith.constant dense<0.000000e+00> : vector<16x8xf32>
    %19 = tpu.matmul %2, %18, %cst_21 {dimension_numbers = #tpu.dot_dimension_numbers<[1], [0], [0], [1], [0, 0, 1, 1], [], []>} : vector<16x96xf32>, vector<96x8xf32>, vector<16x8xf32> -> vector<16x8xf32>
    %c0_22 = arith.constant 0 : index
    %c0_23 = arith.constant 0 : index
    %c0_24 = arith.constant 0 : index
    %20 = vector.load %arg9[%c0_22, %c0_23, %c0_24] : memref<4x1x8xf32, #tpu.memory_space<vmem>>, vector<1x1x8xf32>
    %21 = vector.shape_cast %20 : vector<1x1x8xf32> to vector<1x8xf32>
    %22 = vector.broadcast %21 : vector<1x8xf32> to vector<16x8xf32>
    %23 = arith.addf %19, %22 : vector<16x8xf32>
    %c1 = arith.constant 1 : index
    %c0_25 = arith.constant 0 : index
    %c0_26 = arith.constant 0 : index
    %24 = vector.load %arg4[%c1, %c0_25, %c0_26] : memref<4x32x8xf32, #tpu.memory_space<vmem>>, vector<1x32x8xf32>
    %25 = vector.shape_cast %24 : vector<1x32x8xf32> to vector<32x8xf32>
    %cst_27 = arith.constant dense<0.000000e+00> : vector<16x8xf32>
    %26 = tpu.matmul %0, %25, %cst_27 {dimension_numbers = #tpu.dot_dimension_numbers<[1], [0], [0], [1], [0, 0, 1, 1], [], []>} : vector<16x32xf32>, vector<32x8xf32>, vector<16x8xf32> -> vector<16x8xf32>
    %c1_28 = arith.constant 1 : index
    %c0_29 = arith.constant 0 : index
    %c0_30 = arith.constant 0 : index
    %27 = vector.load %arg7[%c1_28, %c0_29, %c0_30] : memref<4x1x8xf32, #tpu.memory_space<vmem>>, vector<1x1x8xf32>
    %28 = vector.shape_cast %27 : vector<1x1x8xf32> to vector<1x8xf32>
    %29 = vector.broadcast %28 : vector<1x8xf32> to vector<16x8xf32>
    %30 = arith.addf %26, %29 : vector<16x8xf32>
    %c1_31 = arith.constant 1 : index
    %c0_32 = arith.constant 0 : index
    %c0_33 = arith.constant 0 : index
    %31 = vector.load %arg5[%c1_31, %c0_32, %c0_33] : memref<4x96x8xf32, #tpu.memory_space<vmem>>, vector<1x96x8xf32>
    %32 = vector.shape_cast %31 : vector<1x96x8xf32> to vector<96x8xf32>
    %cst_34 = arith.constant dense<0.000000e+00> : vector<16x8xf32>
    %33 = tpu.matmul %1, %32, %cst_34 {dimension_numbers = #tpu.dot_dimension_numbers<[1], [0], [0], [1], [0, 0, 1, 1], [], []>} : vector<16x96xf32>, vector<96x8xf32>, vector<16x8xf32> -> vector<16x8xf32>
    %c1_35 = arith.constant 1 : index
    %c0_36 = arith.constant 0 : index
    %c0_37 = arith.constant 0 : index
    %34 = vector.load %arg8[%c1_35, %c0_36, %c0_37] : memref<4x1x8xf32, #tpu.memory_space<vmem>>, vector<1x1x8xf32>
    %35 = vector.shape_cast %34 : vector<1x1x8xf32> to vector<1x8xf32>
    %36 = vector.broadcast %35 : vector<1x8xf32> to vector<16x8xf32>
    %37 = arith.addf %33, %36 : vector<16x8xf32>
    %c1_38 = arith.constant 1 : index
    %c0_39 = arith.constant 0 : index
    %c0_40 = arith.constant 0 : index
    %38 = vector.load %arg6[%c1_38, %c0_39, %c0_40] : memref<4x96x8xf32, #tpu.memory_space<vmem>>, vector<1x96x8xf32>
    %39 = vector.shape_cast %38 : vector<1x96x8xf32> to vector<96x8xf32>
    %cst_41 = arith.constant dense<0.000000e+00> : vector<16x8xf32>
    %40 = tpu.matmul %2, %39, %cst_41 {dimension_numbers = #tpu.dot_dimension_numbers<[1], [0], [0], [1], [0, 0, 1, 1], [], []>} : vector<16x96xf32>, vector<96x8xf32>, vector<16x8xf32> -> vector<16x8xf32>
    %c1_42 = arith.constant 1 : index
    %c0_43 = arith.constant 0 : index
    %c0_44 = arith.constant 0 : index
    %41 = vector.load %arg9[%c1_42, %c0_43, %c0_44] : memref<4x1x8xf32, #tpu.memory_space<vmem>>, vector<1x1x8xf32>
    %42 = vector.shape_cast %41 : vector<1x1x8xf32> to vector<1x8xf32>
    %43 = vector.broadcast %42 : vector<1x8xf32> to vector<16x8xf32>
    %44 = arith.addf %40, %43 : vector<16x8xf32>
    %c2 = arith.constant 2 : index
    %c0_45 = arith.constant 0 : index
    %c0_46 = arith.constant 0 : index
    %45 = vector.load %arg4[%c2, %c0_45, %c0_46] : memref<4x32x8xf32, #tpu.memory_space<vmem>>, vector<1x32x8xf32>
    %46 = vector.shape_cast %45 : vector<1x32x8xf32> to vector<32x8xf32>
    %cst_47 = arith.constant dense<0.000000e+00> : vector<16x8xf32>
    %47 = tpu.matmul %0, %46, %cst_47 {dimension_numbers = #tpu.dot_dimension_numbers<[1], [0], [0], [1], [0, 0, 1, 1], [], []>} : vector<16x32xf32>, vector<32x8xf32>, vector<16x8xf32> -> vector<16x8xf32>
    %c2_48 = arith.constant 2 : index
    %c0_49 = arith.constant 0 : index
    %c0_50 = arith.constant 0 : index
    %48 = vector.load %arg7[%c2_48, %c0_49, %c0_50] : memref<4x1x8xf32, #tpu.memory_space<vmem>>, vector<1x1x8xf32>
    %49 = vector.shape_cast %48 : vector<1x1x8xf32> to vector<1x8xf32>
    %50 = vector.broadcast %49 : vector<1x8xf32> to vector<16x8xf32>
    %51 = arith.addf %47, %50 : vector<16x8xf32>
    %c2_51 = arith.constant 2 : index
    %c0_52 = arith.constant 0 : index
    %c0_53 = arith.constant 0 : index
    %52 = vector.load %arg5[%c2_51, %c0_52, %c0_53] : memref<4x96x8xf32, #tpu.memory_space<vmem>>, vector<1x96x8xf32>
    %53 = vector.shape_cast %52 : vector<1x96x8xf32> to vector<96x8xf32>
    %cst_54 = arith.constant dense<0.000000e+00> : vector<16x8xf32>
    %54 = tpu.matmul %1, %53, %cst_54 {dimension_numbers = #tpu.dot_dimension_numbers<[1], [0], [0], [1], [0, 0, 1, 1], [], []>} : vector<16x96xf32>, vector<96x8xf32>, vector<16x8xf32> -> vector<16x8xf32>
    %c2_55 = arith.constant 2 : index
    %c0_56 = arith.constant 0 : index
    %c0_57 = arith.constant 0 : index
    %55 = vector.load %arg8[%c2_55, %c0_56, %c0_57] : memref<4x1x8xf32, #tpu.memory_space<vmem>>, vector<1x1x8xf32>
    %56 = vector.shape_cast %55 : vector<1x1x8xf32> to vector<1x8xf32>
    %57 = vector.broadcast %56 : vector<1x8xf32> to vector<16x8xf32>
    %58 = arith.addf %54, %57 : vector<16x8xf32>
    %c2_58 = arith.constant 2 : index
    %c0_59 = arith.constant 0 : index
    %c0_60 = arith.constant 0 : index
    %59 = vector.load %arg6[%c2_58, %c0_59, %c0_60] : memref<4x96x8xf32, #tpu.memory_space<vmem>>, vector<1x96x8xf32>
    %60 = vector.shape_cast %59 : vector<1x96x8xf32> to vector<96x8xf32>
    %cst_61 = arith.constant dense<0.000000e+00> : vector<16x8xf32>
    %61 = tpu.matmul %2, %60, %cst_61 {dimension_numbers = #tpu.dot_dimension_numbers<[1], [0], [0], [1], [0, 0, 1, 1], [], []>} : vector<16x96xf32>, vector<96x8xf32>, vector<16x8xf32> -> vector<16x8xf32>
    %c2_62 = arith.constant 2 : index
    %c0_63 = arith.constant 0 : index
    %c0_64 = arith.constant 0 : index
    %62 = vector.load %arg9[%c2_62, %c0_63, %c0_64] : memref<4x1x8xf32, #tpu.memory_space<vmem>>, vector<1x1x8xf32>
    %63 = vector.shape_cast %62 : vector<1x1x8xf32> to vector<1x8xf32>
    %64 = vector.broadcast %63 : vector<1x8xf32> to vector<16x8xf32>
    %65 = arith.addf %61, %64 : vector<16x8xf32>
    %c3 = arith.constant 3 : index
    %c0_65 = arith.constant 0 : index
    %c0_66 = arith.constant 0 : index
    %66 = vector.load %arg4[%c3, %c0_65, %c0_66] : memref<4x32x8xf32, #tpu.memory_space<vmem>>, vector<1x32x8xf32>
    %67 = vector.shape_cast %66 : vector<1x32x8xf32> to vector<32x8xf32>
    %cst_67 = arith.constant dense<0.000000e+00> : vector<16x8xf32>
    %68 = tpu.matmul %0, %67, %cst_67 {dimension_numbers = #tpu.dot_dimension_numbers<[1], [0], [0], [1], [0, 0, 1, 1], [], []>} : vector<16x32xf32>, vector<32x8xf32>, vector<16x8xf32> -> vector<16x8xf32>
    %c3_68 = arith.constant 3 : index
    %c0_69 = arith.constant 0 : index
    %c0_70 = arith.constant 0 : index
    %69 = vector.load %arg7[%c3_68, %c0_69, %c0_70] : memref<4x1x8xf32, #tpu.memory_space<vmem>>, vector<1x1x8xf32>
    %70 = vector.shape_cast %69 : vector<1x1x8xf32> to vector<1x8xf32>
    %71 = vector.broadcast %70 : vector<1x8xf32> to vector<16x8xf32>
    %72 = arith.addf %68, %71 : vector<16x8xf32>
    %c3_71 = arith.constant 3 : index
    %c0_72 = arith.constant 0 : index
    %c0_73 = arith.constant 0 : index
    %73 = vector.load %arg5[%c3_71, %c0_72, %c0_73] : memref<4x96x8xf32, #tpu.memory_space<vmem>>, vector<1x96x8xf32>
    %74 = vector.shape_cast %73 : vector<1x96x8xf32> to vector<96x8xf32>
    %cst_74 = arith.constant dense<0.000000e+00> : vector<16x8xf32>
    %75 = tpu.matmul %1, %74, %cst_74 {dimension_numbers = #tpu.dot_dimension_numbers<[1], [0], [0], [1], [0, 0, 1, 1], [], []>} : vector<16x96xf32>, vector<96x8xf32>, vector<16x8xf32> -> vector<16x8xf32>
    %c3_75 = arith.constant 3 : index
    %c0_76 = arith.constant 0 : index
    %c0_77 = arith.constant 0 : index
    %76 = vector.load %arg8[%c3_75, %c0_76, %c0_77] : memref<4x1x8xf32, #tpu.memory_space<vmem>>, vector<1x1x8xf32>
    %77 = vector.shape_cast %76 : vector<1x1x8xf32> to vector<1x8xf32>
    %78 = vector.broadcast %77 : vector<1x8xf32> to vector<16x8xf32>
    %79 = arith.addf %75, %78 : vector<16x8xf32>
    %c3_78 = arith.constant 3 : index
    %c0_79 = arith.constant 0 : index
    %c0_80 = arith.constant 0 : index
    %80 = vector.load %arg6[%c3_78, %c0_79, %c0_80] : memref<4x96x8xf32, #tpu.memory_space<vmem>>, vector<1x96x8xf32>
    %81 = vector.shape_cast %80 : vector<1x96x8xf32> to vector<96x8xf32>
    %cst_81 = arith.constant dense<0.000000e+00> : vector<16x8xf32>
    %82 = tpu.matmul %2, %81, %cst_81 {dimension_numbers = #tpu.dot_dimension_numbers<[1], [0], [0], [1], [0, 0, 1, 1], [], []>} : vector<16x96xf32>, vector<96x8xf32>, vector<16x8xf32> -> vector<16x8xf32>
    %c3_82 = arith.constant 3 : index
    %c0_83 = arith.constant 0 : index
    %c0_84 = arith.constant 0 : index
    %83 = vector.load %arg9[%c3_82, %c0_83, %c0_84] : memref<4x1x8xf32, #tpu.memory_space<vmem>>, vector<1x1x8xf32>
    %84 = vector.shape_cast %83 : vector<1x1x8xf32> to vector<1x8xf32>
    %85 = vector.broadcast %84 : vector<1x8xf32> to vector<16x8xf32>
    %86 = arith.addf %82, %85 : vector<16x8xf32>
    %87 = vector.shape_cast %9 : vector<16x8xf32> to vector<1x16x8xf32>
    %88 = vector.shape_cast %30 : vector<16x8xf32> to vector<1x16x8xf32>
    %89 = vector.shape_cast %51 : vector<16x8xf32> to vector<1x16x8xf32>
    %90 = vector.shape_cast %72 : vector<16x8xf32> to vector<1x16x8xf32>
    %91 = tpu.concatenate %87, %88, %89, %90 in 0 : vector<1x16x8xf32>, vector<1x16x8xf32>, vector<1x16x8xf32>, vector<1x16x8xf32> -> vector<4x16x8xf32>
    %92 = vector.shape_cast %91 : vector<4x16x8xf32> to vector<8x8x8xf32>
    %93 = vector.shape_cast %16 : vector<16x8xf32> to vector<1x16x8xf32>
    %94 = vector.shape_cast %37 : vector<16x8xf32> to vector<1x16x8xf32>
    %95 = vector.shape_cast %58 : vector<16x8xf32> to vector<1x16x8xf32>
    %96 = vector.shape_cast %79 : vector<16x8xf32> to vector<1x16x8xf32>
    %97 = tpu.concatenate %93, %94, %95, %96 in 0 : vector<1x16x8xf32>, vector<1x16x8xf32>, vector<1x16x8xf32>, vector<1x16x8xf32> -> vector<4x16x8xf32>
    %98 = vector.shape_cast %97 : vector<4x16x8xf32> to vector<8x8x8xf32>
    %99 = vector.shape_cast %23 : vector<16x8xf32> to vector<1x16x8xf32>
    %100 = vector.shape_cast %44 : vector<16x8xf32> to vector<1x16x8xf32>
    %101 = vector.shape_cast %65 : vector<16x8xf32> to vector<1x16x8xf32>
    %102 = vector.shape_cast %86 : vector<16x8xf32> to vector<1x16x8xf32>
    %103 = tpu.concatenate %99, %100, %101, %102 in 0 : vector<1x16x8xf32>, vector<1x16x8xf32>, vector<1x16x8xf32>, vector<1x16x8xf32> -> vector<4x16x8xf32>
    %104 = vector.shape_cast %103 : vector<4x16x8xf32> to vector<8x8x8xf32>
    "tpu.trace_start"() <{level = 10 : i32, message = "nqd,nkd->nqk"}> : () -> ()
    %cst_85 = arith.constant dense<0.000000e+00> : vector<8x8x8xf32>
    %105 = tpu.matmul %92, %98, %cst_85 {dimension_numbers = #tpu.dot_dimension_numbers<[2], [2], [1], [1], [0, 0, 0, 1, 1, 1], [0], [0]>} : vector<8x8x8xf32>, vector<8x8x8xf32>, vector<8x8x8xf32> -> vector<8x8x8xf32>
    "tpu.trace_stop"() : () -> ()
    %cst_86 = arith.constant dense<0xFF800000> : vector<8x8xf32>
    %106 = vector.multi_reduction <maximumf>, %105, %cst_86 [2] : vector<8x8x8xf32> to vector<8x8xf32>
    %107 = vector.shape_cast %106 : vector<8x8xf32> to vector<8x8x1xf32>
    %108 = vector.broadcast %107 : vector<8x8x1xf32> to vector<8x8x8xf32>
    %109 = arith.subf %105, %108 : vector<8x8x8xf32>
    %110 = math.exp %109 : vector<8x8x8xf32>
    %cst_87 = arith.constant dense<0.000000e+00> : vector<8x8xf32>
    %111 = vector.multi_reduction <add>, %110, %cst_87 [2] : vector<8x8x8xf32> to vector<8x8xf32>
    %112 = vector.shape_cast %111 : vector<8x8xf32> to vector<8x8x1xf32>
    %113 = tpu.reciprocal %112 {approx = true} : vector<8x8x1xf32> -> vector<8x8x1xf32>
    %114 = vector.broadcast %113 : vector<8x8x1xf32> to vector<8x8x8xf32>
    %115 = arith.mulf %110, %114 : vector<8x8x8xf32>
    "tpu.trace_start"() <{level = 10 : i32, message = "nqk,nkd->nqd"}> : () -> ()
    %cst_88 = arith.constant dense<0.000000e+00> : vector<8x8x8xf32>
    %116 = tpu.matmul %115, %104, %cst_88 {dimension_numbers = #tpu.dot_dimension_numbers<[2], [1], [1], [2], [0, 0, 0, 1, 1, 2], [0], [0]>} : vector<8x8x8xf32>, vector<8x8x8xf32>, vector<8x8x8xf32> -> vector<8x8x8xf32>
    "tpu.trace_stop"() : () -> ()
    %117 = vector.shape_cast %116 : vector<8x8x8xf32> to vector<4x16x8xf32>
    %118 = vector.extract_strided_slice %117 {offsets = [0, 0, 0], sizes = [1, 16, 8], strides = [1, 1, 1]} : vector<4x16x8xf32> to vector<1x16x8xf32>
    %119 = vector.shape_cast %118 : vector<1x16x8xf32> to vector<16x8xf32>
    %120 = vector.extract_strided_slice %117 {offsets = [1, 0, 0], sizes = [1, 16, 8], strides = [1, 1, 1]} : vector<4x16x8xf32> to vector<1x16x8xf32>
    %121 = vector.shape_cast %120 : vector<1x16x8xf32> to vector<16x8xf32>
    %122 = vector.extract_strided_slice %117 {offsets = [2, 0, 0], sizes = [1, 16, 8], strides = [1, 1, 1]} : vector<4x16x8xf32> to vector<1x16x8xf32>
    %123 = vector.shape_cast %122 : vector<1x16x8xf32> to vector<16x8xf32>
    %124 = vector.extract_strided_slice %117 {offsets = [3, 0, 0], sizes = [1, 16, 8], strides = [1, 1, 1]} : vector<4x16x8xf32> to vector<1x16x8xf32>
    %125 = vector.shape_cast %124 : vector<1x16x8xf32> to vector<16x8xf32>
    %126 = tpu.concatenate %119, %121, %123, %125 in 1 : vector<16x8xf32>, vector<16x8xf32>, vector<16x8xf32>, vector<16x8xf32> -> vector<16x32xf32>
    %127 = tpu.concatenate %23, %44, %65, %86 in 1 : vector<16x8xf32>, vector<16x8xf32>, vector<16x8xf32>, vector<16x8xf32> -> vector<16x32xf32>
    %128 = vector.shape_cast %127 : vector<16x32xf32> to vector<2x8x32xf32>
    %cst_89 = arith.constant 0.000000e+00 : f32
    %129 = vector.broadcast %cst_89 : f32 to vector<2x2x32xf32>
    %130 = vector.extract_strided_slice %128 {offsets = [0, 0, 0], sizes = [2, 6, 32], strides = [1, 1, 1]} : vector<2x8x32xf32> to vector<2x6x32xf32>
    %131 = tpu.concatenate %129, %130 in 1 : vector<2x2x32xf32>, vector<2x6x32xf32> -> vector<2x8x32xf32>
    %cst_90 = arith.constant 0.000000e+00 : f32
    %132 = vector.broadcast %cst_90 : f32 to vector<2x1x32xf32>
    %133 = vector.extract_strided_slice %128 {offsets = [0, 0, 0], sizes = [2, 7, 32], strides = [1, 1, 1]} : vector<2x8x32xf32> to vector<2x7x32xf32>
    %134 = tpu.concatenate %132, %133 in 1 : vector<2x1x32xf32>, vector<2x7x32xf32> -> vector<2x8x32xf32>
    %cst_91 = arith.constant 0.000000e+00 : f32
    %135 = vector.broadcast %cst_91 : f32 to vector<2x1x32xf32>
    %136 = vector.extract_strided_slice %128 {offsets = [0, 1, 0], sizes = [2, 7, 32], strides = [1, 1, 1]} : vector<2x8x32xf32> to vector<2x7x32xf32>
    %137 = tpu.concatenate %136, %135 in 1 : vector<2x7x32xf32>, vector<2x1x32xf32> -> vector<2x8x32xf32>
    %cst_92 = arith.constant 0.000000e+00 : f32
    %138 = vector.broadcast %cst_92 : f32 to vector<2x2x32xf32>
    %139 = vector.extract_strided_slice %128 {offsets = [0, 2, 0], sizes = [2, 6, 32], strides = [1, 1, 1]} : vector<2x8x32xf32> to vector<2x6x32xf32>
    %140 = tpu.concatenate %139, %138 in 1 : vector<2x6x32xf32>, vector<2x2x32xf32> -> vector<2x8x32xf32>
    %c0_93 = arith.constant 0 : index
    %c0_94 = arith.constant 0 : index
    %141 = vector.load %arg12[%c0_93, %c0_94] : memref<8x32xf32, #tpu.memory_space<vmem>>, vector<8x32xf32>
    %142 = vector.extract_strided_slice %141 {offsets = [0, 0], sizes = [1, 32], strides = [1, 1]} : vector<8x32xf32> to vector<1x32xf32>
    %143 = vector.shape_cast %142 : vector<1x32xf32> to vector<32xf32>
    %144 = vector.shape_cast %143 : vector<32xf32> to vector<1x1x32xf32>
    %145 = vector.broadcast %144 : vector<1x1x32xf32> to vector<2x8x32xf32>
    %146 = arith.mulf %134, %145 : vector<2x8x32xf32>
    %147 = vector.extract_strided_slice %141 {offsets = [1, 0], sizes = [1, 32], strides = [1, 1]} : vector<8x32xf32> to vector<1x32xf32>
    %148 = vector.shape_cast %147 : vector<1x32xf32> to vector<32xf32>
    %149 = vector.shape_cast %148 : vector<32xf32> to vector<1x1x32xf32>
    %150 = vector.broadcast %149 : vector<1x1x32xf32> to vector<2x8x32xf32>
    %151 = arith.mulf %128, %150 : vector<2x8x32xf32>
    %152 = arith.addf %146, %151 : vector<2x8x32xf32>
    %153 = vector.extract_strided_slice %141 {offsets = [2, 0], sizes = [1, 32], strides = [1, 1]} : vector<8x32xf32> to vector<1x32xf32>
    %154 = vector.shape_cast %153 : vector<1x32xf32> to vector<32xf32>
    %155 = vector.shape_cast %154 : vector<32xf32> to vector<1x1x32xf32>
    %156 = vector.broadcast %155 : vector<1x1x32xf32> to vector<2x8x32xf32>
    %157 = arith.mulf %137, %156 : vector<2x8x32xf32>
    %158 = arith.addf %152, %157 : vector<2x8x32xf32>
    %159 = vector.extract_strided_slice %141 {offsets = [3, 0], sizes = [1, 32], strides = [1, 1]} : vector<8x32xf32> to vector<1x32xf32>
    %160 = vector.shape_cast %159 : vector<1x32xf32> to vector<32xf32>
    %161 = vector.shape_cast %160 : vector<32xf32> to vector<1x1x32xf32>
    %162 = vector.broadcast %161 : vector<1x1x32xf32> to vector<2x8x32xf32>
    %163 = arith.mulf %131, %162 : vector<2x8x32xf32>
    %164 = vector.extract_strided_slice %141 {offsets = [4, 0], sizes = [1, 32], strides = [1, 1]} : vector<8x32xf32> to vector<1x32xf32>
    %165 = vector.shape_cast %164 : vector<1x32xf32> to vector<32xf32>
    %166 = vector.shape_cast %165 : vector<32xf32> to vector<1x1x32xf32>
    %167 = vector.broadcast %166 : vector<1x1x32xf32> to vector<2x8x32xf32>
    %168 = arith.mulf %134, %167 : vector<2x8x32xf32>
    %169 = arith.addf %163, %168 : vector<2x8x32xf32>
    %170 = vector.extract_strided_slice %141 {offsets = [5, 0], sizes = [1, 32], strides = [1, 1]} : vector<8x32xf32> to vector<1x32xf32>
    %171 = vector.shape_cast %170 : vector<1x32xf32> to vector<32xf32>
    %172 = vector.shape_cast %171 : vector<32xf32> to vector<1x1x32xf32>
    %173 = vector.broadcast %172 : vector<1x1x32xf32> to vector<2x8x32xf32>
    %174 = arith.mulf %128, %173 : vector<2x8x32xf32>
    %175 = arith.addf %169, %174 : vector<2x8x32xf32>
    %176 = vector.extract_strided_slice %141 {offsets = [6, 0], sizes = [1, 32], strides = [1, 1]} : vector<8x32xf32> to vector<1x32xf32>
    %177 = vector.shape_cast %176 : vector<1x32xf32> to vector<32xf32>
    %178 = vector.shape_cast %177 : vector<32xf32> to vector<1x1x32xf32>
    %179 = vector.broadcast %178 : vector<1x1x32xf32> to vector<2x8x32xf32>
    %180 = arith.mulf %137, %179 : vector<2x8x32xf32>
    %181 = arith.addf %175, %180 : vector<2x8x32xf32>
    %182 = vector.extract_strided_slice %141 {offsets = [7, 0], sizes = [1, 32], strides = [1, 1]} : vector<8x32xf32> to vector<1x32xf32>
    %183 = vector.shape_cast %182 : vector<1x32xf32> to vector<32xf32>
    %184 = vector.shape_cast %183 : vector<32xf32> to vector<1x1x32xf32>
    %185 = vector.broadcast %184 : vector<1x1x32xf32> to vector<2x8x32xf32>
    %186 = arith.mulf %140, %185 : vector<2x8x32xf32>
    %187 = arith.addf %181, %186 : vector<2x8x32xf32>
    %188 = vector.shape_cast %158 : vector<2x8x32xf32> to vector<16x32xf32>
    %189 = vector.shape_cast %187 : vector<2x8x32xf32> to vector<16x32xf32>
    %190 = tpu.concatenate %126, %127, %188, %189 in 1 : vector<16x32xf32>, vector<16x32xf32>, vector<16x32xf32>, vector<16x32xf32> -> vector<16x128xf32>
    %c0_95 = arith.constant 0 : index
    %c0_96 = arith.constant 0 : index
    %191 = vector.load %arg10[%c0_95, %c0_96] : memref<128x32xf32, #tpu.memory_space<vmem>>, vector<128x32xf32>
    %cst_97 = arith.constant dense<0.000000e+00> : vector<16x32xf32>
    %192 = tpu.matmul %190, %191, %cst_97 {dimension_numbers = #tpu.dot_dimension_numbers<[1], [0], [0], [1], [0, 0, 1, 1], [], []>} : vector<16x128xf32>, vector<128x32xf32>, vector<16x32xf32> -> vector<16x32xf32>
    %c0_98 = arith.constant 0 : index
    %c0_99 = arith.constant 0 : index
    %193 = vector.load %arg11[%c0_98, %c0_99] : memref<1x32xf32, #tpu.memory_space<vmem>>, vector<1x32xf32>
    %194 = vector.broadcast %193 : vector<1x32xf32> to vector<16x32xf32>
    %195 = arith.addf %192, %194 : vector<16x32xf32>
    %c0_100 = arith.constant 0 : index
    %c0_101 = arith.constant 0 : index
    %196 = vector.load %arg13[%c0_100, %c0_101] : memref<16x32xf32, #tpu.memory_space<vmem>>, vector<16x32xf32>
    tpu.vector_store %arg13[%c0_100, %c0_101], %195 {strides = array<i32>} : memref<16x32xf32, #tpu.memory_space<vmem>>, vector<16x32xf32>,
    return
  }
  func.func @transform_0(%arg0: i32) -> (i32, i32) {
    %c0_i32 = arith.constant 0 : i32
    %c0_i32_0 = arith.constant 0 : i32
    return %arg0, %c0_i32 : i32, i32
  }
  func.func @transform_1(%arg0: i32) -> (i32, i32) {
    %c0_i32 = arith.constant 0 : i32
    %c0_i32_0 = arith.constant 0 : i32
    return %arg0, %c0_i32 : i32, i32
  }
  func.func @transform_2(%arg0: i32) -> (i32, i32) {
    %c0_i32 = arith.constant 0 : i32
    %c0_i32_0 = arith.constant 0 : i32
    return %arg0, %c0_i32 : i32, i32
  }
  func.func @transform_3(%arg0: i32) -> (i32, i32, i32) {
    %c0_i32 = arith.constant 0 : i32
    %c0_i32_0 = arith.constant 0 : i32
    %c0_i32_1 = arith.constant 0 : i32
    %c0_i32_2 = arith.constant 0 : i32
    return %c0_i32, %c0_i32_0, %c0_i32_1 : i32, i32, i32
  }
  func.func @transform_4(%arg0: i32) -> (i32, i32, i32) {
    %c0_i32 = arith.constant 0 : i32
    %c0_i32_0 = arith.constant 0 : i32
    %c0_i32_1 = arith.constant 0 : i32
    %c0_i32_2 = arith.constant 0 : i32
    return %c0_i32, %c0_i32_0, %c0_i32_1 : i32, i32, i32
  }
  func.func @transform_5(%arg0: i32) -> (i32, i32, i32) {
    %c0_i32 = arith.constant 0 : i32
    %c0_i32_0 = arith.constant 0 : i32
    %c0_i32_1 = arith.constant 0 : i32
    %c0_i32_2 = arith.constant 0 : i32
    return %c0_i32, %c0_i32_0, %c0_i32_1 : i32, i32, i32
  }
  func.func @transform_6(%arg0: i32) -> (i32, i32, i32) {
    %c0_i32 = arith.constant 0 : i32
    %c0_i32_0 = arith.constant 0 : i32
    %c0_i32_1 = arith.constant 0 : i32
    %c0_i32_2 = arith.constant 0 : i32
    return %c0_i32, %c0_i32_0, %c0_i32_1 : i32, i32, i32
  }
  func.func @transform_7(%arg0: i32) -> (i32, i32, i32) {
    %c0_i32 = arith.constant 0 : i32
    %c0_i32_0 = arith.constant 0 : i32
    %c0_i32_1 = arith.constant 0 : i32
    %c0_i32_2 = arith.constant 0 : i32
    return %c0_i32, %c0_i32_0, %c0_i32_1 : i32, i32, i32
  }
  func.func @transform_8(%arg0: i32) -> (i32, i32, i32) {
    %c0_i32 = arith.constant 0 : i32
    %c0_i32_0 = arith.constant 0 : i32
    %c0_i32_1 = arith.constant 0 : i32
    %c0_i32_2 = arith.constant 0 : i32
    return %c0_i32, %c0_i32_0, %c0_i32_1 : i32, i32, i32
  }
  func.func @transform_9(%arg0: i32) -> (i32, i32) {
    %c0_i32 = arith.constant 0 : i32
    %c0_i32_0 = arith.constant 0 : i32
    %c0_i32_1 = arith.constant 0 : i32
    return %c0_i32, %c0_i32_0 : i32, i32
  }
  func.func @transform_10(%arg0: i32) -> (i32, i32) {
    %c0_i32 = arith.constant 0 : i32
    %c0_i32_0 = arith.constant 0 : i32
    %c0_i32_1 = arith.constant 0 : i32
    return %c0_i32, %c0_i32_0 : i32, i32
  }
  func.func @transform_11(%arg0: i32) -> (i32, i32) {
    %c0_i32 = arith.constant 0 : i32
    %c0_i32_0 = arith.constant 0 : i32
    %c0_i32_1 = arith.constant 0 : i32
    return %c0_i32, %c0_i32_0 : i32, i32
  }
  func.func @transform_12(%arg0: i32) -> (i32, i32) {
    %c0_i32 = arith.constant 0 : i32
    %c0_i32_0 = arith.constant 0 : i32
    return %arg0, %c0_i32 : i32, i32
  }
}

</mosaic_0001>

<llo_original>
// kernel: tpu_custom_call.1
$region0: #{tpu_custom_call.1}
  #allocation0 [shape = 'u32[]', space=smem, size = 0x4, offset = 0x4, fixed_abs, tag = 'smem constant byte address 0x4 - core index']
  #allocation1 [shape = 'u32[144,128]{1,0:T(1,128)}', space=vmem, size = 0x12000, scoped, tag = 'internal scratch']
  %s0 = inlined_call_operand.vmem [shape: f32[32,32], index: 0, kind: input, shape index: {}]
  %s1 = inlined_call_operand.vmem [shape: f32[32,96], index: 1, kind: input, shape index: {}]
  %s2 = inlined_call_operand.vmem [shape: f32[32,96], index: 2, kind: input, shape index: {}]
  %s3 = inlined_call_operand.vmem [shape: f32[4,32,8], index: 3, kind: input, shape index: {}]
  %s4 = inlined_call_operand.vmem [shape: f32[4,96,8], index: 4, kind: input, shape index: {}]
  %s5 = inlined_call_operand.vmem [shape: f32[4,96,8], index: 5, kind: input, shape index: {}]
  %s6 = inlined_call_operand.vmem [shape: f32[4,1,8], index: 6, kind: input, shape index: {}]
  %s7 = inlined_call_operand.vmem [shape: f32[4,1,8], index: 7, kind: input, shape index: {}]
  %s8 = inlined_call_operand.vmem [shape: f32[4,1,8], index: 8, kind: input, shape index: {}]
  %s9 = inlined_call_operand.vmem [shape: f32[128,32], index: 9, kind: input, shape index: {}]
  %s10 = inlined_call_operand.vmem [shape: f32[1,32], index: 10, kind: input, shape index: {}]
  %s11 = inlined_call_operand.vmem [shape: f32[8,32], index: 11, kind: input, shape index: {}]
  %s12 = inlined_call_operand.hbm [shape: f32[32,32], index: 12, kind: output, shape index: {}]
  %s13 = sld [smem:[#allocation0]]
  $region81: #{tpu_custom_call.1} parent=0
    _
  %s15 = ssub.s32 1, %s13
  %s16 = scalar_select 0, %s15, %s13
  $region1: #{tpu_custom_call.1} parent=0
    #allocation2 [shape = 'u8[16384]{0}', space=vmem, size = 0x4000, scoped, tag = 'output window, operand 0']
    #allocation3 [shape = 's32[2]{0}', space=sflag, size = 0x8, scoped, tag = 'scoped memory for tpu_custom_call.1']
    %17 = vsyncpa [#allocation3], 0
    %s18 = scalar_lea.sflag [#allocation3], 1
    %19 = vsyncpa %s18, 0
    loop: start=0, step=1, limit=4
    $region2: #{tpu_custom_call.1} parent=1 // loop_pre_header
      _
    $region3: #{tpu_custom_call.1} parent=1 // loop_header
      %s21 = sphi 0, %s25
      %p22 = scmp.ge.s32.totalorder %s21, 4
      %s31 = sphi 0, %s33
      %s34 = sphi 0, %s31
      %s35 = sphi 0, %s34
      %s51 = sphi 0, %s35
      %s57 = sphi 0, %s59
      %s60 = sphi 0, %s57
      %s61 = sphi 0, %s60
      %s77 = sphi 0, %s61
      %s83 = sphi 0, %s85
      %s86 = sphi 0, %s83
      %s87 = sphi 0, %s86
      %s103 = sphi 0, %s87
      %s107 = sphi 0, %s107
      %s109 = sphi 0, %s107
      %s110 = sphi 0, %s109
      %s124 = sphi 0, %s110
      %s128 = sphi 0, %s128
      %s130 = sphi 0, %s128
      %s131 = sphi 0, %s130
      %s145 = sphi 0, %s131
      %s149 = sphi 0, %s149
      %s151 = sphi 0, %s149
      %s152 = sphi 0, %s151
      %s166 = sphi 0, %s152
      %s170 = sphi 0, %s170
      %s172 = sphi 0, %s170
      %s173 = sphi 0, %s172
      %s187 = sphi 0, %s173
      %s191 = sphi 0, %s191
      %s193 = sphi 0, %s191
      %s194 = sphi 0, %s193
      %s208 = sphi 0, %s194
      %s212 = sphi 0, %s212
      %s214 = sphi 0, %s212
      %s215 = sphi 0, %s214
      %s229 = sphi 0, %s215
      %s233 = sphi 0, %s233
      %s235 = sphi 0, %s233
      %s236 = sphi 0, %s235
      %s250 = sphi 0, %s236
      %s254 = sphi 0, %s254
      %s256 = sphi 0, %s254
      %s257 = sphi 0, %s256
      %s271 = sphi 0, %s257
      %s275 = sphi 0, %s275
      %s277 = sphi 0, %s275
      %s278 = sphi 0, %s277
      %s292 = sphi 0, %s278
      %s298 = sphi 0, %s300
      %s301 = sphi 0, %s298
      %s302 = sphi 0, %s301
      %s318 = sphi 0, %s302
    $region4: #{tpu_custom_call.1} parent=1 // loop_header_branch
      %24 = sbr.rel (%p22) target = $region8
    $region5: #{tpu_custom_call.1} parent=1 // loop_body
      %s26 = ssub.s32 %s21, 1
      %s27 = ssub.s32 %s21, 2
      %s28 = sadd.s32 %s21, 1
      %s29 = ssub.s32 %s21, %s28
      %p30 = scmp.eq.s32.totalorder %s29, 0
      %s32 = sadd.s32 %s31, 1
      %s33 = scalar_select %p30, %s31, %s32
      %p36 = pneg %p30
      %p37 = scmp.eq.s32.totalorder %s21, 1
      %p38 = por %p36, %p37
      %p39 = scmp.ne.s32.totalorder %s31, %s34
      %p40 = scmp.eq.s32.totalorder %s21, 0
      %p41 = por %p39, %p40
      %p42 = scmp.ne.s32.totalorder %s31, %s34
      %p43 = scmp.eq.s32.totalorder %s26, 1
      %p44 = por %p42, %p43
      %p45 = scmp.ne.s32.totalorder %s34, %s35
      %p46 = scmp.eq.s32.totalorder %s26, 0
      %p47 = por %p45, %p46
      %p48 = scmp.ne.s32.totalorder %s34, %s35
      %p49 = scmp.eq.s32.totalorder %s27, 1
      %p50 = por %p48, %p49
      %p52 = scmp.ne.s32.totalorder %s35, %s51
      %p53 = scmp.eq.s32.totalorder %s27, 0
      %p54 = por %p52, %p53
      %s55 = ssub.s32 %s21, %s28
      %p56 = scmp.eq.s32.totalorder %s55, 0
      %s58 = sadd.s32 %s57, 1
      %s59 = scalar_select %p56, %s57, %s58
      %p62 = pneg %p56
      %p63 = scmp.eq.s32.totalorder %s21, 1
      %p64 = por %p62, %p63
      %p65 = scmp.ne.s32.totalorder %s57, %s60
      %p66 = scmp.eq.s32.totalorder %s21, 0
      %p67 = por %p65, %p66
      %p68 = scmp.ne.s32.totalorder %s57, %s60
      %p69 = scmp.eq.s32.totalorder %s26, 1
      %p70 = por %p68, %p69
      %p71 = scmp.ne.s32.totalorder %s60, %s61
      %p72 = scmp.eq.s32.totalorder %s26, 0
      %p73 = por %p71, %p72
      %p74 = scmp.ne.s32.totalorder %s60, %s61
      %p75 = scmp.eq.s32.totalorder %s27, 1
      %p76 = por %p74, %p75
      %p78 = scmp.ne.s32.totalorder %s61, %s77
      %p79 = scmp.eq.s32.totalorder %s27, 0
      %p80 = por %p78, %p79
      %s81 = ssub.s32 %s21, %s28
      %p82 = scmp.eq.s32.totalorder %s81, 0
      %s84 = sadd.s32 %s83, 1
      %s85 = scalar_select %p82, %s83, %s84
      %p88 = pneg %p82
      %p89 = scmp.eq.s32.totalorder %s21, 1
      %p90 = por %p88, %p89
      %p91 = scmp.ne.s32.totalorder %s83, %s86
      %p92 = scmp.eq.s32.totalorder %s21, 0
      %p93 = por %p91, %p92
      %p94 = scmp.ne.s32.totalorder %s83, %s86
      %p95 = scmp.eq.s32.totalorder %s26, 1
      %p96 = por %p94, %p95
      %p97 = scmp.ne.s32.totalorder %s86, %s87
      %p98 = scmp.eq.s32.totalorder %s26, 0
      %p99 = por %p97, %p98
      %p100 = scmp.ne.s32.totalorder %s86, %s87
      %p101 = scmp.eq.s32.totalorder %s27, 1
      %p102 = por %p100, %p101
      %p104 = scmp.ne.s32.totalorder %s87, %s103
      %p105 = scmp.eq.s32.totalorder %s27, 0
      %p106 = por %p104, %p105
      %s108 = sadd.s32 %s107, 1
      %p111 = scmp.eq.s32.totalorder %s21, 1
      %p112 = scmp.ne.s32.totalorder %s107, %s109
      %p113 = scmp.eq.s32.totalorder %s21, 0
      %p114 = por %p112, %p113
      %p115 = scmp.ne.s32.totalorder %s107, %s109
      %p116 = scmp.eq.s32.totalorder %s26, 1
      %p117 = por %p115, %p116
      %p118 = scmp.ne.s32.totalorder %s109, %s110
      %p119 = scmp.eq.s32.totalorder %s26, 0
      %p120 = por %p118, %p119
      %p121 = scmp.ne.s32.totalorder %s109, %s110
      %p122 = scmp.eq.s32.totalorder %s27, 1
      %p123 = por %p121, %p122
      %p125 = scmp.ne.s32.totalorder %s110, %s124
      %p126 = scmp.eq.s32.totalorder %s27, 0
      %p127 = por %p125, %p126
      %s129 = sadd.s32 %s128, 1
      %p132 = scmp.eq.s32.totalorder %s21, 1
      %p133 = scmp.ne.s32.totalorder %s128, %s130
      %p134 = scmp.eq.s32.totalorder %s21, 0
      %p135 = por %p133, %p134
      %p136 = scmp.ne.s32.totalorder %s128, %s130
      %p137 = scmp.eq.s32.totalorder %s26, 1
      %p138 = por %p136, %p137
      %p139 = scmp.ne.s32.totalorder %s130, %s131
      %p140 = scmp.eq.s32.totalorder %s26, 0
      %p141 = por %p139, %p140
      %p142 = scmp.ne.s32.totalorder %s130, %s131
      %p143 = scmp.eq.s32.totalorder %s27, 1
      %p144 = por %p142, %p143
      %p146 = scmp.ne.s32.totalorder %s131, %s145
      %p147 = scmp.eq.s32.totalorder %s27, 0
      %p148 = por %p146, %p147
      %s150 = sadd.s32 %s149, 1
      %p153 = scmp.eq.s32.totalorder %s21, 1
      %p154 = scmp.ne.s32.totalorder %s149, %s151
      %p155 = scmp.eq.s32.totalorder %s21, 0
      %p156 = por %p154, %p155
      %p157 = scmp.ne.s32.totalorder %s149, %s151
      %p158 = scmp.eq.s32.totalorder %s26, 1
      %p159 = por %p157, %p158
      %p160 = scmp.ne.s32.totalorder %s151, %s152
      %p161 = scmp.eq.s32.totalorder %s26, 0
      %p162 = por %p160, %p161
      %p163 = scmp.ne.s32.totalorder %s151, %s152
      %p164 = scmp.eq.s32.totalorder %s27, 1
      %p165 = por %p163, %p164
      %p167 = scmp.ne.s32.totalorder %s152, %s166
      %p168 = scmp.eq.s32.totalorder %s27, 0
      %p169 = por %p167, %p168
      %s171 = sadd.s32 %s170, 1
      %p174 = scmp.eq.s32.totalorder %s21, 1
      %p175 = scmp.ne.s32.totalorder %s170, %s172
      %p176 = scmp.eq.s32.totalorder %s21, 0
      %p177 = por %p175, %p176
      %p178 = scmp.ne.s32.totalorder %s170, %s172
      %p179 = scmp.eq.s32.totalorder %s26, 1
      %p180 = por %p178, %p179
      %p181 = scmp.ne.s32.totalorder %s172, %s173
      %p182 = scmp.eq.s32.totalorder %s26, 0
      %p183 = por %p181, %p182
      %p184 = scmp.ne.s32.totalorder %s172, %s173
      %p185 = scmp.eq.s32.totalorder %s27, 1
      %p186 = por %p184, %p185
      %p188 = scmp.ne.s32.totalorder %s173, %s187
      %p189 = scmp.eq.s32.totalorder %s27, 0
      %p190 = por %p188, %p189
      %s192 = sadd.s32 %s191, 1
      %p195 = scmp.eq.s32.totalorder %s21, 1
      %p196 = scmp.ne.s32.totalorder %s191, %s193
      %p197 = scmp.eq.s32.totalorder %s21, 0
      %p198 = por %p196, %p197
      %p199 = scmp.ne.s32.totalorder %s191, %s193
      %p200 = scmp.eq.s32.totalorder %s26, 1
      %p201 = por %p199, %p200
      %p202 = scmp.ne.s32.totalorder %s193, %s194
      %p203 = scmp.eq.s32.totalorder %s26, 0
      %p204 = por %p202, %p203
      %p205 = scmp.ne.s32.totalorder %s193, %s194
      %p206 = scmp.eq.s32.totalorder %s27, 1
      %p207 = por %p205, %p206
      %p209 = scmp.ne.s32.totalorder %s194, %s208
      %p210 = scmp.eq.s32.totalorder %s27, 0
      %p211 = por %p209, %p210
      %s213 = sadd.s32 %s212, 1
      %p216 = scmp.eq.s32.totalorder %s21, 1
      %p217 = scmp.ne.s32.totalorder %s212, %s214
      %p218 = scmp.eq.s32.totalorder %s21, 0
      %p219 = por %p217, %p218
      %p220 = scmp.ne.s32.totalorder %s212, %s214
      %p221 = scmp.eq.s32.totalorder %s26, 1
      %p222 = por %p220, %p221
      %p223 = scmp.ne.s32.totalorder %s214, %s215
      %p224 = scmp.eq.s32.totalorder %s26, 0
      %p225 = por %p223, %p224
      %p226 = scmp.ne.s32.totalorder %s214, %s215
      %p227 = scmp.eq.s32.totalorder %s27, 1
      %p228 = por %p226, %p227
      %p230 = scmp.ne.s32.totalorder %s215, %s229
      %p231 = scmp.eq.s32.totalorder %s27, 0
      %p232 = por %p230, %p231
      %s234 = sadd.s32 %s233, 1
      %p237 = scmp.eq.s32.totalorder %s21, 1
      %p238 = scmp.ne.s32.totalorder %s233, %s235
      %p239 = scmp.eq.s32.totalorder %s21, 0
      %p240 = por %p238, %p239
      %p241 = scmp.ne.s32.totalorder %s233, %s235
      %p242 = scmp.eq.s32.totalorder %s26, 1
      %p243 = por %p241, %p242
      %p244 = scmp.ne.s32.totalorder %s235, %s236
      %p245 = scmp.eq.s32.totalorder %s26, 0
      %p246 = por %p244, %p245
      %p247 = scmp.ne.s32.totalorder %s235, %s236
      %p248 = scmp.eq.s32.totalorder %s27, 1
      %p249 = por %p247, %p248
      %p251 = scmp.ne.s32.totalorder %s236, %s250
      %p252 = scmp.eq.s32.totalorder %s27, 0
      %p253 = por %p251, %p252
      %s255 = sadd.s32 %s254, 1
      %p258 = scmp.eq.s32.totalorder %s21, 1
      %p259 = scmp.ne.s32.totalorder %s254, %s256
      %p260 = scmp.eq.s32.totalorder %s21, 0
      %p261 = por %p259, %p260
      %p262 = scmp.ne.s32.totalorder %s254, %s256
      %p263 = scmp.eq.s32.totalorder %s26, 1
      %p264 = por %p262, %p263
      %p265 = scmp.ne.s32.totalorder %s256, %s257
      %p266 = scmp.eq.s32.totalorder %s26, 0
      %p267 = por %p265, %p266
      %p268 = scmp.ne.s32.totalorder %s256, %s257
      %p269 = scmp.eq.s32.totalorder %s27, 1
      %p270 = por %p268, %p269
      %p272 = scmp.ne.s32.totalorder %s257, %s271
      %p273 = scmp.eq.s32.totalorder %s27, 0
      %p274 = por %p272, %p273
      %s276 = sadd.s32 %s275, 1
      %p279 = scmp.eq.s32.totalorder %s21, 1
      %p280 = scmp.ne.s32.totalorder %s275, %s277
      %p281 = scmp.eq.s32.totalorder %s21, 0
      %p282 = por %p280, %p281
      %p283 = scmp.ne.s32.totalorder %s275, %s277
      %p284 = scmp.eq.s32.totalorder %s26, 1
      %p285 = por %p283, %p284
      %p286 = scmp.ne.s32.totalorder %s277, %s278
      %p287 = scmp.eq.s32.totalorder %s26, 0
      %p288 = por %p286, %p287
      %p289 = scmp.ne.s32.totalorder %s277, %s278
      %p290 = scmp.eq.s32.totalorder %s27, 1
      %p291 = por %p289, %p290
      %p293 = scmp.ne.s32.totalorder %s278, %s292
      %p294 = scmp.eq.s32.totalorder %s27, 0
      %p295 = por %p293, %p294
      %s296 = ssub.s32 %s21, %s28
      %p297 = scmp.eq.s32.totalorder %s296, 0
      %s299 = sadd.s32 %s298, 1
      %s300 = scalar_select %p297, %s298, %s299
      %p303 = pneg %p297
      %p304 = scmp.eq.s32.totalorder %s21, 1
      %p305 = por %p303, %p304
      %p306 = scmp.ne.s32.totalorder %s298, %s301
      %p307 = scmp.eq.s32.totalorder %s21, 0
      %p308 = por %p306, %p307
      %p309 = scmp.ne.s32.totalorder %s298, %s301
      %p310 = scmp.eq.s32.totalorder %s26, 1
      %p311 = por %p309, %p310
      %p312 = scmp.ne.s32.totalorder %s301, %s302
      %p313 = scmp.eq.s32.totalorder %s26, 0
      %p314 = por %p312, %p313
      %p315 = scmp.ne.s32.totalorder %s301, %s302
      %p316 = scmp.eq.s32.totalorder %s27, 1
      %p317 = por %p315, %p316
      %p319 = scmp.ne.s32.totalorder %s302, %s318
      %p320 = scmp.eq.s32.totalorder %s27, 0
      %p321 = por %p319, %p320
      %p322 = scmp.le.s32.totalorder 1, %s21
      %p323 = scmp.lt.s32.totalorder %s21, 3
      %p324 = pnand %p322, %p323
      %p325 = pneg %p324
      // Predicated region
      $region9: #{tpu_custom_call.1} parent=5 // pred_check
        _
      $region10: #{tpu_custom_call.1} parent=5 // pred_check_branch
        %327 = sbr.rel (%p324) target = $region12
      $region11: #{tpu_custom_call.1} parent=5 // pred_region
        %s328 = ssub.s32 %s21, 1
        // Predicated region
        $region13: #{tpu_custom_call.1} parent=11 // pred_check
          %p329 = pneg %p120
        $region14: #{tpu_custom_call.1} parent=11 // pred_check_branch
          %331 = sbr.rel (%p329) target = $region16
        $region15: #{tpu_custom_call.1} parent=11 // pred_region
          _
        $region16: #{tpu_custom_call.1} parent=11 // pred_fallthru
          _
        // Predicated region
        $region17: #{tpu_custom_call.1} parent=11 // pred_check
          %p332 = pneg %p141
        $region18: #{tpu_custom_call.1} parent=11 // pred_check_branch
          %334 = sbr.rel (%p332) target = $region20
        $region19: #{tpu_custom_call.1} parent=11 // pred_region
          _
        $region20: #{tpu_custom_call.1} parent=11 // pred_fallthru
          _
        // Predicated region
        $region21: #{tpu_custom_call.1} parent=11 // pred_check
          %p335 = pneg %p162
        $region22: #{tpu_custom_call.1} parent=11 // pred_check_branch
          %337 = sbr.rel (%p335) target = $region24
        $region23: #{tpu_custom_call.1} parent=11 // pred_region
          _
        $region24: #{tpu_custom_call.1} parent=11 // pred_fallthru
          _
        // Predicated region
        $region25: #{tpu_custom_call.1} parent=11 // pred_check
          %p338 = pneg %p183
        $region26: #{tpu_custom_call.1} parent=11 // pred_check_branch
          %340 = sbr.rel (%p338) target = $region28
        $region27: #{tpu_custom_call.1} parent=11 // pred_region
          _
        $region28: #{tpu_custom_call.1} parent=11 // pred_fallthru
          _
        // Predicated region
        $region29: #{tpu_custom_call.1} parent=11 // pred_check
          %p341 = pneg %p204
        $region30: #{tpu_custom_call.1} parent=11 // pred_check_branch
          %343 = sbr.rel (%p341) target = $region32
        $region31: #{tpu_custom_call.1} parent=11 // pred_region
          _
        $region32: #{tpu_custom_call.1} parent=11 // pred_fallthru
          _
        // Predicated region
        $region33: #{tpu_custom_call.1} parent=11 // pred_check
          %p344 = pneg %p225
        $region34: #{tpu_custom_call.1} parent=11 // pred_check_branch
          %346 = sbr.rel (%p344) target = $region36
        $region35: #{tpu_custom_call.1} parent=11 // pred_region
          _
        $region36: #{tpu_custom_call.1} parent=11 // pred_fallthru
          _
        // Predicated region
        $region37: #{tpu_custom_call.1} parent=11 // pred_check
          %p347 = pneg %p246
        $region38: #{tpu_custom_call.1} parent=11 // pred_check_branch
          %349 = sbr.rel (%p347) target = $region40
        $region39: #{tpu_custom_call.1} parent=11 // pred_region
          _
        $region40: #{tpu_custom_call.1} parent=11 // pred_fallthru
          _
        // Predicated region
        $region41: #{tpu_custom_call.1} parent=11 // pred_check
          %p350 = pneg %p267
        $region42: #{tpu_custom_call.1} parent=11 // pred_check_branch
          %352 = sbr.rel (%p350) target = $region44
        $region43: #{tpu_custom_call.1} parent=11 // pred_region
          _
        $region44: #{tpu_custom_call.1} parent=11 // pred_fallthru
          _
        // Predicated region
        $region45: #{tpu_custom_call.1} parent=11 // pred_check
          %p353 = pneg %p288
        $region46: #{tpu_custom_call.1} parent=11 // pred_check_branch
          %355 = sbr.rel (%p353) target = $region48
        $region47: #{tpu_custom_call.1} parent=11 // pred_region
          _
        $region48: #{tpu_custom_call.1} parent=11 // pred_fallthru
          _
      $region12: #{tpu_custom_call.1} parent=5 // pred_fallthru
        _
      %p356 = scmp.lt.s32.totalorder %s21, 2
      // Predicated region
      $region49: #{tpu_custom_call.1} parent=5 // pred_check
        %p357 = pneg %p356
      $region50: #{tpu_custom_call.1} parent=5 // pred_check_branch
        %359 = sbr.rel (%p357) target = $region52
      $region51: #{tpu_custom_call.1} parent=5 // pred_region
        // Predicated region
        $region53: #{tpu_custom_call.1} parent=51 // pred_check
          %p360 = pneg %p41
        $region54: #{tpu_custom_call.1} parent=51 // pred_check_branch
          %362 = sbr.rel (%p360) target = $region56
        $region55: #{tpu_custom_call.1} parent=51 // pred_region
          %s363 = smul.u32 2, %s21
          %p364 = scmp.lt.s32.totalorder %s363, 3
          %s365 = scalar_select %p364, %s363, 3
          %s366 = smul.addr %s365, 8
          %s367 = scalar_lea.vmem %s0, %s366
          %s368 = smul.u32 2, %s21
        $region56: #{tpu_custom_call.1} parent=51 // pred_fallthru
          _
        // Predicated region
        $region57: #{tpu_custom_call.1} parent=51 // pred_check
          %p369 = pneg %p67
        $region58: #{tpu_custom_call.1} parent=51 // pred_check_branch
          %371 = sbr.rel (%p369) target = $region60
        $region59: #{tpu_custom_call.1} parent=51 // pred_region
          %s372 = smul.u32 2, %s21
          %p373 = scmp.lt.s32.totalorder %s372, 3
          %s374 = scalar_select %p373, %s372, 3
          %s375 = smul.addr %s374, 8
          %s376 = scalar_lea.vmem %s1, %s375
          %s377 = smul.u32 2, %s21
        $region60: #{tpu_custom_call.1} parent=51 // pred_fallthru
          _
        // Predicated region
        $region61: #{tpu_custom_call.1} parent=51 // pred_check
          %p378 = pneg %p93
        $region62: #{tpu_custom_call.1} parent=51 // pred_check_branch
          %380 = sbr.rel (%p378) target = $region64
        $region63: #{tpu_custom_call.1} parent=51 // pred_region
          %s381 = smul.u32 2, %s21
          %p382 = scmp.lt.s32.totalorder %s381, 3
          %s383 = scalar_select %p382, %s381, 3
          %s384 = smul.addr %s383, 8
          %s385 = scalar_lea.vmem %s2, %s384
          %s386 = smul.u32 2, %s21
        $region64: #{tpu_custom_call.1} parent=51 // pred_fallthru
          _
      $region52: #{tpu_custom_call.1} parent=5 // pred_fallthru
        _
      %p387 = scmp.le.s32.totalorder 1, %s21
      %p388 = scmp.lt.s32.totalorder %s21, 3
      %p389 = pnand %p387, %p388
      %p390 = pneg %p389
      // Predicated region
      $region65: #{tpu_custom_call.1} parent=5 // pred_check
        _
      $region66: #{tpu_custom_call.1} parent=5 // pred_check_branch
        %392 = sbr.rel (%p389) target = $region68
      $region67: #{tpu_custom_call.1} parent=5 // pred_region
        %s393 = ssub.s32 %s21, 1
        %s394 = smul.u32 2, %s26
        %p395 = scmp.lt.s32.totalorder %s394, 3
        %s396 = scalar_select %p395, %s394, 3
        %s397 = smul.addr %s396, 8
        %s398 = scalar_lea.vmem %s0, %s397
        %p399 = pneg %p47
        %p400 = pneg %p44
        %s401 = smul.u32 2, %s26
        %p402 = scmp.lt.s32.totalorder %s401, 3
        %s403 = scalar_select %p402, %s401, 3
        %s404 = smul.addr %s403, 8
        %s405 = scalar_lea.vmem %s1, %s404
        %p406 = pneg %p73
        %p407 = pneg %p70
        %s408 = smul.u32 2, %s26
        %p409 = scmp.lt.s32.totalorder %s408, 3
        %s410 = scalar_select %p409, %s408, 3
        %s411 = smul.addr %s410, 8
        %s412 = scalar_lea.vmem %s2, %s411
        %p413 = pneg %p99
        %p414 = pneg %p96
        %p415 = pneg %p120
        %p416 = pneg %p117
        %p417 = pneg %p141
        %p418 = pneg %p138
        %p419 = pneg %p162
        %p420 = pneg %p159
        %p421 = pneg %p183
        %p422 = pneg %p180
        %p423 = pneg %p204
        %p424 = pneg %p201
        %p425 = pneg %p225
        %p426 = pneg %p222
        %p427 = pneg %p246
        %p428 = pneg %p243
        %p429 = pneg %p267
        %p430 = pneg %p264
        %p431 = pneg %p288
        %p432 = pneg %p285
        %p433 = pneg %p314
        %p434 = pneg %p311
        %s435 = sand.u32 %s301, 1
        %s436 = scalar_lea.sflag [#allocation3], %s435
        %s437 = sand.u32 %s301, 1
        %s438 = smul.addr %s437, 16
        %s439 = scalar_lea.vmem [#allocation2], %s438
        %s440 = smul.u32 2, %s26
        %p441 = scmp.lt.s32.totalorder %s440, 3
        %s442 = scalar_select %p441, %s440, 3
        %s443 = smul.addr %s442, 8
        %s444 = scalar_lea.vmem %s0, %s443
        %s445 = smul.u32 2, %s26
        %s446 = smul.u32 2, %s26
        %p447 = scmp.lt.s32.totalorder %s446, 3
        %s448 = scalar_select %p447, %s446, 3
        %s449 = smul.addr %s448, 8
        %s450 = scalar_lea.vmem %s1, %s449
        %s451 = smul.u32 2, %s26
        %s452 = smul.u32 2, %s26
        %p453 = scmp.lt.s32.totalorder %s452, 3
        %s454 = scalar_select %p453, %s452, 3
        %s455 = smul.addr %s454, 8
        %s456 = scalar_lea.vmem %s2, %s455
        %s457 = smul.u32 2, %s26
        %s458 = smul.u32 2, %s26
        %v459 = vld [vmem:[%s444] sm:$0xff]
        %v460 = vld [vmem:[%s444 + $0x8] sm:$0xff]
        %v461 = vld [vmem:[%s450] sm:$0xff]
        %v462 = vld [vmem:[%s450 + $0x8] sm:$0xff]
        %v463 = vld [vmem:[%s456] sm:$0xff]
        %v464 = vld [vmem:[%s456 + $0x8] sm:$0xff]
        %v465 = vld [vmem:[%s3] sm:$0xff]
        %v466 = vld [vmem:[%s3 + $0x8] sm:$0xff]
        %v467 = vld [vmem:[%s3 + $0x10] sm:$0xff]
        %v468 = vld [vmem:[%s3 + $0x18] sm:$0xff]
        %v469 = vld [vmem:[%s6] sm:$0x1]
        %v471 = vlaneseq
        %v472 = vshrl.u32 %v471, 7
        %v473 = vsub.s32 0, %v472
        %v474 = vrot.slane %v469, %v473
        %vm476 = vcmask 261120
        %v478 = vsel %vm476, %v459, 0
        %v481 = vsel %vm476, %v460, 0
        %483 = vmatprep.subr.mxu0 0.0
        %484 = vmatpush1.msra.mxu0 %v465
        %485 = vmatprep.subr.mxu0 0.0
        %486 = vmatpush1.msra.mxu0 %v466
        %487 = vmatprep.subr.mxu0 0.0
        %488 = vmatpush1.msra.mxu0 %v467
        %489 = vmatprep.subr.mxu0 0.0
        %490 = vmatpush1.msra.mxu0 %v468
        %491 = vmatprep.subr.mxu0 0.0
        %492 = vmatpush1.msra.mxu0 0.0
        %493 = vmatprep.subr.mxu0 0.0
        %494 = vmatpush1.msra.mxu0 0.0
        %495 = vmatprep.subr.mxu0 0.0
        %496 = vmatpush1.msra.mxu0 0.0
        %497 = vmatprep.subr.mxu0 0.0
        %498 = vmatpush1.msra.mxu0 0.0
        %499 = vmatprep.subr.mxu0 0.0
        %500 = vmatpush1.msra.mxu0 0.0
        %501 = vmatprep.subr.mxu0 0.0
        %502 = vmatpush1.msra.mxu0 0.0
        %503 = vmatprep.subr.mxu0 0.0
        %504 = vmatpush1.msra.mxu0 0.0
        %505 = vmatprep.subr.mxu0 0.0
        %506 = vmatpush1.msra.mxu0 0.0
        %507 = vmatprep.subr.mxu0 0.0
        %508 = vmatpush1.msra.mxu0 0.0
        %509 = vmatprep.subr.mxu0 0.0
        %510 = vmatpush1.msra.mxu0 0.0
        %511 = vmatprep.subr.mxu0 0.0
        %512 = vmatpush1.msra.mxu0 0.0
        %513 = vmatprep.subr.mxu0 0.0
        %514 = vmatpush1.msra.mxu0 0.0
        %515 = vmatprep.subr.mxu0 0.0
        %516 = vmatpush1.msra.mxu0 0.0
        %517 = vmatprep.subr.mxu0 0.0
        %518 = vmatpush1.msra.mxu0 0.0
        %519 = vmatprep.subr.mxu0 0.0
        %520 = vmatpush1.msra.mxu0 0.0
        %521 = vmatprep.subr.mxu0 0.0
        %522 = vmatpush1.msra.mxu0 0.0
        %523 = vmatprep.subr.mxu0 0.0
        %524 = vmatpush1.msra.mxu0 0.0
        %525 = vmatprep.subr.mxu0 0.0
        %526 = vmatpush1.msra.mxu0 0.0
        %527 = vmatprep.subr.mxu0 0.0
        %528 = vmatpush1.msra.mxu0 0.0
        %529 = vmatprep.subr.mxu0 0.0
        %530 = vmatpush1.msra.mxu0 0.0
        %531 = vmatprep.subr.mxu0 0.0
        %532 = vmatpush1.msra.mxu0 0.0
        %533 = vmatprep.subr.mxu0 0.0
        %534 = vmatpush1.msra.mxu0 0.0
        %535 = vmatprep.subr.mxu0 0.0
        %536 = vmatpush1.msra.mxu0 0.0
        %537 = vmatprep.subr.mxu0 0.0
        %538 = vmatpush1.msra.mxu0 0.0
        %539 = vmatprep.subr.mxu0 0.0
        %540 = vmatpush1.msra.mxu0 0.0
        %541 = vmatprep.subr.mxu0 0.0
        %542 = vmatpush1.msra.mxu0 0.0
        %543 = vmatprep.subr.mxu0 0.0
        %544 = vmatpush1.msra.mxu0 0.0
        %545 = vmatprep.subr.mxu0 0.0
        %546 = vmatpush1.msra.mxu0 0.0
        %547 = vmatprep.mubr.f32.mxu0 0.0
        %548 = vmatmul.mubr.f32.gmra.mrb[0].mxu0 %v478
        %v549 = vpop.f32.mrb[0].mxu0
        %v550 = vadd.f32 %v474, %v549
        %v551 = vpop.f32.mrb[0].mxu0
        %552 = vmatprep.mubr.f32.mxu0 0.0
        %553 = vmatmul.mubr.f32.gmra.mrb[0].mxu0 %v481
        %v554 = vpop.f32.mrb[0].mxu0
        %v555 = vadd.f32 %v474, %v554
        %v556 = vpop.f32.mrb[0].mxu0
        %557 = vdwg.mxu0
        %v558 = vld [vmem:[%s4] sm:$0xff]
        %v559 = vld [vmem:[%s4 + $0x8] sm:$0xff]
        %v560 = vld [vmem:[%s4 + $0x10] sm:$0xff]
        %v561 = vld [vmem:[%s4 + $0x18] sm:$0xff]
        %v562 = vld [vmem:[%s4 + $0x20] sm:$0xff]
        %v563 = vld [vmem:[%s4 + $0x28] sm:$0xff]
        %v564 = vld [vmem:[%s4 + $0x30] sm:$0xff]
        %v565 = vld [vmem:[%s4 + $0x38] sm:$0xff]
        %v566 = vld [vmem:[%s4 + $0x40] sm:$0xff]
        %v567 = vld [vmem:[%s4 + $0x48] sm:$0xff]
        %v568 = vld [vmem:[%s4 + $0x50] sm:$0xff]
        %v569 = vld [vmem:[%s4 + $0x58] sm:$0xff]
        %v570 = vld [vmem:[%s7] sm:$0x1]
        %v572 = vlaneseq
        %v573 = vshrl.u32 %v572, 7
        %v574 = vsub.s32 0, %v573
        %v575 = vrot.slane %v570, %v574
        %vm577 = vcmask 785408
        %v579 = vsel %vm577, %v461, 0
        %v582 = vsel %vm577, %v462, 0
        %584 = vmatprep.subr.mxu0 0.0
        %585 = vmatpush1.msra.mxu0 %v558
        %586 = vmatprep.subr.mxu0 0.0
        %587 = vmatpush1.msra.mxu0 %v559
        %588 = vmatprep.subr.mxu0 0.0
        %589 = vmatpush1.msra.mxu0 %v560
        %590 = vmatprep.subr.mxu0 0.0
        %591 = vmatpush1.msra.mxu0 %v561
        %592 = vmatprep.subr.mxu0 0.0
        %593 = vmatpush1.msra.mxu0 %v562
        %594 = vmatprep.subr.mxu0 0.0
        %595 = vmatpush1.msra.mxu0 %v563
        %596 = vmatprep.subr.mxu0 0.0
        %597 = vmatpush1.msra.mxu0 %v564
        %598 = vmatprep.subr.mxu0 0.0
        %599 = vmatpush1.msra.mxu0 %v565
        %600 = vmatprep.subr.mxu0 0.0
        %601 = vmatpush1.msra.mxu0 %v566
        %602 = vmatprep.subr.mxu0 0.0
        %603 = vmatpush1.msra.mxu0 %v567
        %604 = vmatprep.subr.mxu0 0.0
        %605 = vmatpush1.msra.mxu0 %v568
        %606 = vmatprep.subr.mxu0 0.0
        %607 = vmatpush1.msra.mxu0 %v569
        %608 = vmatprep.subr.mxu0 0.0
        %609 = vmatpush1.msra.mxu0 0.0
        %610 = vmatprep.subr.mxu0 0.0
        %611 = vmatpush1.msra.mxu0 0.0
        %612 = vmatprep.subr.mxu0 0.0
        %613 = vmatpush1.msra.mxu0 0.0
        %614 = vmatprep.subr.mxu0 0.0
        %615 = vmatpush1.msra.mxu0 0.0
        %616 = vmatprep.subr.mxu0 0.0
        %617 = vmatpush1.msra.mxu0 0.0
        %618 = vmatprep.subr.mxu0 0.0
        %619 = vmatpush1.msra.mxu0 0.0
        %620 = vmatprep.subr.mxu0 0.0
        %621 = vmatpush1.msra.mxu0 0.0
        %622 = vmatprep.subr.mxu0 0.0
        %623 = vmatpush1.msra.mxu0 0.0
        %624 = vmatprep.subr.mxu0 0.0
        %625 = vmatpush1.msra.mxu0 0.0
        %626 = vmatprep.subr.mxu0 0.0
        %627 = vmatpush1.msra.mxu0 0.0
        %628 = vmatprep.subr.mxu0 0.0
        %629 = vmatpush1.msra.mxu0 0.0
        %630 = vmatprep.subr.mxu0 0.0
        %631 = vmatpush1.msra.mxu0 0.0
        %632 = vmatprep.subr.mxu0 0.0
        %633 = vmatpush1.msra.mxu0 0.0
        %634 = vmatprep.subr.mxu0 0.0
        %635 = vmatpush1.msra.mxu0 0.0
        %636 = vmatprep.subr.mxu0 0.0
        %637 = vmatpush1.msra.mxu0 0.0
        %638 = vmatprep.subr.mxu0 0.0
        %639 = vmatpush1.msra.mxu0 0.0
        %640 = vmatprep.subr.mxu0 0.0
        %641 = vmatpush1.msra.mxu0 0.0
        %642 = vmatprep.subr.mxu0 0.0
        %643 = vmatpush1.msra.mxu0 0.0
        %644 = vmatprep.subr.mxu0 0.0
        %645 = vmatpush1.msra.mxu0 0.0
        %646 = vmatprep.subr.mxu0 0.0
        %647 = vmatpush1.msra.mxu0 0.0
        %648 = vmatprep.mubr.f32.mxu0 0.0
        %649 = vmatmul.mubr.f32.gmra.mrb[0].mxu0 %v579
        %v650 = vpop.f32.mrb[0].mxu0
        %v651 = vadd.f32 %v575, %v650
        %v652 = vpop.f32.mrb[0].mxu0
        %653 = vmatprep.mubr.f32.mxu0 0.0
        %654 = vmatmul.mubr.f32.gmra.mrb[0].mxu0 %v582
        %v655 = vpop.f32.mrb[0].mxu0
        %v656 = vadd.f32 %v575, %v655
        %v657 = vpop.f32.mrb[0].mxu0
        %658 = vdwg.mxu0
        %v659 = vld [vmem:[%s5] sm:$0xff]
        %v660 = vld [vmem:[%s5 + $0x8] sm:$0xff]
        %v661 = vld [vmem:[%s5 + $0x10] sm:$0xff]
        %v662 = vld [vmem:[%s5 + $0x18] sm:$0xff]
        %v663 = vld [vmem:[%s5 + $0x20] sm:$0xff]
        %v664 = vld [vmem:[%s5 + $0x28] sm:$0xff]
        %v665 = vld [vmem:[%s5 + $0x30] sm:$0xff]
        %v666 = vld [vmem:[%s5 + $0x38] sm:$0xff]
        %v667 = vld [vmem:[%s5 + $0x40] sm:$0xff]
        %v668 = vld [vmem:[%s5 + $0x48] sm:$0xff]
        %v669 = vld [vmem:[%s5 + $0x50] sm:$0xff]
        %v670 = vld [vmem:[%s5 + $0x58] sm:$0xff]
        %v671 = vld [vmem:[%s8] sm:$0x1]
        %v673 = vlaneseq
        %v674 = vshrl.u32 %v673, 7
        %v675 = vsub.s32 0, %v674
        %v676 = vrot.slane %v671, %v675
        %v679 = vsel %vm577, %v463, 0
        %v682 = vsel %vm577, %v464, 0
        %684 = vmatprep.subr.mxu0 0.0
        %685 = vmatpush1.msra.mxu0 %v659
        %686 = vmatprep.subr.mxu0 0.0
        %687 = vmatpush1.msra.mxu0 %v660
        %688 = vmatprep.subr.mxu0 0.0
        %689 = vmatpush1.msra.mxu0 %v661
        %690 = vmatprep.subr.mxu0 0.0
        %691 = vmatpush1.msra.mxu0 %v662
        %692 = vmatprep.subr.mxu0 0.0
        %693 = vmatpush1.msra.mxu0 %v663
        %694 = vmatprep.subr.mxu0 0.0
        %695 = vmatpush1.msra.mxu0 %v664
        %696 = vmatprep.subr.mxu0 0.0
        %697 = vmatpush1.msra.mxu0 %v665
        %698 = vmatprep.subr.mxu0 0.0
        %699 = vmatpush1.msra.mxu0 %v666
        %700 = vmatprep.subr.mxu0 0.0
        %701 = vmatpush1.msra.mxu0 %v667
        %702 = vmatprep.subr.mxu0 0.0
        %703 = vmatpush1.msra.mxu0 %v668
        %704 = vmatprep.subr.mxu0 0.0
        %705 = vmatpush1.msra.mxu0 %v669
        %706 = vmatprep.subr.mxu0 0.0
        %707 = vmatpush1.msra.mxu0 %v670
        %708 = vmatprep.subr.mxu0 0.0
        %709 = vmatpush1.msra.mxu0 0.0
        %710 = vmatprep.subr.mxu0 0.0
        %711 = vmatpush1.msra.mxu0 0.0
        %712 = vmatprep.subr.mxu0 0.0
        %713 = vmatpush1.msra.mxu0 0.0
        %714 = vmatprep.subr.mxu0 0.0
        %715 = vmatpush1.msra.mxu0 0.0
        %716 = vmatprep.subr.mxu0 0.0
        %717 = vmatpush1.msra.mxu0 0.0
        %718 = vmatprep.subr.mxu0 0.0
        %719 = vmatpush1.msra.mxu0 0.0
        %720 = vmatprep.subr.mxu0 0.0
        %721 = vmatpush1.msra.mxu0 0.0
        %722 = vmatprep.subr.mxu0 0.0
        %723 = vmatpush1.msra.mxu0 0.0
        %724 = vmatprep.subr.mxu0 0.0
        %725 = vmatpush1.msra.mxu0 0.0
        %726 = vmatprep.subr.mxu0 0.0
        %727 = vmatpush1.msra.mxu0 0.0
        %728 = vmatprep.subr.mxu0 0.0
        %729 = vmatpush1.msra.mxu0 0.0
        %730 = vmatprep.subr.mxu0 0.0
        %731 = vmatpush1.msra.mxu0 0.0
        %732 = vmatprep.subr.mxu0 0.0
        %733 = vmatpush1.msra.mxu0 0.0
        %734 = vmatprep.subr.mxu0 0.0
        %735 = vmatpush1.msra.mxu0 0.0
        %736 = vmatprep.subr.mxu0 0.0
        %737 = vmatpush1.msra.mxu0 0.0
        %738 = vmatprep.subr.mxu0 0.0
        %739 = vmatpush1.msra.mxu0 0.0
        %740 = vmatprep.subr.mxu0 0.0
        %741 = vmatpush1.msra.mxu0 0.0
        %742 = vmatprep.subr.mxu0 0.0
        %743 = vmatpush1.msra.mxu0 0.0
        %744 = vmatprep.subr.mxu0 0.0
        %745 = vmatpush1.msra.mxu0 0.0
        %746 = vmatprep.subr.mxu0 0.0
        %747 = vmatpush1.msra.mxu0 0.0
        %748 = vmatprep.mubr.f32.mxu0 0.0
        %749 = vmatmul.mubr.f32.gmra.mrb[0].mxu0 %v679
        %v750 = vpop.f32.mrb[0].mxu0
        %v751 = vadd.f32 %v676, %v750
        %v752 = vpop.f32.mrb[0].mxu0
        %753 = vmatprep.mubr.f32.mxu0 0.0
        %754 = vmatmul.mubr.f32.gmra.mrb[0].mxu0 %v682
        %v755 = vpop.f32.mrb[0].mxu0
        %v756 = vadd.f32 %v676, %v755
        %v757 = vpop.f32.mrb[0].mxu0
        %758 = vdwg.mxu0
        %s759 = scalar_lea.vmem %s3, 32
        %v760 = vld [vmem:[%s759] sm:$0xff]
        %v761 = vld [vmem:[%s759 + $0x8] sm:$0xff]
        %v762 = vld [vmem:[%s759 + $0x10] sm:$0xff]
        %v763 = vld [vmem:[%s759 + $0x18] sm:$0xff]
        %s764 = scalar_lea.vmem %s6, 1
        %v765 = vld [vmem:[%s764] sm:$0x1]
        %v767 = vlaneseq
        %v768 = vshrl.u32 %v767, 7
        %v769 = vsub.s32 0, %v768
        %v770 = vrot.slane %v765, %v769
        %772 = vmatprep.subr.mxu0 0.0
        %773 = vmatpush1.msra.mxu0 %v760
        %774 = vmatprep.subr.mxu0 0.0
        %775 = vmatpush1.msra.mxu0 %v761
        %776 = vmatprep.subr.mxu0 0.0
        %777 = vmatpush1.msra.mxu0 %v762
        %778 = vmatprep.subr.mxu0 0.0
        %779 = vmatpush1.msra.mxu0 %v763
        %780 = vmatprep.subr.mxu0 0.0
        %781 = vmatpush1.msra.mxu0 0.0
        %782 = vmatprep.subr.mxu0 0.0
        %783 = vmatpush1.msra.mxu0 0.0
        %784 = vmatprep.subr.mxu0 0.0
        %785 = vmatpush1.msra.mxu0 0.0
        %786 = vmatprep.subr.mxu0 0.0
        %787 = vmatpush1.msra.mxu0 0.0
        %788 = vmatprep.subr.mxu0 0.0
        %789 = vmatpush1.msra.mxu0 0.0
        %790 = vmatprep.subr.mxu0 0.0
        %791 = vmatpush1.msra.mxu0 0.0
        %792 = vmatprep.subr.mxu0 0.0
        %793 = vmatpush1.msra.mxu0 0.0
        %794 = vmatprep.subr.mxu0 0.0
        %795 = vmatpush1.msra.mxu0 0.0
        %796 = vmatprep.subr.mxu0 0.0
        %797 = vmatpush1.msra.mxu0 0.0
        %798 = vmatprep.subr.mxu0 0.0
        %799 = vmatpush1.msra.mxu0 0.0
        %800 = vmatprep.subr.mxu0 0.0
        %801 = vmatpush1.msra.mxu0 0.0
        %802 = vmatprep.subr.mxu0 0.0
        %803 = vmatpush1.msra.mxu0 0.0
        %804 = vmatprep.subr.mxu0 0.0
        %805 = vmatpush1.msra.mxu0 0.0
        %806 = vmatprep.subr.mxu0 0.0
        %807 = vmatpush1.msra.mxu0 0.0
        %808 = vmatprep.subr.mxu0 0.0
        %809 = vmatpush1.msra.mxu0 0.0
        %810 = vmatprep.subr.mxu0 0.0
        %811 = vmatpush1.msra.mxu0 0.0
        %812 = vmatprep.subr.mxu0 0.0
        %813 = vmatpush1.msra.mxu0 0.0
        %814 = vmatprep.subr.mxu0 0.0
        %815 = vmatpush1.msra.mxu0 0.0
        %816 = vmatprep.subr.mxu0 0.0
        %817 = vmatpush1.msra.mxu0 0.0
        %818 = vmatprep.subr.mxu0 0.0
        %819 = vmatpush1.msra.mxu0 0.0
        %820 = vmatprep.subr.mxu0 0.0
        %821 = vmatpush1.msra.mxu0 0.0
        %822 = vmatprep.subr.mxu0 0.0
        %823 = vmatpush1.msra.mxu0 0.0
        %824 = vmatprep.subr.mxu0 0.0
        %825 = vmatpush1.msra.mxu0 0.0
        %826 = vmatprep.subr.mxu0 0.0
        %827 = vmatpush1.msra.mxu0 0.0
        %828 = vmatprep.subr.mxu0 0.0
        %829 = vmatpush1.msra.mxu0 0.0
        %830 = vmatprep.subr.mxu0 0.0
        %831 = vmatpush1.msra.mxu0 0.0
        %832 = vmatprep.subr.mxu0 0.0
        %833 = vmatpush1.msra.mxu0 0.0
        %834 = vmatprep.subr.mxu0 0.0
        %835 = vmatpush1.msra.mxu0 0.0
        %836 = vmatprep.mubr.f32.mxu0 0.0
        %837 = vmatmul.mubr.f32.gmra.mrb[0].mxu0 %v478
        %v838 = vpop.f32.mrb[0].mxu0
        %v839 = vadd.f32 %v770, %v838
        %v840 = vpop.f32.mrb[0].mxu0
        %841 = vmatprep.mubr.f32.mxu0 0.0
        %842 = vmatmul.mubr.f32.gmra.mrb[0].mxu0 %v481
        %v843 = vpop.f32.mrb[0].mxu0
        %v844 = vadd.f32 %v770, %v843
        %v845 = vpop.f32.mrb[0].mxu0
        %846 = vdwg.mxu0
        %s847 = scalar_lea.vmem %s4, 96
        %v848 = vld [vmem:[%s847] sm:$0xff]
        %v849 = vld [vmem:[%s847 + $0x8] sm:$0xff]
        %v850 = vld [vmem:[%s847 + $0x10] sm:$0xff]
        %v851 = vld [vmem:[%s847 + $0x18] sm:$0xff]
        %v852 = vld [vmem:[%s847 + $0x20] sm:$0xff]
        %v853 = vld [vmem:[%s847 + $0x28] sm:$0xff]
        %v854 = vld [vmem:[%s847 + $0x30] sm:$0xff]
        %v855 = vld [vmem:[%s847 + $0x38] sm:$0xff]
        %v856 = vld [vmem:[%s847 + $0x40] sm:$0xff]
        %v857 = vld [vmem:[%s847 + $0x48] sm:$0xff]
        %v858 = vld [vmem:[%s847 + $0x50] sm:$0xff]
        %v859 = vld [vmem:[%s847 + $0x58] sm:$0xff]
        %s860 = scalar_lea.vmem %s7, 1
        %v861 = vld [vmem:[%s860] sm:$0x1]
        %v863 = vlaneseq
        %v864 = vshrl.u32 %v863, 7
        %v865 = vsub.s32 0, %v864
        %v866 = vrot.slane %v861, %v865
        %868 = vmatprep.subr.mxu0 0.0
        %869 = vmatpush1.msra.mxu0 %v848
        %870 = vmatprep.subr.mxu0 0.0
        %871 = vmatpush1.msra.mxu0 %v849
        %872 = vmatprep.subr.mxu0 0.0
        %873 = vmatpush1.msra.mxu0 %v850
        %874 = vmatprep.subr.mxu0 0.0
        %875 = vmatpush1.msra.mxu0 %v851
        %876 = vmatprep.subr.mxu0 0.0
        %877 = vmatpush1.msra.mxu0 %v852
        %878 = vmatprep.subr.mxu0 0.0
        %879 = vmatpush1.msra.mxu0 %v853
        %880 = vmatprep.subr.mxu0 0.0
        %881 = vmatpush1.msra.mxu0 %v854
        %882 = vmatprep.subr.mxu0 0.0
        %883 = vmatpush1.msra.mxu0 %v855
        %884 = vmatprep.subr.mxu0 0.0
        %885 = vmatpush1.msra.mxu0 %v856
        %886 = vmatprep.subr.mxu0 0.0
        %887 = vmatpush1.msra.mxu0 %v857
        %888 = vmatprep.subr.mxu0 0.0
        %889 = vmatpush1.msra.mxu0 %v858
        %890 = vmatprep.subr.mxu0 0.0
        %891 = vmatpush1.msra.mxu0 %v859
        %892 = vmatprep.subr.mxu0 0.0
        %893 = vmatpush1.msra.mxu0 0.0
        %894 = vmatprep.subr.mxu0 0.0
        %895 = vmatpush1.msra.mxu0 0.0
        %896 = vmatprep.subr.mxu0 0.0
        %897 = vmatpush1.msra.mxu0 0.0
        %898 = vmatprep.subr.mxu0 0.0
        %899 = vmatpush1.msra.mxu0 0.0
        %900 = vmatprep.subr.mxu0 0.0
        %901 = vmatpush1.msra.mxu0 0.0
        %902 = vmatprep.subr.mxu0 0.0
        %903 = vmatpush1.msra.mxu0 0.0
        %904 = vmatprep.subr.mxu0 0.0
        %905 = vmatpush1.msra.mxu0 0.0
        %906 = vmatprep.subr.mxu0 0.0
        %907 = vmatpush1.msra.mxu0 0.0
        %908 = vmatprep.subr.mxu0 0.0
        %909 = vmatpush1.msra.mxu0 0.0
        %910 = vmatprep.subr.mxu0 0.0
        %911 = vmatpush1.msra.mxu0 0.0
        %912 = vmatprep.subr.mxu0 0.0
        %913 = vmatpush1.msra.mxu0 0.0
        %914 = vmatprep.subr.mxu0 0.0
        %915 = vmatpush1.msra.mxu0 0.0
        %916 = vmatprep.subr.mxu0 0.0
        %917 = vmatpush1.msra.mxu0 0.0
        %918 = vmatprep.subr.mxu0 0.0
        %919 = vmatpush1.msra.mxu0 0.0
        %920 = vmatprep.subr.mxu0 0.0
        %921 = vmatpush1.msra.mxu0 0.0
        %922 = vmatprep.subr.mxu0 0.0
        %923 = vmatpush1.msra.mxu0 0.0
        %924 = vmatprep.subr.mxu0 0.0
        %925 = vmatpush1.msra.mxu0 0.0
        %926 = vmatprep.subr.mxu0 0.0
        %927 = vmatpush1.msra.mxu0 0.0
        %928 = vmatprep.subr.mxu0 0.0
        %929 = vmatpush1.msra.mxu0 0.0
        %930 = vmatprep.subr.mxu0 0.0
        %931 = vmatpush1.msra.mxu0 0.0
        %932 = vmatprep.mubr.f32.mxu0 0.0
        %933 = vmatmul.mubr.f32.gmra.mrb[0].mxu0 %v579
        %v934 = vpop.f32.mrb[0].mxu0
        %v935 = vadd.f32 %v866, %v934
        %v936 = vpop.f32.mrb[0].mxu0
        %937 = vmatprep.mubr.f32.mxu0 0.0
        %938 = vmatmul.mubr.f32.gmra.mrb[0].mxu0 %v582
        %v939 = vpop.f32.mrb[0].mxu0
        %v940 = vadd.f32 %v866, %v939
        %v941 = vpop.f32.mrb[0].mxu0
        %942 = vdwg.mxu0
        %s943 = scalar_lea.vmem %s5, 96
        %v944 = vld [vmem:[%s943] sm:$0xff]
        %v945 = vld [vmem:[%s943 + $0x8] sm:$0xff]
        %v946 = vld [vmem:[%s943 + $0x10] sm:$0xff]
        %v947 = vld [vmem:[%s943 + $0x18] sm:$0xff]
        %v948 = vld [vmem:[%s943 + $0x20] sm:$0xff]
        %v949 = vld [vmem:[%s943 + $0x28] sm:$0xff]
        %v950 = vld [vmem:[%s943 + $0x30] sm:$0xff]
        %v951 = vld [vmem:[%s943 + $0x38] sm:$0xff]
        %v952 = vld [vmem:[%s943 + $0x40] sm:$0xff]
        %v953 = vld [vmem:[%s943 + $0x48] sm:$0xff]
        %v954 = vld [vmem:[%s943 + $0x50] sm:$0xff]
        %v955 = vld [vmem:[%s943 + $0x58] sm:$0xff]
        %s956 = scalar_lea.vmem %s8, 1
        %v957 = vld [vmem:[%s956] sm:$0x1]
        %v959 = vlaneseq
        %v960 = vshrl.u32 %v959, 7
        %v961 = vsub.s32 0, %v960
        %v962 = vrot.slane %v957, %v961
        %964 = vmatprep.subr.mxu0 0.0
        %965 = vmatpush1.msra.mxu0 %v944
        %966 = vmatprep.subr.mxu0 0.0
        %967 = vmatpush1.msra.mxu0 %v945
        %968 = vmatprep.subr.mxu0 0.0
        %969 = vmatpush1.msra.mxu0 %v946
        %970 = vmatprep.subr.mxu0 0.0
        %971 = vmatpush1.msra.mxu0 %v947
        %972 = vmatprep.subr.mxu0 0.0
        %973 = vmatpush1.msra.mxu0 %v948
        %974 = vmatprep.subr.mxu0 0.0
        %975 = vmatpush1.msra.mxu0 %v949
        %976 = vmatprep.subr.mxu0 0.0
        %977 = vmatpush1.msra.mxu0 %v950
        %978 = vmatprep.subr.mxu0 0.0
        %979 = vmatpush1.msra.mxu0 %v951
        %980 = vmatprep.subr.mxu0 0.0
        %981 = vmatpush1.msra.mxu0 %v952
        %982 = vmatprep.subr.mxu0 0.0
        %983 = vmatpush1.msra.mxu0 %v953
        %984 = vmatprep.subr.mxu0 0.0
        %985 = vmatpush1.msra.mxu0 %v954
        %986 = vmatprep.subr.mxu0 0.0
        %987 = vmatpush1.msra.mxu0 %v955
        %988 = vmatprep.subr.mxu0 0.0
        %989 = vmatpush1.msra.mxu0 0.0
        %990 = vmatprep.subr.mxu0 0.0
        %991 = vmatpush1.msra.mxu0 0.0
        %992 = vmatprep.subr.mxu0 0.0
        %993 = vmatpush1.msra.mxu0 0.0
        %994 = vmatprep.subr.mxu0 0.0
        %995 = vmatpush1.msra.mxu0 0.0
        %996 = vmatprep.subr.mxu0 0.0
        %997 = vmatpush1.msra.mxu0 0.0
        %998 = vmatprep.subr.mxu0 0.0
        %999 = vmatpush1.msra.mxu0 0.0
        %1000 = vmatprep.subr.mxu0 0.0
        %1001 = vmatpush1.msra.mxu0 0.0
        %1002 = vmatprep.subr.mxu0 0.0
        %1003 = vmatpush1.msra.mxu0 0.0
        %1004 = vmatprep.subr.mxu0 0.0
        %1005 = vmatpush1.msra.mxu0 0.0
        %1006 = vmatprep.subr.mxu0 0.0
        %1007 = vmatpush1.msra.mxu0 0.0
        %1008 = vmatprep.subr.mxu0 0.0
        %1009 = vmatpush1.msra.mxu0 0.0
        %1010 = vmatprep.subr.mxu0 0.0
        %1011 = vmatpush1.msra.mxu0 0.0
        %1012 = vmatprep.subr.mxu0 0.0
        %1013 = vmatpush1.msra.mxu0 0.0
        %1014 = vmatprep.subr.mxu0 0.0
        %1015 = vmatpush1.msra.mxu0 0.0
        %1016 = vmatprep.subr.mxu0 0.0
        %1017 = vmatpush1.msra.mxu0 0.0
        %1018 = vmatprep.subr.mxu0 0.0
        %1019 = vmatpush1.msra.mxu0 0.0
        %1020 = vmatprep.subr.mxu0 0.0
        %1021 = vmatpush1.msra.mxu0 0.0
        %1022 = vmatprep.subr.mxu0 0.0
        %1023 = vmatpush1.msra.mxu0 0.0
        %1024 = vmatprep.subr.mxu0 0.0
        %1025 = vmatpush1.msra.mxu0 0.0
        %1026 = vmatprep.subr.mxu0 0.0
        %1027 = vmatpush1.msra.mxu0 0.0
        %1028 = vmatprep.mubr.f32.mxu0 0.0
        %1029 = vmatmul.mubr.f32.gmra.mrb[0].mxu0 %v679
        %v1030 = vpop.f32.mrb[0].mxu0
        %v1031 = vadd.f32 %v962, %v1030
        %v1032 = vpop.f32.mrb[0].mxu0
        %1033 = vmatprep.mubr.f32.mxu0 0.0
        %1034 = vmatmul.mubr.f32.gmra.mrb[0].mxu0 %v682
        %v1035 = vpop.f32.mrb[0].mxu0
        %v1036 = vadd.f32 %v962, %v1035
        %v1037 = vpop.f32.mrb[0].mxu0
        %1038 = vdwg.mxu0
        %s1039 = scalar_lea.vmem %s3, 64
        %v1040 = vld [vmem:[%s1039] sm:$0xff]
        %v1041 = vld [vmem:[%s1039 + $0x8] sm:$0xff]
        %v1042 = vld [vmem:[%s1039 + $0x10] sm:$0xff]
        %v1043 = vld [vmem:[%s1039 + $0x18] sm:$0xff]
        %s1044 = scalar_lea.vmem %s6, 2
        %v1045 = vld [vmem:[%s1044] sm:$0x1]
        %v1047 = vlaneseq
        %v1048 = vshrl.u32 %v1047, 7
        %v1049 = vsub.s32 0, %v1048
        %v1050 = vrot.slane %v1045, %v1049
        %1052 = vmatprep.subr.mxu0 0.0
        %1053 = vmatpush1.msra.mxu0 %v1040
        %1054 = vmatprep.subr.mxu0 0.0
        %1055 = vmatpush1.msra.mxu0 %v1041
        %1056 = vmatprep.subr.mxu0 0.0
        %1057 = vmatpush1.msra.mxu0 %v1042
        %1058 = vmatprep.subr.mxu0 0.0
        %1059 = vmatpush1.msra.mxu0 %v1043
        %1060 = vmatprep.subr.mxu0 0.0
        %1061 = vmatpush1.msra.mxu0 0.0
        %1062 = vmatprep.subr.mxu0 0.0
        %1063 = vmatpush1.msra.mxu0 0.0
        %1064 = vmatprep.subr.mxu0 0.0
        %1065 = vmatpush1.msra.mxu0 0.0
        %1066 = vmatprep.subr.mxu0 0.0
        %1067 = vmatpush1.msra.mxu0 0.0
        %1068 = vmatprep.subr.mxu0 0.0
        %1069 = vmatpush1.msra.mxu0 0.0
        %1070 = vmatprep.subr.mxu0 0.0
        %1071 = vmatpush1.msra.mxu0 0.0
        %1072 = vmatprep.subr.mxu0 0.0
        %1073 = vmatpush1.msra.mxu0 0.0
        %1074 = vmatprep.subr.mxu0 0.0
        %1075 = vmatpush1.msra.mxu0 0.0
        %1076 = vmatprep.subr.mxu0 0.0
        %1077 = vmatpush1.msra.mxu0 0.0
        %1078 = vmatprep.subr.mxu0 0.0
        %1079 = vmatpush1.msra.mxu0 0.0
        %1080 = vmatprep.subr.mxu0 0.0
        %1081 = vmatpush1.msra.mxu0 0.0
        %1082 = vmatprep.subr.mxu0 0.0
        %1083 = vmatpush1.msra.mxu0 0.0
        %1084 = vmatprep.subr.mxu0 0.0
        %1085 = vmatpush1.msra.mxu0 0.0
        %1086 = vmatprep.subr.mxu0 0.0
        %1087 = vmatpush1.msra.mxu0 0.0
        %1088 = vmatprep.subr.mxu0 0.0
        %1089 = vmatpush1.msra.mxu0 0.0
        %1090 = vmatprep.subr.mxu0 0.0
        %1091 = vmatpush1.msra.mxu0 0.0
        %1092 = vmatprep.subr.mxu0 0.0
        %1093 = vmatpush1.msra.mxu0 0.0
        %1094 = vmatprep.subr.mxu0 0.0
        %1095 = vmatpush1.msra.mxu0 0.0
        %1096 = vmatprep.subr.mxu0 0.0
        %1097 = vmatpush1.msra.mxu0 0.0
        %1098 = vmatprep.subr.mxu0 0.0
        %1099 = vmatpush1.msra.mxu0 0.0
        %1100 = vmatprep.subr.mxu0 0.0
        %1101 = vmatpush1.msra.mxu0 0.0
        %1102 = vmatprep.subr.mxu0 0.0
        %1103 = vmatpush1.msra.mxu0 0.0
        %1104 = vmatprep.subr.mxu0 0.0
        %1105 = vmatpush1.msra.mxu0 0.0
        %1106 = vmatprep.subr.mxu0 0.0
        %1107 = vmatpush1.msra.mxu0 0.0
        %1108 = vmatprep.subr.mxu0 0.0
        %1109 = vmatpush1.msra.mxu0 0.0
        %1110 = vmatprep.subr.mxu0 0.0
        %1111 = vmatpush1.msra.mxu0 0.0
        %1112 = vmatprep.subr.mxu0 0.0
        %1113 = vmatpush1.msra.mxu0 0.0
        %1114 = vmatprep.subr.mxu0 0.0
        %1115 = vmatpush1.msra.mxu0 0.0
        %1116 = vmatprep.mubr.f32.mxu0 0.0
        %1117 = vmatmul.mubr.f32.gmra.mrb[0].mxu0 %v478
        %v1118 = vpop.f32.mrb[0].mxu0
        %v1119 = vadd.f32 %v1050, %v1118
        %v1120 = vpop.f32.mrb[0].mxu0
        %1121 = vmatprep.mubr.f32.mxu0 0.0
        %1122 = vmatmul.mubr.f32.gmra.mrb[0].mxu0 %v481
        %v1123 = vpop.f32.mrb[0].mxu0
        %v1124 = vadd.f32 %v1050, %v1123
        %v1125 = vpop.f32.mrb[0].mxu0
        %1126 = vdwg.mxu0
        %s1127 = scalar_lea.vmem %s4, 192
        %v1128 = vld [vmem:[%s1127] sm:$0xff]
        %v1129 = vld [vmem:[%s1127 + $0x8] sm:$0xff]
        %v1130 = vld [vmem:[%s1127 + $0x10] sm:$0xff]
        %v1131 = vld [vmem:[%s1127 + $0x18] sm:$0xff]
        %v1132 = vld [vmem:[%s1127 + $0x20] sm:$0xff]
        %v1133 = vld [vmem:[%s1127 + $0x28] sm:$0xff]
        %v1134 = vld [vmem:[%s1127 + $0x30] sm:$0xff]
        %v1135 = vld [vmem:[%s1127 + $0x38] sm:$0xff]
        %v1136 = vld [vmem:[%s1127 + $0x40] sm:$0xff]
        %v1137 = vld [vmem:[%s1127 + $0x48] sm:$0xff]
        %v1138 = vld [vmem:[%s1127 + $0x50] sm:$0xff]
        %v1139 = vld [vmem:[%s1127 + $0x58] sm:$0xff]
        %s1140 = scalar_lea.vmem %s7, 2
        %v1141 = vld [vmem:[%s1140] sm:$0x1]
        %v1143 = vlaneseq
        %v1144 = vshrl.u32 %v1143, 7
        %v1145 = vsub.s32 0, %v1144
        %v1146 = vrot.slane %v1141, %v1145
        %1148 = vmatprep.subr.mxu0 0.0
        %1149 = vmatpush1.msra.mxu0 %v1128
        %1150 = vmatprep.subr.mxu0 0.0
        %1151 = vmatpush1.msra.mxu0 %v1129
        %1152 = vmatprep.subr.mxu0 0.0
        %1153 = vmatpush1.msra.mxu0 %v1130
        %1154 = vmatprep.subr.mxu0 0.0
        %1155 = vmatpush1.msra.mxu0 %v1131
        %1156 = vmatprep.subr.mxu0 0.0
        %1157 = vmatpush1.msra.mxu0 %v1132
        %1158 = vmatprep.subr.mxu0 0.0
        %1159 = vmatpush1.msra.mxu0 %v1133
        %1160 = vmatprep.subr.mxu0 0.0
        %1161 = vmatpush1.msra.mxu0 %v1134
        %1162 = vmatprep.subr.mxu0 0.0
        %1163 = vmatpush1.msra.mxu0 %v1135
        %1164 = vmatprep.subr.mxu0 0.0
        %1165 = vmatpush1.msra.mxu0 %v1136
        %1166 = vmatprep.subr.mxu0 0.0
        %1167 = vmatpush1.msra.mxu0 %v1137
        %1168 = vmatprep.subr.mxu0 0.0
        %1169 = vmatpush1.msra.mxu0 %v1138
        %1170 = vmatprep.subr.mxu0 0.0
        %1171 = vmatpush1.msra.mxu0 %v1139
        %1172 = vmatprep.subr.mxu0 0.0
        %1173 = vmatpush1.msra.mxu0 0.0
        %1174 = vmatprep.subr.mxu0 0.0
        %1175 = vmatpush1.msra.mxu0 0.0
        %1176 = vmatprep.subr.mxu0 0.0
        %1177 = vmatpush1.msra.mxu0 0.0
        %1178 = vmatprep.subr.mxu0 0.0
        %1179 = vmatpush1.msra.mxu0 0.0
        %1180 = vmatprep.subr.mxu0 0.0
        %1181 = vmatpush1.msra.mxu0 0.0
        %1182 = vmatprep.subr.mxu0 0.0
        %1183 = vmatpush1.msra.mxu0 0.0
        %1184 = vmatprep.subr.mxu0 0.0
        %1185 = vmatpush1.msra.mxu0 0.0
        %1186 = vmatprep.subr.mxu0 0.0
        %1187 = vmatpush1.msra.mxu0 0.0
        %1188 = vmatprep.subr.mxu0 0.0
        %1189 = vmatpush1.msra.mxu0 0.0
        %1190 = vmatprep.subr.mxu0 0.0
        %1191 = vmatpush1.msra.mxu0 0.0
        %1192 = vmatprep.subr.mxu0 0.0
        %1193 = vmatpush1.msra.mxu0 0.0
        %1194 = vmatprep.subr.mxu0 0.0
        %1195 = vmatpush1.msra.mxu0 0.0
        %1196 = vmatprep.subr.mxu0 0.0
        %1197 = vmatpush1.msra.mxu0 0.0
        %1198 = vmatprep.subr.mxu0 0.0
        %1199 = vmatpush1.msra.mxu0 0.0
        %1200 = vmatprep.subr.mxu0 0.0
        %1201 = vmatpush1.msra.mxu0 0.0
        %1202 = vmatprep.subr.mxu0 0.0
        %1203 = vmatpush1.msra.mxu0 0.0
        %1204 = vmatprep.subr.mxu0 0.0
        %1205 = vmatpush1.msra.mxu0 0.0
        %1206 = vmatprep.subr.mxu0 0.0
        %1207 = vmatpush1.msra.mxu0 0.0
        %1208 = vmatprep.subr.mxu0 0.0
        %1209 = vmatpush1.msra.mxu0 0.0
        %1210 = vmatprep.subr.mxu0 0.0
        %1211 = vmatpush1.msra.mxu0 0.0
        %1212 = vmatprep.mubr.f32.mxu0 0.0
        %1213 = vmatmul.mubr.f32.gmra.mrb[0].mxu0 %v579
        %v1214 = vpop.f32.mrb[0].mxu0
        %v1215 = vadd.f32 %v1146, %v1214
        %v1216 = vpop.f32.mrb[0].mxu0
        %1217 = vmatprep.mubr.f32.mxu0 0.0
        %1218 = vmatmul.mubr.f32.gmra.mrb[0].mxu0 %v582
        %v1219 = vpop.f32.mrb[0].mxu0
        %v1220 = vadd.f32 %v1146, %v1219
        %v1221 = vpop.f32.mrb[0].mxu0
        %1222 = vdwg.mxu0
        %s1223 = scalar_lea.vmem %s5, 192
        %v1224 = vld [vmem:[%s1223] sm:$0xff]
        %v1225 = vld [vmem:[%s1223 + $0x8] sm:$0xff]
        %v1226 = vld [vmem:[%s1223 + $0x10] sm:$0xff]
        %v1227 = vld [vmem:[%s1223 + $0x18] sm:$0xff]
        %v1228 = vld [vmem:[%s1223 + $0x20] sm:$0xff]
        %v1229 = vld [vmem:[%s1223 + $0x28] sm:$0xff]
        %v1230 = vld [vmem:[%s1223 + $0x30] sm:$0xff]
        %v1231 = vld [vmem:[%s1223 + $0x38] sm:$0xff]
        %v1232 = vld [vmem:[%s1223 + $0x40] sm:$0xff]
        %v1233 = vld [vmem:[%s1223 + $0x48] sm:$0xff]
        %v1234 = vld [vmem:[%s1223 + $0x50] sm:$0xff]
        %v1235 = vld [vmem:[%s1223 + $0x58] sm:$0xff]
        %s1236 = scalar_lea.vmem %s8, 2
        %v1237 = vld [vmem:[%s1236] sm:$0x1]
        %v1239 = vlaneseq
        %v1240 = vshrl.u32 %v1239, 7
        %v1241 = vsub.s32 0, %v1240
        %v1242 = vrot.slane %v1237, %v1241
        %1244 = vmatprep.subr.mxu0 0.0
        %1245 = vmatpush1.msra.mxu0 %v1224
        %1246 = vmatprep.subr.mxu0 0.0
        %1247 = vmatpush1.msra.mxu0 %v1225
        %1248 = vmatprep.subr.mxu0 0.0
        %1249 = vmatpush1.msra.mxu0 %v1226
        %1250 = vmatprep.subr.mxu0 0.0
        %1251 = vmatpush1.msra.mxu0 %v1227
        %1252 = vmatprep.subr.mxu0 0.0
        %1253 = vmatpush1.msra.mxu0 %v1228
        %1254 = vmatprep.subr.mxu0 0.0
        %1255 = vmatpush1.msra.mxu0 %v1229
        %1256 = vmatprep.subr.mxu0 0.0
        %1257 = vmatpush1.msra.mxu0 %v1230
        %1258 = vmatprep.subr.mxu0 0.0
        %1259 = vmatpush1.msra.mxu0 %v1231
        %1260 = vmatprep.subr.mxu0 0.0
        %1261 = vmatpush1.msra.mxu0 %v1232
        %1262 = vmatprep.subr.mxu0 0.0
        %1263 = vmatpush1.msra.mxu0 %v1233
        %1264 = vmatprep.subr.mxu0 0.0
        %1265 = vmatpush1.msra.mxu0 %v1234
        %1266 = vmatprep.subr.mxu0 0.0
        %1267 = vmatpush1.msra.mxu0 %v1235
        %1268 = vmatprep.subr.mxu0 0.0
        %1269 = vmatpush1.msra.mxu0 0.0
        %1270 = vmatprep.subr.mxu0 0.0
        %1271 = vmatpush1.msra.mxu0 0.0
        %1272 = vmatprep.subr.mxu0 0.0
        %1273 = vmatpush1.msra.mxu0 0.0
        %1274 = vmatprep.subr.mxu0 0.0
        %1275 = vmatpush1.msra.mxu0 0.0
        %1276 = vmatprep.subr.mxu0 0.0
        %1277 = vmatpush1.msra.mxu0 0.0
        %1278 = vmatprep.subr.mxu0 0.0
        %1279 = vmatpush1.msra.mxu0 0.0
        %1280 = vmatprep.subr.mxu0 0.0
        %1281 = vmatpush1.msra.mxu0 0.0
        %1282 = vmatprep.subr.mxu0 0.0
        %1283 = vmatpush1.msra.mxu0 0.0
        %1284 = vmatprep.subr.mxu0 0.0
        %1285 = vmatpush1.msra.mxu0 0.0
        %1286 = vmatprep.subr.mxu0 0.0
        %1287 = vmatpush1.msra.mxu0 0.0
        %1288 = vmatprep.subr.mxu0 0.0
        %1289 = vmatpush1.msra.mxu0 0.0
        %1290 = vmatprep.subr.mxu0 0.0
        %1291 = vmatpush1.msra.mxu0 0.0
        %1292 = vmatprep.subr.mxu0 0.0
        %1293 = vmatpush1.msra.mxu0 0.0
        %1294 = vmatprep.subr.mxu0 0.0
        %1295 = vmatpush1.msra.mxu0 0.0
        %1296 = vmatprep.subr.mxu0 0.0
        %1297 = vmatpush1.msra.mxu0 0.0
        %1298 = vmatprep.subr.mxu0 0.0
        %1299 = vmatpush1.msra.mxu0 0.0
        %1300 = vmatprep.subr.mxu0 0.0
        %1301 = vmatpush1.msra.mxu0 0.0
        %1302 = vmatprep.subr.mxu0 0.0
        %1303 = vmatpush1.msra.mxu0 0.0
        %1304 = vmatprep.subr.mxu0 0.0
        %1305 = vmatpush1.msra.mxu0 0.0
        %1306 = vmatprep.subr.mxu0 0.0
        %1307 = vmatpush1.msra.mxu0 0.0
        %1308 = vmatprep.mubr.f32.mxu0 0.0
        %1309 = vmatmul.mubr.f32.gmra.mrb[0].mxu0 %v679
        %v1310 = vpop.f32.mrb[0].mxu0
        %v1311 = vadd.f32 %v1242, %v1310
        %v1312 = vpop.f32.mrb[0].mxu0
        %1313 = vmatprep.mubr.f32.mxu0 0.0
        %1314 = vmatmul.mubr.f32.gmra.mrb[0].mxu0 %v682
        %v1315 = vpop.f32.mrb[0].mxu0
        %v1316 = vadd.f32 %v1242, %v1315
        %v1317 = vpop.f32.mrb[0].mxu0
        %1318 = vdwg.mxu0
        %s1319 = scalar_lea.vmem %s3, 96
        %v1320 = vld [vmem:[%s1319] sm:$0xff]
        %v1321 = vld [vmem:[%s1319 + $0x8] sm:$0xff]
        %v1322 = vld [vmem:[%s1319 + $0x10] sm:$0xff]
        %v1323 = vld [vmem:[%s1319 + $0x18] sm:$0xff]
        %s1324 = scalar_lea.vmem %s6, 3
        %v1325 = vld [vmem:[%s1324] sm:$0x1]
        %v1327 = vlaneseq
        %v1328 = vshrl.u32 %v1327, 7
        %v1329 = vsub.s32 0, %v1328
        %v1330 = vrot.slane %v1325, %v1329
        %1332 = vmatprep.subr.mxu0 0.0
        %1333 = vmatpush1.msra.mxu0 %v1320
        %1334 = vmatprep.subr.mxu0 0.0
        %1335 = vmatpush1.msra.mxu0 %v1321
        %1336 = vmatprep.subr.mxu0 0.0
        %1337 = vmatpush1.msra.mxu0 %v1322
        %1338 = vmatprep.subr.mxu0 0.0
        %1339 = vmatpush1.msra.mxu0 %v1323
        %1340 = vmatprep.subr.mxu0 0.0
        %1341 = vmatpush1.msra.mxu0 0.0
        %1342 = vmatprep.subr.mxu0 0.0
        %1343 = vmatpush1.msra.mxu0 0.0
        %1344 = vmatprep.subr.mxu0 0.0
        %1345 = vmatpush1.msra.mxu0 0.0
        %1346 = vmatprep.subr.mxu0 0.0
        %1347 = vmatpush1.msra.mxu0 0.0
        %1348 = vmatprep.subr.mxu0 0.0
        %1349 = vmatpush1.msra.mxu0 0.0
        %1350 = vmatprep.subr.mxu0 0.0
        %1351 = vmatpush1.msra.mxu0 0.0
        %1352 = vmatprep.subr.mxu0 0.0
        %1353 = vmatpush1.msra.mxu0 0.0
        %1354 = vmatprep.subr.mxu0 0.0
        %1355 = vmatpush1.msra.mxu0 0.0
        %1356 = vmatprep.subr.mxu0 0.0
        %1357 = vmatpush1.msra.mxu0 0.0
        %1358 = vmatprep.subr.mxu0 0.0
        %1359 = vmatpush1.msra.mxu0 0.0
        %1360 = vmatprep.subr.mxu0 0.0
        %1361 = vmatpush1.msra.mxu0 0.0
        %1362 = vmatprep.subr.mxu0 0.0
        %1363 = vmatpush1.msra.mxu0 0.0
        %1364 = vmatprep.subr.mxu0 0.0
        %1365 = vmatpush1.msra.mxu0 0.0
        %1366 = vmatprep.subr.mxu0 0.0
        %1367 = vmatpush1.msra.mxu0 0.0
        %1368 = vmatprep.subr.mxu0 0.0
        %1369 = vmatpush1.msra.mxu0 0.0
        %1370 = vmatprep.subr.mxu0 0.0
        %1371 = vmatpush1.msra.mxu0 0.0
        %1372 = vmatprep.subr.mxu0 0.0
        %1373 = vmatpush1.msra.mxu0 0.0
        %1374 = vmatprep.subr.mxu0 0.0
        %1375 = vmatpush1.msra.mxu0 0.0
        %1376 = vmatprep.subr.mxu0 0.0
        %1377 = vmatpush1.msra.mxu0 0.0
        %1378 = vmatprep.subr.mxu0 0.0
        %1379 = vmatpush1.msra.mxu0 0.0
        %1380 = vmatprep.subr.mxu0 0.0
        %1381 = vmatpush1.msra.mxu0 0.0
        %1382 = vmatprep.subr.mxu0 0.0
        %1383 = vmatpush1.msra.mxu0 0.0
        %1384 = vmatprep.subr.mxu0 0.0
        %1385 = vmatpush1.msra.mxu0 0.0
        %1386 = vmatprep.subr.mxu0 0.0
        %1387 = vmatpush1.msra.mxu0 0.0
        %1388 = vmatprep.subr.mxu0 0.0
        %1389 = vmatpush1.msra.mxu0 0.0
        %1390 = vmatprep.subr.mxu0 0.0
        %1391 = vmatpush1.msra.mxu0 0.0
        %1392 = vmatprep.subr.mxu0 0.0
        %1393 = vmatpush1.msra.mxu0 0.0
        %1394 = vmatprep.subr.mxu0 0.0
        %1395 = vmatpush1.msra.mxu0 0.0
        %1396 = vmatprep.mubr.f32.mxu0 0.0
        %1397 = vmatmul.mubr.f32.gmra.mrb[0].mxu0 %v478
        %v1398 = vpop.f32.mrb[0].mxu0
        %v1399 = vadd.f32 %v1330, %v1398
        %v1400 = vpop.f32.mrb[0].mxu0
        %1401 = vmatprep.mubr.f32.mxu0 0.0
        %1402 = vmatmul.mubr.f32.gmra.mrb[0].mxu0 %v481
        %v1403 = vpop.f32.mrb[0].mxu0
        %v1404 = vadd.f32 %v1330, %v1403
        %v1405 = vpop.f32.mrb[0].mxu0
        %1406 = vdwg.mxu0
        %s1407 = scalar_lea.vmem %s4, 288
        %v1408 = vld [vmem:[%s1407] sm:$0xff]
        %v1409 = vld [vmem:[%s1407 + $0x8] sm:$0xff]
        %v1410 = vld [vmem:[%s1407 + $0x10] sm:$0xff]
        %v1411 = vld [vmem:[%s1407 + $0x18] sm:$0xff]
        %v1412 = vld [vmem:[%s1407 + $0x20] sm:$0xff]
        %v1413 = vld [vmem:[%s1407 + $0x28] sm:$0xff]
        %v1414 = vld [vmem:[%s1407 + $0x30] sm:$0xff]
        %v1415 = vld [vmem:[%s1407 + $0x38] sm:$0xff]
        %v1416 = vld [vmem:[%s1407 + $0x40] sm:$0xff]
        %v1417 = vld [vmem:[%s1407 + $0x48] sm:$0xff]
        %v1418 = vld [vmem:[%s1407 + $0x50] sm:$0xff]
        %v1419 = vld [vmem:[%s1407 + $0x58] sm:$0xff]
        %s1420 = scalar_lea.vmem %s7, 3
        %v1421 = vld [vmem:[%s1420] sm:$0x1]
        %v1423 = vlaneseq
        %v1424 = vshrl.u32 %v1423, 7
        %v1425 = vsub.s32 0, %v1424
        %v1426 = vrot.slane %v1421, %v1425
        %1428 = vmatprep.subr.mxu0 0.0
        %1429 = vmatpush1.msra.mxu0 %v1408
        %1430 = vmatprep.subr.mxu0 0.0
        %1431 = vmatpush1.msra.mxu0 %v1409
        %1432 = vmatprep.subr.mxu0 0.0
        %1433 = vmatpush1.msra.mxu0 %v1410
        %1434 = vmatprep.subr.mxu0 0.0
        %1435 = vmatpush1.msra.mxu0 %v1411
        %1436 = vmatprep.subr.mxu0 0.0
        %1437 = vmatpush1.msra.mxu0 %v1412
        %1438 = vmatprep.subr.mxu0 0.0
        %1439 = vmatpush1.msra.mxu0 %v1413
        %1440 = vmatprep.subr.mxu0 0.0
        %1441 = vmatpush1.msra.mxu0 %v1414
        %1442 = vmatprep.subr.mxu0 0.0
        %1443 = vmatpush1.msra.mxu0 %v1415
        %1444 = vmatprep.subr.mxu0 0.0
        %1445 = vmatpush1.msra.mxu0 %v1416
        %1446 = vmatprep.subr.mxu0 0.0
        %1447 = vmatpush1.msra.mxu0 %v1417
        %1448 = vmatprep.subr.mxu0 0.0
        %1449 = vmatpush1.msra.mxu0 %v1418
        %1450 = vmatprep.subr.mxu0 0.0
        %1451 = vmatpush1.msra.mxu0 %v1419
        %1452 = vmatprep.subr.mxu0 0.0
        %1453 = vmatpush1.msra.mxu0 0.0
        %1454 = vmatprep.subr.mxu0 0.0
        %1455 = vmatpush1.msra.mxu0 0.0
        %1456 = vmatprep.subr.mxu0 0.0
        %1457 = vmatpush1.msra.mxu0 0.0
        %1458 = vmatprep.subr.mxu0 0.0
        %1459 = vmatpush1.msra.mxu0 0.0
        %1460 = vmatprep.subr.mxu0 0.0
        %1461 = vmatpush1.msra.mxu0 0.0
        %1462 = vmatprep.subr.mxu0 0.0
        %1463 = vmatpush1.msra.mxu0 0.0
        %1464 = vmatprep.subr.mxu0 0.0
        %1465 = vmatpush1.msra.mxu0 0.0
        %1466 = vmatprep.subr.mxu0 0.0
        %1467 = vmatpush1.msra.mxu0 0.0
        %1468 = vmatprep.subr.mxu0 0.0
        %1469 = vmatpush1.msra.mxu0 0.0
        %1470 = vmatprep.subr.mxu0 0.0
        %1471 = vmatpush1.msra.mxu0 0.0
        %1472 = vmatprep.subr.mxu0 0.0
        %1473 = vmatpush1.msra.mxu0 0.0
        %1474 = vmatprep.subr.mxu0 0.0
        %1475 = vmatpush1.msra.mxu0 0.0
        %1476 = vmatprep.subr.mxu0 0.0
        %1477 = vmatpush1.msra.mxu0 0.0
        %1478 = vmatprep.subr.mxu0 0.0
        %1479 = vmatpush1.msra.mxu0 0.0
        %1480 = vmatprep.subr.mxu0 0.0
        %1481 = vmatpush1.msra.mxu0 0.0
        %1482 = vmatprep.subr.mxu0 0.0
        %1483 = vmatpush1.msra.mxu0 0.0
        %1484 = vmatprep.subr.mxu0 0.0
        %1485 = vmatpush1.msra.mxu0 0.0
        %1486 = vmatprep.subr.mxu0 0.0
        %1487 = vmatpush1.msra.mxu0 0.0
        %1488 = vmatprep.subr.mxu0 0.0
        %1489 = vmatpush1.msra.mxu0 0.0
        %1490 = vmatprep.subr.mxu0 0.0
        %1491 = vmatpush1.msra.mxu0 0.0
        %1492 = vmatprep.mubr.f32.mxu0 0.0
        %1493 = vmatmul.mubr.f32.gmra.mrb[0].mxu0 %v579
        %v1494 = vpop.f32.mrb[0].mxu0
        %v1495 = vadd.f32 %v1426, %v1494
        %v1496 = vpop.f32.mrb[0].mxu0
        %1497 = vmatprep.mubr.f32.mxu0 0.0
        %1498 = vmatmul.mubr.f32.gmra.mrb[0].mxu0 %v582
        %v1499 = vpop.f32.mrb[0].mxu0
        %v1500 = vadd.f32 %v1426, %v1499
        %v1501 = vpop.f32.mrb[0].mxu0
        %1502 = vdwg.mxu0
        %s1503 = scalar_lea.vmem %s5, 288
        %v1504 = vld [vmem:[%s1503] sm:$0xff]
        %v1505 = vld [vmem:[%s1503 + $0x8] sm:$0xff]
        %v1506 = vld [vmem:[%s1503 + $0x10] sm:$0xff]
        %v1507 = vld [vmem:[%s1503 + $0x18] sm:$0xff]
        %v1508 = vld [vmem:[%s1503 + $0x20] sm:$0xff]
        %v1509 = vld [vmem:[%s1503 + $0x28] sm:$0xff]
        %v1510 = vld [vmem:[%s1503 + $0x30] sm:$0xff]
        %v1511 = vld [vmem:[%s1503 + $0x38] sm:$0xff]
        %v1512 = vld [vmem:[%s1503 + $0x40] sm:$0xff]
        %v1513 = vld [vmem:[%s1503 + $0x48] sm:$0xff]
        %v1514 = vld [vmem:[%s1503 + $0x50] sm:$0xff]
        %v1515 = vld [vmem:[%s1503 + $0x58] sm:$0xff]
        %s1516 = scalar_lea.vmem %s8, 3
        %v1517 = vld [vmem:[%s1516] sm:$0x1]
        %v1519 = vlaneseq
        %v1520 = vshrl.u32 %v1519, 7
        %v1521 = vsub.s32 0, %v1520
        %v1522 = vrot.slane %v1517, %v1521
        %1524 = vmatprep.subr.mxu0 0.0
        %1525 = vmatpush1.msra.mxu0 %v1504
        %1526 = vmatprep.subr.mxu0 0.0
        %1527 = vmatpush1.msra.mxu0 %v1505
        %1528 = vmatprep.subr.mxu0 0.0
        %1529 = vmatpush1.msra.mxu0 %v1506
        %1530 = vmatprep.subr.mxu0 0.0
        %1531 = vmatpush1.msra.mxu0 %v1507
        %1532 = vmatprep.subr.mxu0 0.0
        %1533 = vmatpush1.msra.mxu0 %v1508
        %1534 = vmatprep.subr.mxu0 0.0
        %1535 = vmatpush1.msra.mxu0 %v1509
        %1536 = vmatprep.subr.mxu0 0.0
        %1537 = vmatpush1.msra.mxu0 %v1510
        %1538 = vmatprep.subr.mxu0 0.0
        %1539 = vmatpush1.msra.mxu0 %v1511
        %1540 = vmatprep.subr.mxu0 0.0
        %1541 = vmatpush1.msra.mxu0 %v1512
        %1542 = vmatprep.subr.mxu0 0.0
        %1543 = vmatpush1.msra.mxu0 %v1513
        %1544 = vmatprep.subr.mxu0 0.0
        %1545 = vmatpush1.msra.mxu0 %v1514
        %1546 = vmatprep.subr.mxu0 0.0
        %1547 = vmatpush1.msra.mxu0 %v1515
        %1548 = vmatprep.subr.mxu0 0.0
        %1549 = vmatpush1.msra.mxu0 0.0
        %1550 = vmatprep.subr.mxu0 0.0
        %1551 = vmatpush1.msra.mxu0 0.0
        %1552 = vmatprep.subr.mxu0 0.0
        %1553 = vmatpush1.msra.mxu0 0.0
        %1554 = vmatprep.subr.mxu0 0.0
        %1555 = vmatpush1.msra.mxu0 0.0
        %1556 = vmatprep.subr.mxu0 0.0
        %1557 = vmatpush1.msra.mxu0 0.0
        %1558 = vmatprep.subr.mxu0 0.0
        %1559 = vmatpush1.msra.mxu0 0.0
        %1560 = vmatprep.subr.mxu0 0.0
        %1561 = vmatpush1.msra.mxu0 0.0
        %1562 = vmatprep.subr.mxu0 0.0
        %1563 = vmatpush1.msra.mxu0 0.0
        %1564 = vmatprep.subr.mxu0 0.0
        %1565 = vmatpush1.msra.mxu0 0.0
        %1566 = vmatprep.subr.mxu0 0.0
        %1567 = vmatpush1.msra.mxu0 0.0
        %1568 = vmatprep.subr.mxu0 0.0
        %1569 = vmatpush1.msra.mxu0 0.0
        %1570 = vmatprep.subr.mxu0 0.0
        %1571 = vmatpush1.msra.mxu0 0.0
        %1572 = vmatprep.subr.mxu0 0.0
        %1573 = vmatpush1.msra.mxu0 0.0
        %1574 = vmatprep.subr.mxu0 0.0
        %1575 = vmatpush1.msra.mxu0 0.0
        %1576 = vmatprep.subr.mxu0 0.0
        %1577 = vmatpush1.msra.mxu0 0.0
        %1578 = vmatprep.subr.mxu0 0.0
        %1579 = vmatpush1.msra.mxu0 0.0
        %1580 = vmatprep.subr.mxu0 0.0
        %1581 = vmatpush1.msra.mxu0 0.0
        %1582 = vmatprep.subr.mxu0 0.0
        %1583 = vmatpush1.msra.mxu0 0.0
        %1584 = vmatprep.subr.mxu0 0.0
        %1585 = vmatpush1.msra.mxu0 0.0
        %1586 = vmatprep.subr.mxu0 0.0
        %1587 = vmatpush1.msra.mxu0 0.0
        %1588 = vmatprep.mubr.f32.mxu0 0.0
        %1589 = vmatmul.mubr.f32.gmra.mrb[0].mxu0 %v679
        %v1590 = vpop.f32.mrb[0].mxu0
        %v1591 = vadd.f32 %v1522, %v1590
        %v1592 = vpop.f32.mrb[0].mxu0
        %1593 = vmatprep.mubr.f32.mxu0 0.0
        %1594 = vmatmul.mubr.f32.gmra.mrb[0].mxu0 %v682
        %v1595 = vpop.f32.mrb[0].mxu0
        %v1596 = vadd.f32 %v1522, %v1595
        %v1597 = vpop.f32.mrb[0].mxu0
        %1598 = vdwg.mxu0
        %vm1599 = vcmask 64512
        %v1601 = vsel %vm1599, %v550, 0
        %v1604 = vsel %vm1599, %v651, 0
        %1606 = vmatprep.subr.mxu0 0.0
        %1607 = vmatpush1.xpose.msra.mxu0 %v1604
        %1608 = vmatprep.subr.mxu0 0.0
        %1609 = vmatpush1.xpose.msra.mxu0 0.0
        %1610 = vmatprep.subr.mxu0 0.0
        %1611 = vmatpush1.xpose.msra.mxu0 0.0
        %1612 = vmatprep.subr.mxu0 0.0
        %1613 = vmatpush1.xpose.msra.mxu0 0.0
        %1614 = vmatprep.subr.mxu0 0.0
        %1615 = vmatpush1.xpose.msra.mxu0 0.0
        %1616 = vmatprep.subr.mxu0 0.0
        %1617 = vmatpush1.xpose.msra.mxu0 0.0
        %1618 = vmatprep.subr.mxu0 0.0
        %1619 = vmatpush1.xpose.msra.mxu0 0.0
        %1620 = vmatprep.subr.mxu0 0.0
        %1621 = vmatpush1.xpose.msra.mxu0 0.0
        %1622 = vmatprep.subr.mxu0 0.0
        %1623 = vmatpush1.xpose.msra.mxu0 0.0
        %1624 = vmatprep.subr.mxu0 0.0
        %1625 = vmatpush1.xpose.msra.mxu0 0.0
        %1626 = vmatprep.subr.mxu0 0.0
        %1627 = vmatpush1.xpose.msra.mxu0 0.0
        %1628 = vmatprep.subr.mxu0 0.0
        %1629 = vmatpush1.xpose.msra.mxu0 0.0
        %1630 = vmatprep.subr.mxu0 0.0
        %1631 = vmatpush1.xpose.msra.mxu0 0.0
        %1632 = vmatprep.subr.mxu0 0.0
        %1633 = vmatpush1.xpose.msra.mxu0 0.0
        %1634 = vmatprep.subr.mxu0 0.0
        %1635 = vmatpush1.xpose.msra.mxu0 0.0
        %1636 = vmatprep.subr.mxu0 0.0
        %1637 = vmatpush1.xpose.msra.mxu0 0.0
        %1638 = vmatprep.subr.mxu0 0.0
        %1639 = vmatpush1.xpose.msra.mxu0 0.0
        %1640 = vmatprep.subr.mxu0 0.0
        %1641 = vmatpush1.xpose.msra.mxu0 0.0
        %1642 = vmatprep.subr.mxu0 0.0
        %1643 = vmatpush1.xpose.msra.mxu0 0.0
        %1644 = vmatprep.subr.mxu0 0.0
        %1645 = vmatpush1.xpose.msra.mxu0 0.0
        %1646 = vmatprep.subr.mxu0 0.0
        %1647 = vmatpush1.xpose.msra.mxu0 0.0
        %1648 = vmatprep.subr.mxu0 0.0
        %1649 = vmatpush1.xpose.msra.mxu0 0.0
        %1650 = vmatprep.subr.mxu0 0.0
        %1651 = vmatpush1.xpose.msra.mxu0 0.0
        %1652 = vmatprep.subr.mxu0 0.0
        %1653 = vmatpush1.xpose.msra.mxu0 0.0
        %1654 = vmatprep.subr.mxu0 0.0
        %1655 = vmatpush1.xpose.msra.mxu0 0.0
        %1656 = vmatprep.subr.mxu0 0.0
        %1657 = vmatpush1.xpose.msra.mxu0 0.0
        %1658 = vmatprep.subr.mxu0 0.0
        %1659 = vmatpush1.xpose.msra.mxu0 0.0
        %1660 = vmatprep.subr.mxu0 0.0
        %1661 = vmatpush1.xpose.msra.mxu0 0.0
        %1662 = vmatprep.subr.mxu0 0.0
        %1663 = vmatpush1.xpose.msra.mxu0 0.0
        %1664 = vmatprep.subr.mxu0 0.0
        %1665 = vmatpush1.xpose.msra.mxu0 0.0
        %1666 = vmatprep.subr.mxu0 0.0
        %1667 = vmatpush1.xpose.msra.mxu0 0.0
        %1668 = vmatprep.subr.mxu0 0.0
        %1669 = vmatpush1.xpose.msra.mxu0 0.0
        %1670 = vmatprep.mubr.f32.mxu0 0.0
        %1671 = vmatmul.mubr.f32.gmra.mrb[0].mxu0 %v1601
        %v1672 = vpop.f32.mrb[0].mxu0
        %v1673 = vadd.f32 0.0, %v1672
        %v1674 = vpop.f32.mrb[0].mxu0
        %1675 = vdwg.mxu0
        %v1677 = vsel %vm1599, %v555, 0
        %v1680 = vsel %vm1599, %v656, 0
        %1682 = vmatprep.subr.mxu0 0.0
        %1683 = vmatpush1.xpose.msra.mxu0 %v1680
        %1684 = vmatprep.subr.mxu0 0.0
        %1685 = vmatpush1.xpose.msra.mxu0 0.0
        %1686 = vmatprep.subr.mxu0 0.0
        %1687 = vmatpush1.xpose.msra.mxu0 0.0
        %1688 = vmatprep.subr.mxu0 0.0
        %1689 = vmatpush1.xpose.msra.mxu0 0.0
        %1690 = vmatprep.subr.mxu0 0.0
        %1691 = vmatpush1.xpose.msra.mxu0 0.0
        %1692 = vmatprep.subr.mxu0 0.0
        %1693 = vmatpush1.xpose.msra.mxu0 0.0
        %1694 = vmatprep.subr.mxu0 0.0
        %1695 = vmatpush1.xpose.msra.mxu0 0.0
        %1696 = vmatprep.subr.mxu0 0.0
        %1697 = vmatpush1.xpose.msra.mxu0 0.0
        %1698 = vmatprep.subr.mxu0 0.0
        %1699 = vmatpush1.xpose.msra.mxu0 0.0
        %1700 = vmatprep.subr.mxu0 0.0
        %1701 = vmatpush1.xpose.msra.mxu0 0.0
        %1702 = vmatprep.subr.mxu0 0.0
        %1703 = vmatpush1.xpose.msra.mxu0 0.0
        %1704 = vmatprep.subr.mxu0 0.0
        %1705 = vmatpush1.xpose.msra.mxu0 0.0
        %1706 = vmatprep.subr.mxu0 0.0
        %1707 = vmatpush1.xpose.msra.mxu0 0.0
        %1708 = vmatprep.subr.mxu0 0.0
        %1709 = vmatpush1.xpose.msra.mxu0 0.0
        %1710 = vmatprep.subr.mxu0 0.0
        %1711 = vmatpush1.xpose.msra.mxu0 0.0
        %1712 = vmatprep.subr.mxu0 0.0
        %1713 = vmatpush1.xpose.msra.mxu0 0.0
        %1714 = vmatprep.subr.mxu0 0.0
        %1715 = vmatpush1.xpose.msra.mxu0 0.0
        %1716 = vmatprep.subr.mxu0 0.0
        %1717 = vmatpush1.xpose.msra.mxu0 0.0
        %1718 = vmatprep.subr.mxu0 0.0
        %1719 = vmatpush1.xpose.msra.mxu0 0.0
        %1720 = vmatprep.subr.mxu0 0.0
        %1721 = vmatpush1.xpose.msra.mxu0 0.0
        %1722 = vmatprep.subr.mxu0 0.0
        %1723 = vmatpush1.xpose.msra.mxu0 0.0
        %1724 = vmatprep.subr.mxu0 0.0
        %1725 = vmatpush1.xpose.msra.mxu0 0.0
        %1726 = vmatprep.subr.mxu0 0.0
        %1727 = vmatpush1.xpose.msra.mxu0 0.0
        %1728 = vmatprep.subr.mxu0 0.0
        %1729 = vmatpush1.xpose.msra.mxu0 0.0
        %1730 = vmatprep.subr.mxu0 0.0
        %1731 = vmatpush1.xpose.msra.mxu0 0.0
        %1732 = vmatprep.subr.mxu0 0.0
        %1733 = vmatpush1.xpose.msra.mxu0 0.0
        %1734 = vmatprep.subr.mxu0 0.0
        %1735 = vmatpush1.xpose.msra.mxu0 0.0
        %1736 = vmatprep.subr.mxu0 0.0
        %1737 = vmatpush1.xpose.msra.mxu0 0.0
        %1738 = vmatprep.subr.mxu0 0.0
        %1739 = vmatpush1.xpose.msra.mxu0 0.0
        %1740 = vmatprep.subr.mxu0 0.0
        %1741 = vmatpush1.xpose.msra.mxu0 0.0
        %1742 = vmatprep.subr.mxu0 0.0
        %1743 = vmatpush1.xpose.msra.mxu0 0.0
        %1744 = vmatprep.subr.mxu0 0.0
        %1745 = vmatpush1.xpose.msra.mxu0 0.0
        %1746 = vmatprep.mubr.f32.mxu0 0.0
        %1747 = vmatmul.mubr.f32.gmra.mrb[0].mxu0 %v1677
        %v1748 = vpop.f32.mrb[0].mxu0
        %v1749 = vadd.f32 0.0, %v1748
        %v1750 = vpop.f32.mrb[0].mxu0
        %1751 = vdwg.mxu0
        %v1753 = vsel %vm1599, %v839, 0
        %v1756 = vsel %vm1599, %v935, 0
        %1758 = vmatprep.subr.mxu0 0.0
        %1759 = vmatpush1.xpose.msra.mxu0 %v1756
        %1760 = vmatprep.subr.mxu0 0.0
        %1761 = vmatpush1.xpose.msra.mxu0 0.0
        %1762 = vmatprep.subr.mxu0 0.0
        %1763 = vmatpush1.xpose.msra.mxu0 0.0
        %1764 = vmatprep.subr.mxu0 0.0
        %1765 = vmatpush1.xpose.msra.mxu0 0.0
        %1766 = vmatprep.subr.mxu0 0.0
        %1767 = vmatpush1.xpose.msra.mxu0 0.0
        %1768 = vmatprep.subr.mxu0 0.0
        %1769 = vmatpush1.xpose.msra.mxu0 0.0
        %1770 = vmatprep.subr.mxu0 0.0
        %1771 = vmatpush1.xpose.msra.mxu0 0.0
        %1772 = vmatprep.subr.mxu0 0.0
        %1773 = vmatpush1.xpose.msra.mxu0 0.0
        %1774 = vmatprep.subr.mxu0 0.0
        %1775 = vmatpush1.xpose.msra.mxu0 0.0
        %1776 = vmatprep.subr.mxu0 0.0
        %1777 = vmatpush1.xpose.msra.mxu0 0.0
        %1778 = vmatprep.subr.mxu0 0.0
        %1779 = vmatpush1.xpose.msra.mxu0 0.0
        %1780 = vmatprep.subr.mxu0 0.0
        %1781 = vmatpush1.xpose.msra.mxu0 0.0
        %1782 = vmatprep.subr.mxu0 0.0
        %1783 = vmatpush1.xpose.msra.mxu0 0.0
        %1784 = vmatprep.subr.mxu0 0.0
        %1785 = vmatpush1.xpose.msra.mxu0 0.0
        %1786 = vmatprep.subr.mxu0 0.0
        %1787 = vmatpush1.xpose.msra.mxu0 0.0
        %1788 = vmatprep.subr.mxu0 0.0
        %1789 = vmatpush1.xpose.msra.mxu0 0.0
        %1790 = vmatprep.subr.mxu0 0.0
        %1791 = vmatpush1.xpose.msra.mxu0 0.0
        %1792 = vmatprep.subr.mxu0 0.0
        %1793 = vmatpush1.xpose.msra.mxu0 0.0
        %1794 = vmatprep.subr.mxu0 0.0
        %1795 = vmatpush1.xpose.msra.mxu0 0.0
        %1796 = vmatprep.subr.mxu0 0.0
        %1797 = vmatpush1.xpose.msra.mxu0 0.0
        %1798 = vmatprep.subr.mxu0 0.0
        %1799 = vmatpush1.xpose.msra.mxu0 0.0
        %1800 = vmatprep.subr.mxu0 0.0
        %1801 = vmatpush1.xpose.msra.mxu0 0.0
        %1802 = vmatprep.subr.mxu0 0.0
        %1803 = vmatpush1.xpose.msra.mxu0 0.0
        %1804 = vmatprep.subr.mxu0 0.0
        %1805 = vmatpush1.xpose.msra.mxu0 0.0
        %1806 = vmatprep.subr.mxu0 0.0
        %1807 = vmatpush1.xpose.msra.mxu0 0.0
        %1808 = vmatprep.subr.mxu0 0.0
        %1809 = vmatpush1.xpose.msra.mxu0 0.0
        %1810 = vmatprep.subr.mxu0 0.0
        %1811 = vmatpush1.xpose.msra.mxu0 0.0
        %1812 = vmatprep.subr.mxu0 0.0
        %1813 = vmatpush1.xpose.msra.mxu0 0.0
        %1814 = vmatprep.subr.mxu0 0.0
        %1815 = vmatpush1.xpose.msra.mxu0 0.0
        %1816 = vmatprep.subr.mxu0 0.0
        %1817 = vmatpush1.xpose.msra.mxu0 0.0
        %1818 = vmatprep.subr.mxu0 0.0
        %1819 = vmatpush1.xpose.msra.mxu0 0.0
        %1820 = vmatprep.subr.mxu0 0.0
        %1821 = vmatpush1.xpose.msra.mxu0 0.0
        %1822 = vmatprep.mubr.f32.mxu0 0.0
        %1823 = vmatmul.mubr.f32.gmra.mrb[0].mxu0 %v1753
        %v1824 = vpop.f32.mrb[0].mxu0
        %v1825 = vadd.f32 0.0, %v1824
        %v1826 = vpop.f32.mrb[0].mxu0
        %1827 = vdwg.mxu0
        %v1829 = vsel %vm1599, %v844, 0
        %v1832 = vsel %vm1599, %v940, 0
        %1834 = vmatprep.subr.mxu0 0.0
        %1835 = vmatpush1.xpose.msra.mxu0 %v1832
        %1836 = vmatprep.subr.mxu0 0.0
        %1837 = vmatpush1.xpose.msra.mxu0 0.0
        %1838 = vmatprep.subr.mxu0 0.0
        %1839 = vmatpush1.xpose.msra.mxu0 0.0
        %1840 = vmatprep.subr.mxu0 0.0
        %1841 = vmatpush1.xpose.msra.mxu0 0.0
        %1842 = vmatprep.subr.mxu0 0.0
        %1843 = vmatpush1.xpose.msra.mxu0 0.0
        %1844 = vmatprep.subr.mxu0 0.0
        %1845 = vmatpush1.xpose.msra.mxu0 0.0
        %1846 = vmatprep.subr.mxu0 0.0
        %1847 = vmatpush1.xpose.msra.mxu0 0.0
        %1848 = vmatprep.subr.mxu0 0.0
        %1849 = vmatpush1.xpose.msra.mxu0 0.0
        %1850 = vmatprep.subr.mxu0 0.0
        %1851 = vmatpush1.xpose.msra.mxu0 0.0
        %1852 = vmatprep.subr.mxu0 0.0
        %1853 = vmatpush1.xpose.msra.mxu0 0.0
        %1854 = vmatprep.subr.mxu0 0.0
        %1855 = vmatpush1.xpose.msra.mxu0 0.0
        %1856 = vmatprep.subr.mxu0 0.0
        %1857 = vmatpush1.xpose.msra.mxu0 0.0
        %1858 = vmatprep.subr.mxu0 0.0
        %1859 = vmatpush1.xpose.msra.mxu0 0.0
        %1860 = vmatprep.subr.mxu0 0.0
        %1861 = vmatpush1.xpose.msra.mxu0 0.0
        %1862 = vmatprep.subr.mxu0 0.0
        %1863 = vmatpush1.xpose.msra.mxu0 0.0
        %1864 = vmatprep.subr.mxu0 0.0
        %1865 = vmatpush1.xpose.msra.mxu0 0.0
        %1866 = vmatprep.subr.mxu0 0.0
        %1867 = vmatpush1.xpose.msra.mxu0 0.0
        %1868 = vmatprep.subr.mxu0 0.0
        %1869 = vmatpush1.xpose.msra.mxu0 0.0
        %1870 = vmatprep.subr.mxu0 0.0
        %1871 = vmatpush1.xpose.msra.mxu0 0.0
        %1872 = vmatprep.subr.mxu0 0.0
        %1873 = vmatpush1.xpose.msra.mxu0 0.0
        %1874 = vmatprep.subr.mxu0 0.0
        %1875 = vmatpush1.xpose.msra.mxu0 0.0
        %1876 = vmatprep.subr.mxu0 0.0
        %1877 = vmatpush1.xpose.msra.mxu0 0.0
        %1878 = vmatprep.subr.mxu0 0.0
        %1879 = vmatpush1.xpose.msra.mxu0 0.0
        %1880 = vmatprep.subr.mxu0 0.0
        %1881 = vmatpush1.xpose.msra.mxu0 0.0
        %1882 = vmatprep.subr.mxu0 0.0
        %1883 = vmatpush1.xpose.msra.mxu0 0.0
        %1884 = vmatprep.subr.mxu0 0.0
        %1885 = vmatpush1.xpose.msra.mxu0 0.0
        %1886 = vmatprep.subr.mxu0 0.0
        %1887 = vmatpush1.xpose.msra.mxu0 0.0
        %1888 = vmatprep.subr.mxu0 0.0
        %1889 = vmatpush1.xpose.msra.mxu0 0.0
        %1890 = vmatprep.subr.mxu0 0.0
        %1891 = vmatpush1.xpose.msra.mxu0 0.0
        %1892 = vmatprep.subr.mxu0 0.0
        %1893 = vmatpush1.xpose.msra.mxu0 0.0
        %1894 = vmatprep.subr.mxu0 0.0
        %1895 = vmatpush1.xpose.msra.mxu0 0.0
        %1896 = vmatprep.subr.mxu0 0.0
        %1897 = vmatpush1.xpose.msra.mxu0 0.0
        %1898 = vmatprep.mubr.f32.mxu0 0.0
        %1899 = vmatmul.mubr.f32.gmra.mrb[0].mxu0 %v1829
        %v1900 = vpop.f32.mrb[0].mxu0
        %v1901 = vadd.f32 0.0, %v1900
        %v1902 = vpop.f32.mrb[0].mxu0
        %1903 = vdwg.mxu0
        %v1905 = vsel %vm1599, %v1119, 0
        %v1908 = vsel %vm1599, %v1215, 0
        %1910 = vmatprep.subr.mxu0 0.0
        %1911 = vmatpush1.xpose.msra.mxu0 %v1908
        %1912 = vmatprep.subr.mxu0 0.0
        %1913 = vmatpush1.xpose.msra.mxu0 0.0
        %1914 = vmatprep.subr.mxu0 0.0
        %1915 = vmatpush1.xpose.msra.mxu0 0.0
        %1916 = vmatprep.subr.mxu0 0.0
        %1917 = vmatpush1.xpose.msra.mxu0 0.0
        %1918 = vmatprep.subr.mxu0 0.0
        %1919 = vmatpush1.xpose.msra.mxu0 0.0
        %1920 = vmatprep.subr.mxu0 0.0
        %1921 = vmatpush1.xpose.msra.mxu0 0.0
        %1922 = vmatprep.subr.mxu0 0.0
        %1923 = vmatpush1.xpose.msra.mxu0 0.0
        %1924 = vmatprep.subr.mxu0 0.0
        %1925 = vmatpush1.xpose.msra.mxu0 0.0
        %1926 = vmatprep.subr.mxu0 0.0
        %1927 = vmatpush1.xpose.msra.mxu0 0.0
        %1928 = vmatprep.subr.mxu0 0.0
        %1929 = vmatpush1.xpose.msra.mxu0 0.0
        %1930 = vmatprep.subr.mxu0 0.0
        %1931 = vmatpush1.xpose.msra.mxu0 0.0
        %1932 = vmatprep.subr.mxu0 0.0
        %1933 = vmatpush1.xpose.msra.mxu0 0.0
        %1934 = vmatprep.subr.mxu0 0.0
        %1935 = vmatpush1.xpose.msra.mxu0 0.0
        %1936 = vmatprep.subr.mxu0 0.0
        %1937 = vmatpush1.xpose.msra.mxu0 0.0
        %1938 = vmatprep.subr.mxu0 0.0
        %1939 = vmatpush1.xpose.msra.mxu0 0.0
        %1940 = vmatprep.subr.mxu0 0.0
        %1941 = vmatpush1.xpose.msra.mxu0 0.0
        %1942 = vmatprep.subr.mxu0 0.0
        %1943 = vmatpush1.xpose.msra.mxu0 0.0
        %1944 = vmatprep.subr.mxu0 0.0
        %1945 = vmatpush1.xpose.msra.mxu0 0.0
        %1946 = vmatprep.subr.mxu0 0.0
        %1947 = vmatpush1.xpose.msra.mxu0 0.0
        %1948 = vmatprep.subr.mxu0 0.0
        %1949 = vmatpush1.xpose.msra.mxu0 0.0
        %1950 = vmatprep.subr.mxu0 0.0
        %1951 = vmatpush1.xpose.msra.mxu0 0.0
        %1952 = vmatprep.subr.mxu0 0.0
        %1953 = vmatpush1.xpose.msra.mxu0 0.0
        %1954 = vmatprep.subr.mxu0 0.0
        %1955 = vmatpush1.xpose.msra.mxu0 0.0
        %1956 = vmatprep.subr.mxu0 0.0
        %1957 = vmatpush1.xpose.msra.mxu0 0.0
        %1958 = vmatprep.subr.mxu0 0.0
        %1959 = vmatpush1.xpose.msra.mxu0 0.0
        %1960 = vmatprep.subr.mxu0 0.0
        %1961 = vmatpush1.xpose.msra.mxu0 0.0
        %1962 = vmatprep.subr.mxu0 0.0
        %1963 = vmatpush1.xpose.msra.mxu0 0.0
        %1964 = vmatprep.subr.mxu0 0.0
        %1965 = vmatpush1.xpose.msra.mxu0 0.0
        %1966 = vmatprep.subr.mxu0 0.0
        %1967 = vmatpush1.xpose.msra.mxu0 0.0
        %1968 = vmatprep.subr.mxu0 0.0
        %1969 = vmatpush1.xpose.msra.mxu0 0.0
        %1970 = vmatprep.subr.mxu0 0.0
        %1971 = vmatpush1.xpose.msra.mxu0 0.0
        %1972 = vmatprep.subr.mxu0 0.0
        %1973 = vmatpush1.xpose.msra.mxu0 0.0
        %1974 = vmatprep.mubr.f32.mxu0 0.0
        %1975 = vmatmul.mubr.f32.gmra.mrb[0].mxu0 %v1905
        %v1976 = vpop.f32.mrb[0].mxu0
        %v1977 = vadd.f32 0.0, %v1976
        %v1978 = vpop.f32.mrb[0].mxu0
        %1979 = vdwg.mxu0
        %v1981 = vsel %vm1599, %v1124, 0
        %v1984 = vsel %vm1599, %v1220, 0
        %1986 = vmatprep.subr.mxu0 0.0
        %1987 = vmatpush1.xpose.msra.mxu0 %v1984
        %1988 = vmatprep.subr.mxu0 0.0
        %1989 = vmatpush1.xpose.msra.mxu0 0.0
        %1990 = vmatprep.subr.mxu0 0.0
        %1991 = vmatpush1.xpose.msra.mxu0 0.0
        %1992 = vmatprep.subr.mxu0 0.0
        %1993 = vmatpush1.xpose.msra.mxu0 0.0
        %1994 = vmatprep.subr.mxu0 0.0
        %1995 = vmatpush1.xpose.msra.mxu0 0.0
        %1996 = vmatprep.subr.mxu0 0.0
        %1997 = vmatpush1.xpose.msra.mxu0 0.0
        %1998 = vmatprep.subr.mxu0 0.0
        %1999 = vmatpush1.xpose.msra.mxu0 0.0
        %2000 = vmatprep.subr.mxu0 0.0
        %2001 = vmatpush1.xpose.msra.mxu0 0.0
        %2002 = vmatprep.subr.mxu0 0.0
        %2003 = vmatpush1.xpose.msra.mxu0 0.0
        %2004 = vmatprep.subr.mxu0 0.0
        %2005 = vmatpush1.xpose.msra.mxu0 0.0
        %2006 = vmatprep.subr.mxu0 0.0
        %2007 = vmatpush1.xpose.msra.mxu0 0.0
        %2008 = vmatprep.subr.mxu0 0.0
        %2009 = vmatpush1.xpose.msra.mxu0 0.0
        %2010 = vmatprep.subr.mxu0 0.0
        %2011 = vmatpush1.xpose.msra.mxu0 0.0
        %2012 = vmatprep.subr.mxu0 0.0
        %2013 = vmatpush1.xpose.msra.mxu0 0.0
        %2014 = vmatprep.subr.mxu0 0.0
        %2015 = vmatpush1.xpose.msra.mxu0 0.0
        %2016 = vmatprep.subr.mxu0 0.0
        %2017 = vmatpush1.xpose.msra.mxu0 0.0
        %2018 = vmatprep.subr.mxu0 0.0
        %2019 = vmatpush1.xpose.msra.mxu0 0.0
        %2020 = vmatprep.subr.mxu0 0.0
        %2021 = vmatpush1.xpose.msra.mxu0 0.0
        %2022 = vmatprep.subr.mxu0 0.0
        %2023 = vmatpush1.xpose.msra.mxu0 0.0
        %2024 = vmatprep.subr.mxu0 0.0
        %2025 = vmatpush1.xpose.msra.mxu0 0.0
        %2026 = vmatprep.subr.mxu0 0.0
        %2027 = vmatpush1.xpose.msra.mxu0 0.0
        %2028 = vmatprep.subr.mxu0 0.0
        %2029 = vmatpush1.xpose.msra.mxu0 0.0
        %2030 = vmatprep.subr.mxu0 0.0
        %2031 = vmatpush1.xpose.msra.mxu0 0.0
        %2032 = vmatprep.subr.mxu0 0.0
        %2033 = vmatpush1.xpose.msra.mxu0 0.0
        %2034 = vmatprep.subr.mxu0 0.0
        %2035 = vmatpush1.xpose.msra.mxu0 0.0
        %2036 = vmatprep.subr.mxu0 0.0
        %2037 = vmatpush1.xpose.msra.mxu0 0.0
        %2038 = vmatprep.subr.mxu0 0.0
        %2039 = vmatpush1.xpose.msra.mxu0 0.0
        %2040 = vmatprep.subr.mxu0 0.0
        %2041 = vmatpush1.xpose.msra.mxu0 0.0
        %2042 = vmatprep.subr.mxu0 0.0
        %2043 = vmatpush1.xpose.msra.mxu0 0.0
        %2044 = vmatprep.subr.mxu0 0.0
        %2045 = vmatpush1.xpose.msra.mxu0 0.0
        %2046 = vmatprep.subr.mxu0 0.0
        %2047 = vmatpush1.xpose.msra.mxu0 0.0
        %2048 = vmatprep.subr.mxu0 0.0
        %2049 = vmatpush1.xpose.msra.mxu0 0.0
        %2050 = vmatprep.mubr.f32.mxu0 0.0
        %2051 = vmatmul.mubr.f32.gmra.mrb[0].mxu0 %v1981
        %v2052 = vpop.f32.mrb[0].mxu0
        %v2053 = vadd.f32 0.0, %v2052
        %v2054 = vpop.f32.mrb[0].mxu0
        %2055 = vdwg.mxu0
        %v2057 = vsel %vm1599, %v1399, 0
        %v2060 = vsel %vm1599, %v1495, 0
        %2062 = vmatprep.subr.mxu0 0.0
        %2063 = vmatpush1.xpose.msra.mxu0 %v2060
        %2064 = vmatprep.subr.mxu0 0.0
        %2065 = vmatpush1.xpose.msra.mxu0 0.0
        %2066 = vmatprep.subr.mxu0 0.0
        %2067 = vmatpush1.xpose.msra.mxu0 0.0
        %2068 = vmatprep.subr.mxu0 0.0
        %2069 = vmatpush1.xpose.msra.mxu0 0.0
        %2070 = vmatprep.subr.mxu0 0.0
        %2071 = vmatpush1.xpose.msra.mxu0 0.0
        %2072 = vmatprep.subr.mxu0 0.0
        %2073 = vmatpush1.xpose.msra.mxu0 0.0
        %2074 = vmatprep.subr.mxu0 0.0
        %2075 = vmatpush1.xpose.msra.mxu0 0.0
        %2076 = vmatprep.subr.mxu0 0.0
        %2077 = vmatpush1.xpose.msra.mxu0 0.0
        %2078 = vmatprep.subr.mxu0 0.0
        %2079 = vmatpush1.xpose.msra.mxu0 0.0
        %2080 = vmatprep.subr.mxu0 0.0
        %2081 = vmatpush1.xpose.msra.mxu0 0.0
        %2082 = vmatprep.subr.mxu0 0.0
        %2083 = vmatpush1.xpose.msra.mxu0 0.0
        %2084 = vmatprep.subr.mxu0 0.0
        %2085 = vmatpush1.xpose.msra.mxu0 0.0
        %2086 = vmatprep.subr.mxu0 0.0
        %2087 = vmatpush1.xpose.msra.mxu0 0.0
        %2088 = vmatprep.subr.mxu0 0.0
        %2089 = vmatpush1.xpose.msra.mxu0 0.0
        %2090 = vmatprep.subr.mxu0 0.0
        %2091 = vmatpush1.xpose.msra.mxu0 0.0
        %2092 = vmatprep.subr.mxu0 0.0
        %2093 = vmatpush1.xpose.msra.mxu0 0.0
        %2094 = vmatprep.subr.mxu0 0.0
        %2095 = vmatpush1.xpose.msra.mxu0 0.0
        %2096 = vmatprep.subr.mxu0 0.0
        %2097 = vmatpush1.xpose.msra.mxu0 0.0
        %2098 = vmatprep.subr.mxu0 0.0
        %2099 = vmatpush1.xpose.msra.mxu0 0.0
        %2100 = vmatprep.subr.mxu0 0.0
        %2101 = vmatpush1.xpose.msra.mxu0 0.0
        %2102 = vmatprep.subr.mxu0 0.0
        %2103 = vmatpush1.xpose.msra.mxu0 0.0
        %2104 = vmatprep.subr.mxu0 0.0
        %2105 = vmatpush1.xpose.msra.mxu0 0.0
        %2106 = vmatprep.subr.mxu0 0.0
        %2107 = vmatpush1.xpose.msra.mxu0 0.0
        %2108 = vmatprep.subr.mxu0 0.0
        %2109 = vmatpush1.xpose.msra.mxu0 0.0
        %2110 = vmatprep.subr.mxu0 0.0
        %2111 = vmatpush1.xpose.msra.mxu0 0.0
        %2112 = vmatprep.subr.mxu0 0.0
        %2113 = vmatpush1.xpose.msra.mxu0 0.0
        %2114 = vmatprep.subr.mxu0 0.0
        %2115 = vmatpush1.xpose.msra.mxu0 0.0
        %2116 = vmatprep.subr.mxu0 0.0
        %2117 = vmatpush1.xpose.msra.mxu0 0.0
        %2118 = vmatprep.subr.mxu0 0.0
        %2119 = vmatpush1.xpose.msra.mxu0 0.0
        %2120 = vmatprep.subr.mxu0 0.0
        %2121 = vmatpush1.xpose.msra.mxu0 0.0
        %2122 = vmatprep.subr.mxu0 0.0
        %2123 = vmatpush1.xpose.msra.mxu0 0.0
        %2124 = vmatprep.subr.mxu0 0.0
        %2125 = vmatpush1.xpose.msra.mxu0 0.0
        %2126 = vmatprep.mubr.f32.mxu0 0.0
        %2127 = vmatmul.mubr.f32.gmra.mrb[0].mxu0 %v2057
        %v2128 = vpop.f32.mrb[0].mxu0
        %v2129 = vadd.f32 0.0, %v2128
        %v2130 = vpop.f32.mrb[0].mxu0
        %2131 = vdwg.mxu0
        %v2133 = vsel %vm1599, %v1404, 0
        %v2136 = vsel %vm1599, %v1500, 0
        %2138 = vmatprep.subr.mxu0 0.0
        %2139 = vmatpush1.xpose.msra.mxu0 %v2136
        %2140 = vmatprep.subr.mxu0 0.0
        %2141 = vmatpush1.xpose.msra.mxu0 0.0
        %2142 = vmatprep.subr.mxu0 0.0
        %2143 = vmatpush1.xpose.msra.mxu0 0.0
        %2144 = vmatprep.subr.mxu0 0.0
        %2145 = vmatpush1.xpose.msra.mxu0 0.0
        %2146 = vmatprep.subr.mxu0 0.0
        %2147 = vmatpush1.xpose.msra.mxu0 0.0
        %2148 = vmatprep.subr.mxu0 0.0
        %2149 = vmatpush1.xpose.msra.mxu0 0.0
        %2150 = vmatprep.subr.mxu0 0.0
        %2151 = vmatpush1.xpose.msra.mxu0 0.0
        %2152 = vmatprep.subr.mxu0 0.0
        %2153 = vmatpush1.xpose.msra.mxu0 0.0
        %2154 = vmatprep.subr.mxu0 0.0
        %2155 = vmatpush1.xpose.msra.mxu0 0.0
        %2156 = vmatprep.subr.mxu0 0.0
        %2157 = vmatpush1.xpose.msra.mxu0 0.0
        %2158 = vmatprep.subr.mxu0 0.0
        %2159 = vmatpush1.xpose.msra.mxu0 0.0
        %2160 = vmatprep.subr.mxu0 0.0
        %2161 = vmatpush1.xpose.msra.mxu0 0.0
        %2162 = vmatprep.subr.mxu0 0.0
        %2163 = vmatpush1.xpose.msra.mxu0 0.0
        %2164 = vmatprep.subr.mxu0 0.0
        %2165 = vmatpush1.xpose.msra.mxu0 0.0
        %2166 = vmatprep.subr.mxu0 0.0
        %2167 = vmatpush1.xpose.msra.mxu0 0.0
        %2168 = vmatprep.subr.mxu0 0.0
        %2169 = vmatpush1.xpose.msra.mxu0 0.0
        %2170 = vmatprep.subr.mxu0 0.0
        %2171 = vmatpush1.xpose.msra.mxu0 0.0
        %2172 = vmatprep.subr.mxu0 0.0
        %2173 = vmatpush1.xpose.msra.mxu0 0.0
        %2174 = vmatprep.subr.mxu0 0.0
        %2175 = vmatpush1.xpose.msra.mxu0 0.0
        %2176 = vmatprep.subr.mxu0 0.0
        %2177 = vmatpush1.xpose.msra.mxu0 0.0
        %2178 = vmatprep.subr.mxu0 0.0
        %2179 = vmatpush1.xpose.msra.mxu0 0.0
        %2180 = vmatprep.subr.mxu0 0.0
        %2181 = vmatpush1.xpose.msra.mxu0 0.0
        %2182 = vmatprep.subr.mxu0 0.0
        %2183 = vmatpush1.xpose.msra.mxu0 0.0
        %2184 = vmatprep.subr.mxu0 0.0
        %2185 = vmatpush1.xpose.msra.mxu0 0.0
        %2186 = vmatprep.subr.mxu0 0.0
        %2187 = vmatpush1.xpose.msra.mxu0 0.0
        %2188 = vmatprep.subr.mxu0 0.0
        %2189 = vmatpush1.xpose.msra.mxu0 0.0
        %2190 = vmatprep.subr.mxu0 0.0
        %2191 = vmatpush1.xpose.msra.mxu0 0.0
        %2192 = vmatprep.subr.mxu0 0.0
        %2193 = vmatpush1.xpose.msra.mxu0 0.0
        %2194 = vmatprep.subr.mxu0 0.0
        %2195 = vmatpush1.xpose.msra.mxu0 0.0
        %2196 = vmatprep.subr.mxu0 0.0
        %2197 = vmatpush1.xpose.msra.mxu0 0.0
        %2198 = vmatprep.subr.mxu0 0.0
        %2199 = vmatpush1.xpose.msra.mxu0 0.0
        %2200 = vmatprep.subr.mxu0 0.0
        %2201 = vmatpush1.xpose.msra.mxu0 0.0
        %2202 = vmatprep.mubr.f32.mxu0 0.0
        %2203 = vmatmul.mubr.f32.gmra.mrb[0].mxu0 %v2133
        %v2204 = vpop.f32.mrb[0].mxu0
        %v2205 = vadd.f32 0.0, %v2204
        %v2206 = vpop.f32.mrb[0].mxu0
        %2207 = vdwg.mxu0
        %v2208 = vsel %vm1599, %v1673, -inf
        %2209 = vmax.xlane.f32.xlu0 %v2208
        %v2210 = vpop.xlane.xlu0 %2209
        %v2211 = vsel %vm1599, %v1749, -inf
        %2212 = vmax.xlane.f32.xlu0 %v2211
        %v2213 = vpop.xlane.xlu0 %2212
        %v2214 = vsel %vm1599, %v1825, -inf
        %2215 = vmax.xlane.f32.xlu0 %v2214
        %v2216 = vpop.xlane.xlu0 %2215
        %v2217 = vsel %vm1599, %v1901, -inf
        %2218 = vmax.xlane.f32.xlu0 %v2217
        %v2219 = vpop.xlane.xlu0 %2218
        %v2220 = vsel %vm1599, %v1977, -inf
        %2221 = vmax.xlane.f32.xlu0 %v2220
        %v2222 = vpop.xlane.xlu0 %2221
        %v2223 = vsel %vm1599, %v2053, -inf
        %2224 = vmax.xlane.f32.xlu0 %v2223
        %v2225 = vpop.xlane.xlu0 %2224
        %v2226 = vsel %vm1599, %v2129, -inf
        %2227 = vmax.xlane.f32.xlu0 %v2226
        %v2228 = vpop.xlane.xlu0 %2227
        %v2229 = vsel %vm1599, %v2205, -inf
        %2230 = vmax.xlane.f32.xlu0 %v2229
        %v2231 = vpop.xlane.xlu0 %2230
        %v2232 = vsub.f32 %v1673, %v2210
        %v2233 = vsub.f32 %v1749, %v2213
        %v2234 = vsub.f32 %v1825, %v2216
        %v2235 = vsub.f32 %v1901, %v2219
        %v2236 = vsub.f32 %v1977, %v2222
        %v2237 = vsub.f32 %v2053, %v2225
        %v2238 = vsub.f32 %v2129, %v2228
        %v2239 = vsub.f32 %v2205, %v2231
        %v2240 = vmul.f32 %v2232, 1.442695
        %v2241 = vpow.pop %v2240
        %v2242 = vmul.f32 %v2233, 1.442695
        %v2243 = vpow.pop %v2242
        %v2244 = vmul.f32 %v2234, 1.442695
        %v2245 = vpow.pop %v2244
        %v2246 = vmul.f32 %v2235, 1.442695
        %v2247 = vpow.pop %v2246
        %v2248 = vmul.f32 %v2236, 1.442695
        %v2249 = vpow.pop %v2248
        %v2250 = vmul.f32 %v2237, 1.442695
        %v2251 = vpow.pop %v2250
        %v2252 = vmul.f32 %v2238, 1.442695
        %v2253 = vpow.pop %v2252
        %v2254 = vmul.f32 %v2239, 1.442695
        %v2255 = vpow.pop %v2254
        %v2256 = vsel %vm1599, %v2241, 0.0
        %2257 = vadd.xlane.f32.xlu0 %v2256
        %v2258 = vpop.xlane.xlu0 %2257
        %v2259 = vsel %vm1599, %v2243, 0.0
        %2260 = vadd.xlane.f32.xlu0 %v2259
        %v2261 = vpop.xlane.xlu0 %2260
        %v2262 = vsel %vm1599, %v2245, 0.0
        %2263 = vadd.xlane.f32.xlu0 %v2262
        %v2264 = vpop.xlane.xlu0 %2263
        %v2265 = vsel %vm1599, %v2247, 0.0
        %2266 = vadd.xlane.f32.xlu0 %v2265
        %v2267 = vpop.xlane.xlu0 %2266
        %v2268 = vsel %vm1599, %v2249, 0.0
        %2269 = vadd.xlane.f32.xlu0 %v2268
        %v2270 = vpop.xlane.xlu0 %2269
        %v2271 = vsel %vm1599, %v2251, 0.0
        %2272 = vadd.xlane.f32.xlu0 %v2271
        %v2273 = vpop.xlane.xlu0 %2272
        %v2274 = vsel %vm1599, %v2253, 0.0
        %2275 = vadd.xlane.f32.xlu0 %v2274
        %v2276 = vpop.xlane.xlu0 %2275
        %v2277 = vsel %vm1599, %v2255, 0.0
        %2278 = vadd.xlane.f32.xlu0 %v2277
        %v2279 = vpop.xlane.xlu0 %2278
        %v2280 = vrcp.pop %v2258
        %v2281 = vrcp.pop %v2261
        %v2282 = vrcp.pop %v2264
        %v2283 = vrcp.pop %v2267
        %v2284 = vrcp.pop %v2270
        %v2285 = vrcp.pop %v2273
        %v2286 = vrcp.pop %v2276
        %v2287 = vrcp.pop %v2279
        %v2288 = vmul.f32 %v2241, %v2280
        %v2289 = vmul.f32 %v2243, %v2281
        %v2290 = vmul.f32 %v2245, %v2282
        %v2291 = vmul.f32 %v2247, %v2283
        %v2292 = vmul.f32 %v2249, %v2284
        %v2293 = vmul.f32 %v2251, %v2285
        %v2294 = vmul.f32 %v2253, %v2286
        %v2295 = vmul.f32 %v2255, %v2287
        %v2297 = vsel %vm1599, %v2288, 0
        %2299 = vmatprep.subr.mxu0 0.0
        %2300 = vmatpush1.msra.mxu0 %v751
        %2301 = vmatprep.subr.mxu0 0.0
        %2302 = vmatpush1.msra.mxu0 0.0
        %2303 = vmatprep.subr.mxu0 0.0
        %2304 = vmatpush1.msra.mxu0 0.0
        %2305 = vmatprep.subr.mxu0 0.0
        %2306 = vmatpush1.msra.mxu0 0.0
        %2307 = vmatprep.subr.mxu0 0.0
        %2308 = vmatpush1.msra.mxu0 0.0
        %2309 = vmatprep.subr.mxu0 0.0
        %2310 = vmatpush1.msra.mxu0 0.0
        %2311 = vmatprep.subr.mxu0 0.0
        %2312 = vmatpush1.msra.mxu0 0.0
        %2313 = vmatprep.subr.mxu0 0.0
        %2314 = vmatpush1.msra.mxu0 0.0
        %2315 = vmatprep.subr.mxu0 0.0
        %2316 = vmatpush1.msra.mxu0 0.0
        %2317 = vmatprep.subr.mxu0 0.0
        %2318 = vmatpush1.msra.mxu0 0.0
        %2319 = vmatprep.subr.mxu0 0.0
        %2320 = vmatpush1.msra.mxu0 0.0
        %2321 = vmatprep.subr.mxu0 0.0
        %2322 = vmatpush1.msra.mxu0 0.0
        %2323 = vmatprep.subr.mxu0 0.0
        %2324 = vmatpush1.msra.mxu0 0.0
        %2325 = vmatprep.subr.mxu0 0.0
        %2326 = vmatpush1.msra.mxu0 0.0
        %2327 = vmatprep.subr.mxu0 0.0
        %2328 = vmatpush1.msra.mxu0 0.0
        %2329 = vmatprep.subr.mxu0 0.0
        %2330 = vmatpush1.msra.mxu0 0.0
        %2331 = vmatprep.subr.mxu0 0.0
        %2332 = vmatpush1.msra.mxu0 0.0
        %2333 = vmatprep.subr.mxu0 0.0
        %2334 = vmatpush1.msra.mxu0 0.0
        %2335 = vmatprep.subr.mxu0 0.0
        %2336 = vmatpush1.msra.mxu0 0.0
        %2337 = vmatprep.subr.mxu0 0.0
        %2338 = vmatpush1.msra.mxu0 0.0
        %2339 = vmatprep.subr.mxu0 0.0
        %2340 = vmatpush1.msra.mxu0 0.0
        %2341 = vmatprep.subr.mxu0 0.0
        %2342 = vmatpush1.msra.mxu0 0.0
        %2343 = vmatprep.subr.mxu0 0.0
        %2344 = vmatpush1.msra.mxu0 0.0
        %2345 = vmatprep.subr.mxu0 0.0
        %2346 = vmatpush1.msra.mxu0 0.0
        %2347 = vmatprep.subr.mxu0 0.0
        %2348 = vmatpush1.msra.mxu0 0.0
        %2349 = vmatprep.subr.mxu0 0.0
        %2350 = vmatpush1.msra.mxu0 0.0
        %2351 = vmatprep.subr.mxu0 0.0
        %2352 = vmatpush1.msra.mxu0 0.0
        %2353 = vmatprep.subr.mxu0 0.0
        %2354 = vmatpush1.msra.mxu0 0.0
        %2355 = vmatprep.subr.mxu0 0.0
        %2356 = vmatpush1.msra.mxu0 0.0
        %2357 = vmatprep.subr.mxu0 0.0
        %2358 = vmatpush1.msra.mxu0 0.0
        %2359 = vmatprep.subr.mxu0 0.0
        %2360 = vmatpush1.msra.mxu0 0.0
        %2361 = vmatprep.subr.mxu0 0.0
        %2362 = vmatpush1.msra.mxu0 0.0
        %2363 = vmatprep.mubr.f32.mxu0 0.0
        %2364 = vmatmul.mubr.f32.gmra.mrb[0].mxu0 %v2297
        %v2365 = vpop.f32.mrb[0].mxu0
        %v2366 = vadd.f32 0.0, %v2365
        %v2367 = vpop.f32.mrb[0].mxu0
        %2368 = vdwg.mxu0
        %v2370 = vsel %vm1599, %v2289, 0
        %2372 = vmatprep.subr.mxu0 0.0
        %2373 = vmatpush1.msra.mxu0 %v756
        %2374 = vmatprep.subr.mxu0 0.0
        %2375 = vmatpush1.msra.mxu0 0.0
        %2376 = vmatprep.subr.mxu0 0.0
        %2377 = vmatpush1.msra.mxu0 0.0
        %2378 = vmatprep.subr.mxu0 0.0
        %2379 = vmatpush1.msra.mxu0 0.0
        %2380 = vmatprep.subr.mxu0 0.0
        %2381 = vmatpush1.msra.mxu0 0.0
        %2382 = vmatprep.subr.mxu0 0.0
        %2383 = vmatpush1.msra.mxu0 0.0
        %2384 = vmatprep.subr.mxu0 0.0
        %2385 = vmatpush1.msra.mxu0 0.0
        %2386 = vmatprep.subr.mxu0 0.0
        %2387 = vmatpush1.msra.mxu0 0.0
        %2388 = vmatprep.subr.mxu0 0.0
        %2389 = vmatpush1.msra.mxu0 0.0
        %2390 = vmatprep.subr.mxu0 0.0
        %2391 = vmatpush1.msra.mxu0 0.0
        %2392 = vmatprep.subr.mxu0 0.0
        %2393 = vmatpush1.msra.mxu0 0.0
        %2394 = vmatprep.subr.mxu0 0.0
        %2395 = vmatpush1.msra.mxu0 0.0
        %2396 = vmatprep.subr.mxu0 0.0
        %2397 = vmatpush1.msra.mxu0 0.0
        %2398 = vmatprep.subr.mxu0 0.0
        %2399 = vmatpush1.msra.mxu0 0.0
        %2400 = vmatprep.subr.mxu0 0.0
        %2401 = vmatpush1.msra.mxu0 0.0
        %2402 = vmatprep.subr.mxu0 0.0
        %2403 = vmatpush1.msra.mxu0 0.0
        %2404 = vmatprep.subr.mxu0 0.0
        %2405 = vmatpush1.msra.mxu0 0.0
        %2406 = vmatprep.subr.mxu0 0.0
        %2407 = vmatpush1.msra.mxu0 0.0
        %2408 = vmatprep.subr.mxu0 0.0
        %2409 = vmatpush1.msra.mxu0 0.0
        %2410 = vmatprep.subr.mxu0 0.0
        %2411 = vmatpush1.msra.mxu0 0.0
        %2412 = vmatprep.subr.mxu0 0.0
        %2413 = vmatpush1.msra.mxu0 0.0
        %2414 = vmatprep.subr.mxu0 0.0
        %2415 = vmatpush1.msra.mxu0 0.0
        %2416 = vmatprep.subr.mxu0 0.0
        %2417 = vmatpush1.msra.mxu0 0.0
        %2418 = vmatprep.subr.mxu0 0.0
        %2419 = vmatpush1.msra.mxu0 0.0
        %2420 = vmatprep.subr.mxu0 0.0
        %2421 = vmatpush1.msra.mxu0 0.0
        %2422 = vmatprep.subr.mxu0 0.0
        %2423 = vmatpush1.msra.mxu0 0.0
        %2424 = vmatprep.subr.mxu0 0.0
        %2425 = vmatpush1.msra.mxu0 0.0
        %2426 = vmatprep.subr.mxu0 0.0
        %2427 = vmatpush1.msra.mxu0 0.0
        %2428 = vmatprep.subr.mxu0 0.0
        %2429 = vmatpush1.msra.mxu0 0.0
        %2430 = vmatprep.subr.mxu0 0.0
        %2431 = vmatpush1.msra.mxu0 0.0
        %2432 = vmatprep.subr.mxu0 0.0
        %2433 = vmatpush1.msra.mxu0 0.0
        %2434 = vmatprep.subr.mxu0 0.0
        %2435 = vmatpush1.msra.mxu0 0.0
        %2436 = vmatprep.mubr.f32.mxu0 0.0
        %2437 = vmatmul.mubr.f32.gmra.mrb[0].mxu0 %v2370
        %v2438 = vpop.f32.mrb[0].mxu0
        %v2439 = vadd.f32 0.0, %v2438
        %v2440 = vpop.f32.mrb[0].mxu0
        %2441 = vdwg.mxu0
        %v2443 = vsel %vm1599, %v2290, 0
        %2445 = vmatprep.subr.mxu0 0.0
        %2446 = vmatpush1.msra.mxu0 %v1031
        %2447 = vmatprep.subr.mxu0 0.0
        %2448 = vmatpush1.msra.mxu0 0.0
        %2449 = vmatprep.subr.mxu0 0.0
        %2450 = vmatpush1.msra.mxu0 0.0
        %2451 = vmatprep.subr.mxu0 0.0
        %2452 = vmatpush1.msra.mxu0 0.0
        %2453 = vmatprep.subr.mxu0 0.0
        %2454 = vmatpush1.msra.mxu0 0.0
        %2455 = vmatprep.subr.mxu0 0.0
        %2456 = vmatpush1.msra.mxu0 0.0
        %2457 = vmatprep.subr.mxu0 0.0
        %2458 = vmatpush1.msra.mxu0 0.0
        %2459 = vmatprep.subr.mxu0 0.0
        %2460 = vmatpush1.msra.mxu0 0.0
        %2461 = vmatprep.subr.mxu0 0.0
        %2462 = vmatpush1.msra.mxu0 0.0
        %2463 = vmatprep.subr.mxu0 0.0
        %2464 = vmatpush1.msra.mxu0 0.0
        %2465 = vmatprep.subr.mxu0 0.0
        %2466 = vmatpush1.msra.mxu0 0.0
        %2467 = vmatprep.subr.mxu0 0.0
        %2468 = vmatpush1.msra.mxu0 0.0
        %2469 = vmatprep.subr.mxu0 0.0
        %2470 = vmatpush1.msra.mxu0 0.0
        %2471 = vmatprep.subr.mxu0 0.0
        %2472 = vmatpush1.msra.mxu0 0.0
        %2473 = vmatprep.subr.mxu0 0.0
        %2474 = vmatpush1.msra.mxu0 0.0
        %2475 = vmatprep.subr.mxu0 0.0
        %2476 = vmatpush1.msra.mxu0 0.0
        %2477 = vmatprep.subr.mxu0 0.0
        %2478 = vmatpush1.msra.mxu0 0.0
        %2479 = vmatprep.subr.mxu0 0.0
        %2480 = vmatpush1.msra.mxu0 0.0
        %2481 = vmatprep.subr.mxu0 0.0
        %2482 = vmatpush1.msra.mxu0 0.0
        %2483 = vmatprep.subr.mxu0 0.0
        %2484 = vmatpush1.msra.mxu0 0.0
        %2485 = vmatprep.subr.mxu0 0.0
        %2486 = vmatpush1.msra.mxu0 0.0
        %2487 = vmatprep.subr.mxu0 0.0
        %2488 = vmatpush1.msra.mxu0 0.0
        %2489 = vmatprep.subr.mxu0 0.0
        %2490 = vmatpush1.msra.mxu0 0.0
        %2491 = vmatprep.subr.mxu0 0.0
        %2492 = vmatpush1.msra.mxu0 0.0
        %2493 = vmatprep.subr.mxu0 0.0
        %2494 = vmatpush1.msra.mxu0 0.0
        %2495 = vmatprep.subr.mxu0 0.0
        %2496 = vmatpush1.msra.mxu0 0.0
        %2497 = vmatprep.subr.mxu0 0.0
        %2498 = vmatpush1.msra.mxu0 0.0
        %2499 = vmatprep.subr.mxu0 0.0
        %2500 = vmatpush1.msra.mxu0 0.0
        %2501 = vmatprep.subr.mxu0 0.0
        %2502 = vmatpush1.msra.mxu0 0.0
        %2503 = vmatprep.subr.mxu0 0.0
        %2504 = vmatpush1.msra.mxu0 0.0
        %2505 = vmatprep.subr.mxu0 0.0
        %2506 = vmatpush1.msra.mxu0 0.0
        %2507 = vmatprep.subr.mxu0 0.0
        %2508 = vmatpush1.msra.mxu0 0.0
        %2509 = vmatprep.mubr.f32.mxu0 0.0
        %2510 = vmatmul.mubr.f32.gmra.mrb[0].mxu0 %v2443
        %v2511 = vpop.f32.mrb[0].mxu0
        %v2512 = vadd.f32 0.0, %v2511
        %v2513 = vpop.f32.mrb[0].mxu0
        %2514 = vdwg.mxu0
        %v2516 = vsel %vm1599, %v2291, 0
        %2518 = vmatprep.subr.mxu0 0.0
        %2519 = vmatpush1.msra.mxu0 %v1036
        %2520 = vmatprep.subr.mxu0 0.0
        %2521 = vmatpush1.msra.mxu0 0.0
        %2522 = vmatprep.subr.mxu0 0.0
        %2523 = vmatpush1.msra.mxu0 0.0
        %2524 = vmatprep.subr.mxu0 0.0
        %2525 = vmatpush1.msra.mxu0 0.0
        %2526 = vmatprep.subr.mxu0 0.0
        %2527 = vmatpush1.msra.mxu0 0.0
        %2528 = vmatprep.subr.mxu0 0.0
        %2529 = vmatpush1.msra.mxu0 0.0
        %2530 = vmatprep.subr.mxu0 0.0
        %2531 = vmatpush1.msra.mxu0 0.0
        %2532 = vmatprep.subr.mxu0 0.0
        %2533 = vmatpush1.msra.mxu0 0.0
        %2534 = vmatprep.subr.mxu0 0.0
        %2535 = vmatpush1.msra.mxu0 0.0
        %2536 = vmatprep.subr.mxu0 0.0
        %2537 = vmatpush1.msra.mxu0 0.0
        %2538 = vmatprep.subr.mxu0 0.0
        %2539 = vmatpush1.msra.mxu0 0.0
        %2540 = vmatprep.subr.mxu0 0.0
        %2541 = vmatpush1.msra.mxu0 0.0
        %2542 = vmatprep.subr.mxu0 0.0
        %2543 = vmatpush1.msra.mxu0 0.0
        %2544 = vmatprep.subr.mxu0 0.0
        %2545 = vmatpush1.msra.mxu0 0.0
        %2546 = vmatprep.subr.mxu0 0.0
        %2547 = vmatpush1.msra.mxu0 0.0
        %2548 = vmatprep.subr.mxu0 0.0
        %2549 = vmatpush1.msra.mxu0 0.0
        %2550 = vmatprep.subr.mxu0 0.0
        %2551 = vmatpush1.msra.mxu0 0.0
        %2552 = vmatprep.subr.mxu0 0.0
        %2553 = vmatpush1.msra.mxu0 0.0
        %2554 = vmatprep.subr.mxu0 0.0
        %2555 = vmatpush1.msra.mxu0 0.0
        %2556 = vmatprep.subr.mxu0 0.0
        %2557 = vmatpush1.msra.mxu0 0.0
        %2558 = vmatprep.subr.mxu0 0.0
        %2559 = vmatpush1.msra.mxu0 0.0
        %2560 = vmatprep.subr.mxu0 0.0
        %2561 = vmatpush1.msra.mxu0 0.0
        %2562 = vmatprep.subr.mxu0 0.0
        %2563 = vmatpush1.msra.mxu0 0.0
        %2564 = vmatprep.subr.mxu0 0.0
        %2565 = vmatpush1.msra.mxu0 0.0
        %2566 = vmatprep.subr.mxu0 0.0
        %2567 = vmatpush1.msra.mxu0 0.0
        %2568 = vmatprep.subr.mxu0 0.0
        %2569 = vmatpush1.msra.mxu0 0.0
        %2570 = vmatprep.subr.mxu0 0.0
        %2571 = vmatpush1.msra.mxu0 0.0
        %2572 = vmatprep.subr.mxu0 0.0
        %2573 = vmatpush1.msra.mxu0 0.0
        %2574 = vmatprep.subr.mxu0 0.0
        %2575 = vmatpush1.msra.mxu0 0.0
        %2576 = vmatprep.subr.mxu0 0.0
        %2577 = vmatpush1.msra.mxu0 0.0
        %2578 = vmatprep.subr.mxu0 0.0
        %2579 = vmatpush1.msra.mxu0 0.0
        %2580 = vmatprep.subr.mxu0 0.0
        %2581 = vmatpush1.msra.mxu0 0.0
        %2582 = vmatprep.mubr.f32.mxu0 0.0
        %2583 = vmatmul.mubr.f32.gmra.mrb[0].mxu0 %v2516
        %v2584 = vpop.f32.mrb[0].mxu0
        %v2585 = vadd.f32 0.0, %v2584
        %v2586 = vpop.f32.mrb[0].mxu0
        %2587 = vdwg.mxu0
        %v2589 = vsel %vm1599, %v2292, 0
        %2591 = vmatprep.subr.mxu0 0.0
        %2592 = vmatpush1.msra.mxu0 %v1311
        %2593 = vmatprep.subr.mxu0 0.0
        %2594 = vmatpush1.msra.mxu0 0.0
        %2595 = vmatprep.subr.mxu0 0.0
        %2596 = vmatpush1.msra.mxu0 0.0
        %2597 = vmatprep.subr.mxu0 0.0
        %2598 = vmatpush1.msra.mxu0 0.0
        %2599 = vmatprep.subr.mxu0 0.0
        %2600 = vmatpush1.msra.mxu0 0.0
        %2601 = vmatprep.subr.mxu0 0.0
        %2602 = vmatpush1.msra.mxu0 0.0
        %2603 = vmatprep.subr.mxu0 0.0
        %2604 = vmatpush1.msra.mxu0 0.0
        %2605 = vmatprep.subr.mxu0 0.0
        %2606 = vmatpush1.msra.mxu0 0.0
        %2607 = vmatprep.subr.mxu0 0.0
        %2608 = vmatpush1.msra.mxu0 0.0
        %2609 = vmatprep.subr.mxu0 0.0
        %2610 = vmatpush1.msra.mxu0 0.0
        %2611 = vmatprep.subr.mxu0 0.0
        %2612 = vmatpush1.msra.mxu0 0.0
        %2613 = vmatprep.subr.mxu0 0.0
        %2614 = vmatpush1.msra.mxu0 0.0
        %2615 = vmatprep.subr.mxu0 0.0
        %2616 = vmatpush1.msra.mxu0 0.0
        %2617 = vmatprep.subr.mxu0 0.0
        %2618 = vmatpush1.msra.mxu0 0.0
        %2619 = vmatprep.subr.mxu0 0.0
        %2620 = vmatpush1.msra.mxu0 0.0
        %2621 = vmatprep.subr.mxu0 0.0
        %2622 = vmatpush1.msra.mxu0 0.0
        %2623 = vmatprep.subr.mxu0 0.0
        %2624 = vmatpush1.msra.mxu0 0.0
        %2625 = vmatprep.subr.mxu0 0.0
        %2626 = vmatpush1.msra.mxu0 0.0
        %2627 = vmatprep.subr.mxu0 0.0
        %2628 = vmatpush1.msra.mxu0 0.0
        %2629 = vmatprep.subr.mxu0 0.0
        %2630 = vmatpush1.msra.mxu0 0.0
        %2631 = vmatprep.subr.mxu0 0.0
        %2632 = vmatpush1.msra.mxu0 0.0
        %2633 = vmatprep.subr.mxu0 0.0
        %2634 = vmatpush1.msra.mxu0 0.0
        %2635 = vmatprep.subr.mxu0 0.0
        %2636 = vmatpush1.msra.mxu0 0.0
        %2637 = vmatprep.subr.mxu0 0.0
        %2638 = vmatpush1.msra.mxu0 0.0
        %2639 = vmatprep.subr.mxu0 0.0
        %2640 = vmatpush1.msra.mxu0 0.0
        %2641 = vmatprep.subr.mxu0 0.0
        %2642 = vmatpush1.msra.mxu0 0.0
        %2643 = vmatprep.subr.mxu0 0.0
        %2644 = vmatpush1.msra.mxu0 0.0
        %2645 = vmatprep.subr.mxu0 0.0
        %2646 = vmatpush1.msra.mxu0 0.0
        %2647 = vmatprep.subr.mxu0 0.0
        %2648 = vmatpush1.msra.mxu0 0.0
        %2649 = vmatprep.subr.mxu0 0.0
        %2650 = vmatpush1.msra.mxu0 0.0
        %2651 = vmatprep.subr.mxu0 0.0
        %2652 = vmatpush1.msra.mxu0 0.0
        %2653 = vmatprep.subr.mxu0 0.0
        %2654 = vmatpush1.msra.mxu0 0.0
        %2655 = vmatprep.mubr.f32.mxu0 0.0
        %2656 = vmatmul.mubr.f32.gmra.mrb[0].mxu0 %v2589
        %v2657 = vpop.f32.mrb[0].mxu0
        %v2658 = vadd.f32 0.0, %v2657
        %v2659 = vpop.f32.mrb[0].mxu0
        %2660 = vdwg.mxu0
        %v2662 = vsel %vm1599, %v2293, 0
        %2664 = vmatprep.subr.mxu0 0.0
        %2665 = vmatpush1.msra.mxu0 %v1316
        %2666 = vmatprep.subr.mxu0 0.0
        %2667 = vmatpush1.msra.mxu0 0.0
        %2668 = vmatprep.subr.mxu0 0.0
        %2669 = vmatpush1.msra.mxu0 0.0
        %2670 = vmatprep.subr.mxu0 0.0
        %2671 = vmatpush1.msra.mxu0 0.0
        %2672 = vmatprep.subr.mxu0 0.0
        %2673 = vmatpush1.msra.mxu0 0.0
        %2674 = vmatprep.subr.mxu0 0.0
        %2675 = vmatpush1.msra.mxu0 0.0
        %2676 = vmatprep.subr.mxu0 0.0
        %2677 = vmatpush1.msra.mxu0 0.0
        %2678 = vmatprep.subr.mxu0 0.0
        %2679 = vmatpush1.msra.mxu0 0.0
        %2680 = vmatprep.subr.mxu0 0.0
        %2681 = vmatpush1.msra.mxu0 0.0
        %2682 = vmatprep.subr.mxu0 0.0
        %2683 = vmatpush1.msra.mxu0 0.0
        %2684 = vmatprep.subr.mxu0 0.0
        %2685 = vmatpush1.msra.mxu0 0.0
        %2686 = vmatprep.subr.mxu0 0.0
        %2687 = vmatpush1.msra.mxu0 0.0
        %2688 = vmatprep.subr.mxu0 0.0
        %2689 = vmatpush1.msra.mxu0 0.0
        %2690 = vmatprep.subr.mxu0 0.0
        %2691 = vmatpush1.msra.mxu0 0.0
        %2692 = vmatprep.subr.mxu0 0.0
        %2693 = vmatpush1.msra.mxu0 0.0
        %2694 = vmatprep.subr.mxu0 0.0
        %2695 = vmatpush1.msra.mxu0 0.0
        %2696 = vmatprep.subr.mxu0 0.0
        %2697 = vmatpush1.msra.mxu0 0.0
        %2698 = vmatprep.subr.mxu0 0.0
        %2699 = vmatpush1.msra.mxu0 0.0
        %2700 = vmatprep.subr.mxu0 0.0
        %2701 = vmatpush1.msra.mxu0 0.0
        %2702 = vmatprep.subr.mxu0 0.0
        %2703 = vmatpush1.msra.mxu0 0.0
        %2704 = vmatprep.subr.mxu0 0.0
        %2705 = vmatpush1.msra.mxu0 0.0
        %2706 = vmatprep.subr.mxu0 0.0
        %2707 = vmatpush1.msra.mxu0 0.0
        %2708 = vmatprep.subr.mxu0 0.0
        %2709 = vmatpush1.msra.mxu0 0.0
        %2710 = vmatprep.subr.mxu0 0.0
        %2711 = vmatpush1.msra.mxu0 0.0
        %2712 = vmatprep.subr.mxu0 0.0
        %2713 = vmatpush1.msra.mxu0 0.0
        %2714 = vmatprep.subr.mxu0 0.0
        %2715 = vmatpush1.msra.mxu0 0.0
        %2716 = vmatprep.subr.mxu0 0.0
        %2717 = vmatpush1.msra.mxu0 0.0
        %2718 = vmatprep.subr.mxu0 0.0
        %2719 = vmatpush1.msra.mxu0 0.0
        %2720 = vmatprep.subr.mxu0 0.0
        %2721 = vmatpush1.msra.mxu0 0.0
        %2722 = vmatprep.subr.mxu0 0.0
        %2723 = vmatpush1.msra.mxu0 0.0
        %2724 = vmatprep.subr.mxu0 0.0
        %2725 = vmatpush1.msra.mxu0 0.0
        %2726 = vmatprep.subr.mxu0 0.0
        %2727 = vmatpush1.msra.mxu0 0.0
        %2728 = vmatprep.mubr.f32.mxu0 0.0
        %2729 = vmatmul.mubr.f32.gmra.mrb[0].mxu0 %v2662
        %v2730 = vpop.f32.mrb[0].mxu0
        %v2731 = vadd.f32 0.0, %v2730
        %v2732 = vpop.f32.mrb[0].mxu0
        %2733 = vdwg.mxu0
        %v2735 = vsel %vm1599, %v2294, 0
        %2737 = vmatprep.subr.mxu0 0.0
        %2738 = vmatpush1.msra.mxu0 %v1591
        %2739 = vmatprep.subr.mxu0 0.0
        %2740 = vmatpush1.msra.mxu0 0.0
        %2741 = vmatprep.subr.mxu0 0.0
        %2742 = vmatpush1.msra.mxu0 0.0
        %2743 = vmatprep.subr.mxu0 0.0
        %2744 = vmatpush1.msra.mxu0 0.0
        %2745 = vmatprep.subr.mxu0 0.0
        %2746 = vmatpush1.msra.mxu0 0.0
        %2747 = vmatprep.subr.mxu0 0.0
        %2748 = vmatpush1.msra.mxu0 0.0
        %2749 = vmatprep.subr.mxu0 0.0
        %2750 = vmatpush1.msra.mxu0 0.0
        %2751 = vmatprep.subr.mxu0 0.0
        %2752 = vmatpush1.msra.mxu0 0.0
        %2753 = vmatprep.subr.mxu0 0.0
        %2754 = vmatpush1.msra.mxu0 0.0
        %2755 = vmatprep.subr.mxu0 0.0
        %2756 = vmatpush1.msra.mxu0 0.0
        %2757 = vmatprep.subr.mxu0 0.0
        %2758 = vmatpush1.msra.mxu0 0.0
        %2759 = vmatprep.subr.mxu0 0.0
        %2760 = vmatpush1.msra.mxu0 0.0
        %2761 = vmatprep.subr.mxu0 0.0
        %2762 = vmatpush1.msra.mxu0 0.0
        %2763 = vmatprep.subr.mxu0 0.0
        %2764 = vmatpush1.msra.mxu0 0.0
        %2765 = vmatprep.subr.mxu0 0.0
        %2766 = vmatpush1.msra.mxu0 0.0
        %2767 = vmatprep.subr.mxu0 0.0
        %2768 = vmatpush1.msra.mxu0 0.0
        %2769 = vmatprep.subr.mxu0 0.0
        %2770 = vmatpush1.msra.mxu0 0.0
        %2771 = vmatprep.subr.mxu0 0.0
        %2772 = vmatpush1.msra.mxu0 0.0
        %2773 = vmatprep.subr.mxu0 0.0
        %2774 = vmatpush1.msra.mxu0 0.0
        %2775 = vmatprep.subr.mxu0 0.0
        %2776 = vmatpush1.msra.mxu0 0.0
        %2777 = vmatprep.subr.mxu0 0.0
        %2778 = vmatpush1.msra.mxu0 0.0
        %2779 = vmatprep.subr.mxu0 0.0
        %2780 = vmatpush1.msra.mxu0 0.0
        %2781 = vmatprep.subr.mxu0 0.0
        %2782 = vmatpush1.msra.mxu0 0.0
        %2783 = vmatprep.subr.mxu0 0.0
        %2784 = vmatpush1.msra.mxu0 0.0
        %2785 = vmatprep.subr.mxu0 0.0
        %2786 = vmatpush1.msra.mxu0 0.0
        %2787 = vmatprep.subr.mxu0 0.0
        %2788 = vmatpush1.msra.mxu0 0.0
        %2789 = vmatprep.subr.mxu0 0.0
        %2790 = vmatpush1.msra.mxu0 0.0
        %2791 = vmatprep.subr.mxu0 0.0
        %2792 = vmatpush1.msra.mxu0 0.0
        %2793 = vmatprep.subr.mxu0 0.0
        %2794 = vmatpush1.msra.mxu0 0.0
        %2795 = vmatprep.subr.mxu0 0.0
        %2796 = vmatpush1.msra.mxu0 0.0
        %2797 = vmatprep.subr.mxu0 0.0
        %2798 = vmatpush1.msra.mxu0 0.0
        %2799 = vmatprep.subr.mxu0 0.0
        %2800 = vmatpush1.msra.mxu0 0.0
        %2801 = vmatprep.mubr.f32.mxu0 0.0
        %2802 = vmatmul.mubr.f32.gmra.mrb[0].mxu0 %v2735
        %v2803 = vpop.f32.mrb[0].mxu0
        %v2804 = vadd.f32 0.0, %v2803
        %v2805 = vpop.f32.mrb[0].mxu0
        %2806 = vdwg.mxu0
        %v2808 = vsel %vm1599, %v2295, 0
        %2810 = vmatprep.subr.mxu0 0.0
        %2811 = vmatpush1.msra.mxu0 %v1596
        %2812 = vmatprep.subr.mxu0 0.0
        %2813 = vmatpush1.msra.mxu0 0.0
        %2814 = vmatprep.subr.mxu0 0.0
        %2815 = vmatpush1.msra.mxu0 0.0
        %2816 = vmatprep.subr.mxu0 0.0
        %2817 = vmatpush1.msra.mxu0 0.0
        %2818 = vmatprep.subr.mxu0 0.0
        %2819 = vmatpush1.msra.mxu0 0.0
        %2820 = vmatprep.subr.mxu0 0.0
        %2821 = vmatpush1.msra.mxu0 0.0
        %2822 = vmatprep.subr.mxu0 0.0
        %2823 = vmatpush1.msra.mxu0 0.0
        %2824 = vmatprep.subr.mxu0 0.0
        %2825 = vmatpush1.msra.mxu0 0.0
        %2826 = vmatprep.subr.mxu0 0.0
        %2827 = vmatpush1.msra.mxu0 0.0
        %2828 = vmatprep.subr.mxu0 0.0
        %2829 = vmatpush1.msra.mxu0 0.0
        %2830 = vmatprep.subr.mxu0 0.0
        %2831 = vmatpush1.msra.mxu0 0.0
        %2832 = vmatprep.subr.mxu0 0.0
        %2833 = vmatpush1.msra.mxu0 0.0
        %2834 = vmatprep.subr.mxu0 0.0
        %2835 = vmatpush1.msra.mxu0 0.0
        %2836 = vmatprep.subr.mxu0 0.0
        %2837 = vmatpush1.msra.mxu0 0.0
        %2838 = vmatprep.subr.mxu0 0.0
        %2839 = vmatpush1.msra.mxu0 0.0
        %2840 = vmatprep.subr.mxu0 0.0
        %2841 = vmatpush1.msra.mxu0 0.0
        %2842 = vmatprep.subr.mxu0 0.0
        %2843 = vmatpush1.msra.mxu0 0.0
        %2844 = vmatprep.subr.mxu0 0.0
        %2845 = vmatpush1.msra.mxu0 0.0
        %2846 = vmatprep.subr.mxu0 0.0
        %2847 = vmatpush1.msra.mxu0 0.0
        %2848 = vmatprep.subr.mxu0 0.0
        %2849 = vmatpush1.msra.mxu0 0.0
        %2850 = vmatprep.subr.mxu0 0.0
        %2851 = vmatpush1.msra.mxu0 0.0
        %2852 = vmatprep.subr.mxu0 0.0
        %2853 = vmatpush1.msra.mxu0 0.0
        %2854 = vmatprep.subr.mxu0 0.0
        %2855 = vmatpush1.msra.mxu0 0.0
        %2856 = vmatprep.subr.mxu0 0.0
        %2857 = vmatpush1.msra.mxu0 0.0
        %2858 = vmatprep.subr.mxu0 0.0
        %2859 = vmatpush1.msra.mxu0 0.0
        %2860 = vmatprep.subr.mxu0 0.0
        %2861 = vmatpush1.msra.mxu0 0.0
        %2862 = vmatprep.subr.mxu0 0.0
        %2863 = vmatpush1.msra.mxu0 0.0
        %2864 = vmatprep.subr.mxu0 0.0
        %2865 = vmatpush1.msra.mxu0 0.0
        %2866 = vmatprep.subr.mxu0 0.0
        %2867 = vmatpush1.msra.mxu0 0.0
        %2868 = vmatprep.subr.mxu0 0.0
        %2869 = vmatpush1.msra.mxu0 0.0
        %2870 = vmatprep.subr.mxu0 0.0
        %2871 = vmatpush1.msra.mxu0 0.0
        %2872 = vmatprep.subr.mxu0 0.0
        %2873 = vmatpush1.msra.mxu0 0.0
        %2874 = vmatprep.mubr.f32.mxu0 0.0
        %2875 = vmatmul.mubr.f32.gmra.mrb[0].mxu0 %v2808
        %v2876 = vpop.f32.mrb[0].mxu0
        %v2877 = vadd.f32 0.0, %v2876
        %v2878 = vpop.f32.mrb[0].mxu0
        %2879 = vdwg.mxu0
        %2882 = vrot.lane.b32.xlu0 %v2512, 8
        %v2883 = vpop.permute.xlu0 %2882
        %2884 = vrot.lane.b32.xlu0 %v2585, 8
        %v2885 = vpop.permute.xlu0 %2884
        %2890 = vrot.lane.b32.xlu0 %v2658, 16
        %v2891 = vpop.permute.xlu0 %2890
        %2892 = vrot.lane.b32.xlu0 %v2731, 16
        %v2893 = vpop.permute.xlu0 %2892
        %2898 = vrot.lane.b32.xlu0 %v2804, 24
        %v2899 = vpop.permute.xlu0 %2898
        %2900 = vrot.lane.b32.xlu0 %v2877, 24
        %v2901 = vpop.permute.xlu0 %2900
        %v2904 = vsel %vm1599, %v2366, %v2883
        %v2905 = vsel %vm1599, %v2439, %v2885
        %vm2906 = vcmask 130048
        %v2907 = vsel %vm2906, %v2904, %v2891
        %v2908 = vsel %vm2906, %v2905, %v2893
        %vm2909 = vcmask 195584
        %v2910 = vsel %vm2909, %v2907, %v2899
        %v2911 = vsel %vm2909, %v2908, %v2901
        %2914 = vrot.lane.b32.xlu0 %v1031, 8
        %v2915 = vpop.permute.xlu0 %2914
        %2916 = vrot.lane.b32.xlu0 %v1036, 8
        %v2917 = vpop.permute.xlu0 %2916
        %2922 = vrot.lane.b32.xlu0 %v1311, 16
        %v2923 = vpop.permute.xlu0 %2922
        %2924 = vrot.lane.b32.xlu0 %v1316, 16
        %v2925 = vpop.permute.xlu0 %2924
        %2930 = vrot.lane.b32.xlu0 %v1591, 24
        %v2931 = vpop.permute.xlu0 %2930
        %2932 = vrot.lane.b32.xlu0 %v1596, 24
        %v2933 = vpop.permute.xlu0 %2932
        %v2936 = vsel %vm1599, %v751, %v2915
        %v2937 = vsel %vm1599, %v756, %v2917
        %v2938 = vsel %vm2906, %v2936, %v2923
        %v2939 = vsel %vm2906, %v2937, %v2925
        %v2940 = vsel %vm2909, %v2938, %v2931
        %v2941 = vsel %vm2909, %v2939, %v2933
        %v2944 = vrot.slane %v2940, 6
        %v2945 = vrot.slane %v2941, 6
        %vm2948 = vcmask 1041408
        %v2949 = vsel %vm2948, 0.0, %v2944
        %v2950 = vsel %vm2948, 0.0, %v2945
        %v2951 = vrot.slane %v2940, 7
        %v2952 = vrot.slane %v2941, 7
        %vm2955 = vcmask 1040384
        %v2956 = vsel %vm2955, 0.0, %v2951
        %v2957 = vsel %vm2955, 0.0, %v2952
        %v2958 = vrot.slane %v2940, 1
        %v2959 = vrot.slane %v2941, 1
        %vm2962 = vcmask 1046528
        %v2963 = vsel %vm2962, %v2958, 0.0
        %v2964 = vsel %vm2962, %v2959, 0.0
        %v2965 = vrot.slane %v2940, 2
        %v2966 = vrot.slane %v2941, 2
        %vm2969 = vcmask 1045504
        %v2970 = vsel %vm2969, %v2965, 0.0
        %v2971 = vsel %vm2969, %v2966, 0.0
        %v2972 = vld [vmem:[%s11] sm:$0xff]
        %v2973 = vlaneseq
        %v2974 = vshrl.u32 %v2973, 7
        %v2975 = vsub.s32 0, %v2974
        %v2976 = vrot.slane %v2972, %v2975
        %v2977 = vmul.f32 %v2956, %v2976
        %v2978 = vmul.f32 %v2957, %v2976
        %v2979 = vlaneseq
        %v2980 = vshrl.u32 %v2979, 7
        %v2981 = vsub.s32 1, %v2980
        %v2982 = vrot.slane %v2972, %v2981
        %v2983 = vmul.f32 %v2940, %v2982
        %v2984 = vmul.f32 %v2941, %v2982
        %v2985 = vadd.f32 %v2977, %v2983
        %v2986 = vadd.f32 %v2978, %v2984
        %v2987 = vlaneseq
        %v2988 = vshrl.u32 %v2987, 7
        %v2989 = vsub.s32 2, %v2988
        %v2990 = vrot.slane %v2972, %v2989
        %v2991 = vmul.f32 %v2963, %v2990
        %v2992 = vmul.f32 %v2964, %v2990
        %v2993 = vadd.f32 %v2985, %v2991
        %v2994 = vadd.f32 %v2986, %v2992
        %v2995 = vlaneseq
        %v2996 = vshrl.u32 %v2995, 7
        %v2997 = vsub.s32 3, %v2996
        %v2998 = vrot.slane %v2972, %v2997
        %v2999 = vmul.f32 %v2949, %v2998
        %v3000 = vmul.f32 %v2950, %v2998
        %v3001 = vlaneseq
        %v3002 = vshrl.u32 %v3001, 7
        %v3003 = vsub.s32 4, %v3002
        %v3004 = vrot.slane %v2972, %v3003
        %v3005 = vmul.f32 %v2956, %v3004
        %v3006 = vmul.f32 %v2957, %v3004
        %v3007 = vadd.f32 %v2999, %v3005
        %v3008 = vadd.f32 %v3000, %v3006
        %v3009 = vlaneseq
        %v3010 = vshrl.u32 %v3009, 7
        %v3011 = vsub.s32 5, %v3010
        %v3012 = vrot.slane %v2972, %v3011
        %v3013 = vmul.f32 %v2940, %v3012
        %v3014 = vmul.f32 %v2941, %v3012
        %v3015 = vadd.f32 %v3007, %v3013
        %v3016 = vadd.f32 %v3008, %v3014
        %v3017 = vlaneseq
        %v3018 = vshrl.u32 %v3017, 7
        %v3019 = vsub.s32 6, %v3018
        %v3020 = vrot.slane %v2972, %v3019
        %v3021 = vmul.f32 %v2963, %v3020
        %v3022 = vmul.f32 %v2964, %v3020
        %v3023 = vadd.f32 %v3015, %v3021
        %v3024 = vadd.f32 %v3016, %v3022
        %v3025 = vlaneseq
        %v3026 = vshrl.u32 %v3025, 7
        %v3027 = vsub.s32 7, %v3026
        %v3028 = vrot.slane %v2972, %v3027
        %v3029 = vmul.f32 %v2970, %v3028
        %v3030 = vmul.f32 %v2971, %v3028
        %v3031 = vadd.f32 %v3023, %v3029
        %v3032 = vadd.f32 %v3024, %v3030
        %3033 = vrot.lane.b32.xlu0 %v2940, 32
        %v3034 = vpop.permute.xlu0 %3033
        %3035 = vrot.lane.b32.xlu0 %v2941, 32
        %v3036 = vpop.permute.xlu0 %3035
        %3041 = vrot.lane.b32.xlu0 %v2993, 64
        %v3042 = vpop.permute.xlu0 %3041
        %3043 = vrot.lane.b32.xlu0 %v2994, 64
        %v3044 = vpop.permute.xlu0 %3043
        %3049 = vrot.lane.b32.xlu0 %v3031, 96
        %v3050 = vpop.permute.xlu0 %3049
        %3051 = vrot.lane.b32.xlu0 %v3032, 96
        %v3052 = vpop.permute.xlu0 %3051
        %v3055 = vsel %vm476, %v2910, %v3034
        %v3056 = vsel %vm476, %v2911, %v3036
        %vm3057 = vcmask 523264
        %v3058 = vsel %vm3057, %v3055, %v3042
        %v3059 = vsel %vm3057, %v3056, %v3044
        %v3060 = vsel %vm577, %v3058, %v3050
        %v3061 = vsel %vm577, %v3059, %v3052
        %v3062 = vld [vmem:[%s9] sm:$0xff]
        %v3063 = vld [vmem:[%s9 + $0x8] sm:$0xff]
        %v3064 = vld [vmem:[%s9 + $0x10] sm:$0xff]
        %v3065 = vld [vmem:[%s9 + $0x18] sm:$0xff]
        %v3066 = vld [vmem:[%s9 + $0x20] sm:$0xff]
        %v3067 = vld [vmem:[%s9 + $0x28] sm:$0xff]
        %v3068 = vld [vmem:[%s9 + $0x30] sm:$0xff]
        %v3069 = vld [vmem:[%s9 + $0x38] sm:$0xff]
        %v3070 = vld [vmem:[%s9 + $0x40] sm:$0xff]
        %v3071 = vld [vmem:[%s9 + $0x48] sm:$0xff]
        %v3072 = vld [vmem:[%s9 + $0x50] sm:$0xff]
        %v3073 = vld [vmem:[%s9 + $0x58] sm:$0xff]
        %v3074 = vld [vmem:[%s9 + $0x60] sm:$0xff]
        %v3075 = vld [vmem:[%s9 + $0x68] sm:$0xff]
        %v3076 = vld [vmem:[%s9 + $0x70] sm:$0xff]
        %v3077 = vld [vmem:[%s9 + $0x78] sm:$0xff]
        %v3078 = vld [vmem:[%s10] sm:$0x1]
        %v3080 = vlaneseq
        %v3081 = vshrl.u32 %v3080, 7
        %v3082 = vsub.s32 0, %v3081
        %v3083 = vrot.slane %v3078, %v3082
        %3085 = vmatprep.subr.mxu0 0.0
        %3086 = vmatpush1.msra.mxu0 %v3062
        %3087 = vmatprep.subr.mxu0 0.0
        %3088 = vmatpush1.msra.mxu0 %v3063
        %3089 = vmatprep.subr.mxu0 0.0
        %3090 = vmatpush1.msra.mxu0 %v3064
        %3091 = vmatprep.subr.mxu0 0.0
        %3092 = vmatpush1.msra.mxu0 %v3065
        %3093 = vmatprep.subr.mxu0 0.0
        %3094 = vmatpush1.msra.mxu0 %v3066
        %3095 = vmatprep.subr.mxu0 0.0
        %3096 = vmatpush1.msra.mxu0 %v3067
        %3097 = vmatprep.subr.mxu0 0.0
        %3098 = vmatpush1.msra.mxu0 %v3068
        %3099 = vmatprep.subr.mxu0 0.0
        %3100 = vmatpush1.msra.mxu0 %v3069
        %3101 = vmatprep.subr.mxu0 0.0
        %3102 = vmatpush1.msra.mxu0 %v3070
        %3103 = vmatprep.subr.mxu0 0.0
        %3104 = vmatpush1.msra.mxu0 %v3071
        %3105 = vmatprep.subr.mxu0 0.0
        %3106 = vmatpush1.msra.mxu0 %v3072
        %3107 = vmatprep.subr.mxu0 0.0
        %3108 = vmatpush1.msra.mxu0 %v3073
        %3109 = vmatprep.subr.mxu0 0.0
        %3110 = vmatpush1.msra.mxu0 %v3074
        %3111 = vmatprep.subr.mxu0 0.0
        %3112 = vmatpush1.msra.mxu0 %v3075
        %3113 = vmatprep.subr.mxu0 0.0
        %3114 = vmatpush1.msra.mxu0 %v3076
        %3115 = vmatprep.subr.mxu0 0.0
        %3116 = vmatpush1.msra.mxu0 %v3077
        %3117 = vmatprep.subr.mxu0 0.0
        %3118 = vmatpush1.msra.mxu0 0.0
        %3119 = vmatprep.subr.mxu0 0.0
        %3120 = vmatpush1.msra.mxu0 0.0
        %3121 = vmatprep.subr.mxu0 0.0
        %3122 = vmatpush1.msra.mxu0 0.0
        %3123 = vmatprep.subr.mxu0 0.0
        %3124 = vmatpush1.msra.mxu0 0.0
        %3125 = vmatprep.subr.mxu0 0.0
        %3126 = vmatpush1.msra.mxu0 0.0
        %3127 = vmatprep.subr.mxu0 0.0
        %3128 = vmatpush1.msra.mxu0 0.0
        %3129 = vmatprep.subr.mxu0 0.0
        %3130 = vmatpush1.msra.mxu0 0.0
        %3131 = vmatprep.subr.mxu0 0.0
        %3132 = vmatpush1.msra.mxu0 0.0
        %3133 = vmatprep.subr.mxu0 0.0
        %3134 = vmatpush1.msra.mxu0 0.0
        %3135 = vmatprep.subr.mxu0 0.0
        %3136 = vmatpush1.msra.mxu0 0.0
        %3137 = vmatprep.subr.mxu0 0.0
        %3138 = vmatpush1.msra.mxu0 0.0
        %3139 = vmatprep.subr.mxu0 0.0
        %3140 = vmatpush1.msra.mxu0 0.0
        %3141 = vmatprep.subr.mxu0 0.0
        %3142 = vmatpush1.msra.mxu0 0.0
        %3143 = vmatprep.subr.mxu0 0.0
        %3144 = vmatpush1.msra.mxu0 0.0
        %3145 = vmatprep.subr.mxu0 0.0
        %3146 = vmatpush1.msra.mxu0 0.0
        %3147 = vmatprep.subr.mxu0 0.0
        %3148 = vmatpush1.msra.mxu0 0.0
        %3149 = vmatprep.mubr.f32.mxu0 0.0
        %3150 = vmatmul.mubr.f32.gmra.mrb[0].mxu0 %v3060
        %v3151 = vpop.f32.mrb[0].mxu0
        %v3152 = vadd.f32 %v3083, %v3151
        %v3153 = vpop.f32.mrb[0].mxu0
        %3154 = vmatprep.mubr.f32.mxu0 0.0
        %3155 = vmatmul.mubr.f32.gmra.mrb[0].mxu0 %v3061
        %v3156 = vpop.f32.mrb[0].mxu0
        %v3157 = vadd.f32 %v3083, %v3156
        %v3158 = vpop.f32.mrb[0].mxu0
        %3159 = vdwg.mxu0
        %3160 = vst.msk [vmem:[%s439] sm:$0xff] %vm476, %v3152
        %3161 = vst.msk [vmem:[%s439 + $0x8] sm:$0xff] %vm476, %v3157
        %s3162 = sand.u32 %s301, 1
        %s3163 = scalar_lea.sflag [#allocation3], %s3162
        %s3164 = sand.u32 %s301, 1
        %s3165 = smul.addr %s3164, 16
        %s3166 = scalar_lea.vmem [#allocation2], %s3165
        // Predicated region
        $region69: #{tpu_custom_call.1} parent=67 // pred_check
          %p3167 = pneg %p311
        $region70: #{tpu_custom_call.1} parent=67 // pred_check_branch
          %3169 = sbr.rel (%p3167) target = $region72
        $region71: #{tpu_custom_call.1} parent=67 // pred_region
          %s3170 = smul.u32 2, %s26
          %s3172 = ssub.s32 256, 256
          %3173 = vsyncadd %s3163, %s3172
          %s3174 = smul.addr %s3170, 128
          %s3175 = scalar_lea.hbm %s12, %s3174
          %s3176 = sshll.u32 %s3166, 4
          %s3177 = int_to_ptr.vmem [resolvable:$true] %s3176
          %3182 = dma.vmem_to_hbm [thread:$0]  %s3177, 256, %s3175, %s3163, 128, 128, 8
        $region72: #{tpu_custom_call.1} parent=67 // pred_fallthru
          _
      $region68: #{tpu_custom_call.1} parent=5 // pred_fallthru
        _
      %p3183 = scmp.le.s32.totalorder 2, %s21
      // Predicated region
      $region73: #{tpu_custom_call.1} parent=5 // pred_check
        %p3184 = pneg %p3183
      $region74: #{tpu_custom_call.1} parent=5 // pred_check_branch
        %3186 = sbr.rel (%p3184) target = $region76
      $region75: #{tpu_custom_call.1} parent=5 // pred_region
        %s3187 = ssub.s32 %s21, 2
        // Predicated region
        $region77: #{tpu_custom_call.1} parent=75 // pred_check
          %p3188 = pneg %p317
        $region78: #{tpu_custom_call.1} parent=75 // pred_check_branch
          %3190 = sbr.rel (%p3188) target = $region80
        $region79: #{tpu_custom_call.1} parent=75 // pred_region
          %s3191 = sand.u32 %s302, 1
          %s3192 = scalar_lea.sflag [#allocation3], %s3191
          %s3193 = sand.u32 %s302, 1
          %s3194 = smul.addr %s3193, 16
          %s3195 = scalar_lea.vmem [#allocation2], %s3194
          %3196 = dma.done %s3192, 256
        $region80: #{tpu_custom_call.1} parent=75 // pred_fallthru
          _
      $region76: #{tpu_custom_call.1} parent=5 // pred_fallthru
        _
    $region6: #{tpu_custom_call.1} parent=1 // loop_footer
      %s25 = sadd.s32 1, %s21
    $region7: #{tpu_custom_call.1} parent=1 // loop_footer_branch
      %20 = sbr.rel target = $region3
    $region8: #{tpu_custom_call.1} parent=1 // loop_exit
      _
    %3197 = vsyncpa [#allocation3], 1
    %s3198 = scalar_lea.sflag [#allocation3], 1
    %3199 = vsyncpa %s3198, 1

</llo_original>
